<compile_context>
chip_gen: v5e
topology: v5e:2x2
jax: 0.10.0
libtpu: 0.0.40
codegen_flags: <defaults>
</compile_context>

<pallas_src>
import math

import jax
import jax.numpy as jnp
from jax.experimental import pallas as pl
from jax.experimental.pallas import tpu as pltpu

HIDDEN = 1024  # uniform padded layer width


# ----------------------------------------------------------------------------
# Fused Pallas kernel: all 6 layers of  y = PReLU(x @ W_l + b_l)
# Grid axis 0 = layer index. Activations live in a (2, B, K) bf16 VMEM
# ping-pong scratch; the padded (B, 1024) f32 output slab is written only at
# the last layer (output block index is constant -> single writeback).
# ----------------------------------------------------------------------------
def _fused_mlp_kernel(alpha_ref, x_ref, w_ref, b_ref, o_ref, act_ref):
    l = pl.program_id(0)
    n_layers = pl.num_programs(0)

    # Seed the ping-pong activation buffer with the (padded, bf16) input once.
    @pl.when(l == 0)
    def _():
        act_ref[0] = x_ref[...]

    cur = l % 2
    a_in = act_ref[cur]                                   # (B, K) bf16
    y = jnp.dot(a_in, w_ref[0],                           # (B, K) @ (K, K)
                preferred_element_type=jnp.float32)       # f32 accumulation
    y = y + b_ref[0]                                      # (1, K) f32 bias
    alpha = alpha_ref[0]                                  # shared PReLU slope
    y = jnp.where(y >= 0.0, y, alpha * y)                 # PReLU in f32

    # Intermediate layers: feed the next layer via the other VMEM slot (bf16).
    @pl.when(l < n_layers - 1)
    def _():
        act_ref[(l + 1) % 2] = y.astype(act_ref.dtype)

    # Last layer: write the f32 output slab (only column 0 is meaningful).
    @pl.when(l == n_layers - 1)
    def _():
        o_ref[...] = y


@jax.jit
def mlp_forward(x, w_stack, b_stack, alpha):
    """x: (B0, attributes) f32; w_stack: (6, K, K) bf16 (zero-padded);
    b_stack: (6, 1, K) f32; alpha: (1,) f32.  Returns (B0,) f32."""
    B0, A = x.shape
    L, K, _ = w_stack.shape
    B = max(8, ((B0 + 7) // 8) * 8)  # sublane-align the batch

    # Pad input to (B, K); padded rows/cols are zero and meet zero weight rows.
    x_pad = jnp.zeros((B, K), jnp.bfloat16).at[:B0, :A].set(
        x.astype(jnp.bfloat16))

    out = pl.pallas_call(
        _fused_mlp_kernel,
        out_shape=jax.ShapeDtypeStruct((B, K), jnp.float32),
        grid=(L,),
        in_specs=[
            pl.BlockSpec(memory_space=pltpu.SMEM),                # alpha
            pl.BlockSpec((B, K), lambda l: (0, 0)),               # x (resident)
            pl.BlockSpec((1, K, K), lambda l: (l, 0, 0)),         # W_l (streamed)
            pl.BlockSpec((1, 1, K), lambda l: (l, 0, 0)),         # b_l
        ],
        out_specs=pl.BlockSpec((B, K), lambda l: (0, 0)),
        scratch_shapes=[pltpu.VMEM((2, B, K), jnp.bfloat16)],     # activation ping-pong
        compiler_params=pltpu.CompilerParams(
            dimension_semantics=("arbitrary",),                   # layers are sequential
        ),
    )(alpha, x_pad, w_stack, b_stack)

    # Final Linear is 1024 -> 1: real output is column 0 of the padded slab.
    return jnp.squeeze(out[:B0, :1])


# ----------------------------------------------------------------------------
# Parameter construction (deterministic, mirrors the torch __init__):
# xavier_uniform_ weights, default nn.Linear bias init, PReLU alpha = 0.25.
# Weights are zero-padded to a uniform (K, K), stacked, and cast to bf16.
# ----------------------------------------------------------------------------
def init_params(key, attributes, hidden=HIDDEN):
    dims = [attributes, hidden, hidden, hidden, hidden, hidden, 1]
    L = len(dims) - 1
    K = hidden
    w_stack = jnp.zeros((L, K, K), jnp.float32)
    b_stack = jnp.zeros((L, 1, K), jnp.float32)
    for i in range(L):
        fan_in, fan_out = dims[i], dims[i + 1]
        key, kw, kb = jax.random.split(key, 3)
        bw = math.sqrt(6.0 / (fan_in + fan_out))          # xavier_uniform_
        w = jax.random.uniform(kw, (fan_in, fan_out), jnp.float32, -bw, bw)
        bb = 1.0 / math.sqrt(fan_in)                      # nn.Linear default bias
        b = jax.random.uniform(kb, (fan_out,), jnp.float32, -bb, bb)
        w_stack = w_stack.at[i, :fan_in, :fan_out].set(w)
        b_stack = b_stack.at[i, 0, :fan_out].set(b)
    alpha = jnp.array([0.25], dtype=jnp.float32)          # nn.PReLU() default
    return w_stack.astype(jnp.bfloat16), b_stack, alpha


# ----------------------------------------------------------------------------
# Pure-JAX reference mirroring the kernel's bf16-input / f32-accum math.
# ----------------------------------------------------------------------------
def mlp_forward_ref(x, w_stack, b_stack, alpha):
    B0, A = x.shape
    L, K, _ = w_stack.shape
    h = jnp.zeros((B0, K), jnp.bfloat16).at[:, :A].set(x.astype(jnp.bfloat16))
    a = alpha[0]
    y = None
    for l in range(L):
        y = jnp.dot(h, w_stack[l], preferred_element_type=jnp.float32)
        y = y + b_stack[l]
        y = jnp.where(y >= 0.0, y, a * y)
        h = y.astype(jnp.bfloat16)
    return jnp.squeeze(y[:, :1])


if __name__ == "__main__":
    ATTRIBUTES = 16
    BATCH = 8

    key = jax.random.PRNGKey(0)
    key, kx, kp = jax.random.split(key, 3)

    x = jax.random.normal(kx, (BATCH, ATTRIBUTES), dtype=jnp.float32)
    w_stack, b_stack, alpha = init_params(kp, ATTRIBUTES)

    out = mlp_forward(x, w_stack, b_stack, alpha)
    out = jax.block_until_ready(out)

    ref = mlp_forward_ref(x, w_stack, b_stack, alpha)
    assert out.shape == (BATCH,), out.shape
    err = float(jnp.max(jnp.abs(out - ref)))
    scale = float(jnp.maximum(jnp.max(jnp.abs(ref)), 1e-6))
    assert err / scale < 2e-2, (err, scale, out, ref)

    print("KERNEL_OK")
</pallas_src>

<mosaic_0001>
module attributes {stable_mosaic.version = 11 : i64} {
  func.func @_fused_mlp_kernel(%arg0: i32, %arg1: memref<1xf32, #tpu.memory_space<smem>>, %arg2: memref<8x1024xbf16, #tpu.memory_space<vmem>>, %arg3: memref<1x1024x1024xbf16, #tpu.memory_space<vmem>>, %arg4: memref<1x1x1024xf32, #tpu.memory_space<vmem>>, %arg5: memref<8x1024xf32, #tpu.memory_space<vmem>>, %arg6: memref<2x8x1024xbf16, #tpu.memory_space<vmem>>) attributes {dimension_semantics = [#tpu.dimension_semantics<arbitrary>], iteration_bounds = array<i64: 6>, scalar_prefetch = 0 : i64, scratch_operands = 1 : i64, tpu.core_type = #tpu.core_type<tc>, window_params = [{transform_indices = @transform_0, window_bounds = array<i64: 1>}, {pipeline_mode = #tpu.pipeline_mode<synchronous>, transform_indices = @transform_1, window_bounds = array<i64: 8, 1024>}, {transform_indices = @transform_2, window_bounds = array<i64: 1, 1024, 1024>}, {transform_indices = @transform_3, window_bounds = array<i64: 1, 1, 1024>}, {pipeline_mode = #tpu.pipeline_mode<synchronous>, transform_indices = @transform_4, window_bounds = array<i64: 8, 1024>}]} {
    %c0_i32 = arith.constant 0 : i32
    %0 = arith.cmpi eq, %arg0, %c0_i32 : i32
    %1 = arith.extui %0 : i1 to i32
    %c0_i32_0 = arith.constant 0 : i32
    %2 = arith.cmpi ne, %1, %c0_i32_0 : i32
    scf.if %2 {
      %c0_17 = arith.constant 0 : index
      %c0_18 = arith.constant 0 : index
      %35 = vector.load %arg2[%c0_17, %c0_18] : memref<8x1024xbf16, #tpu.memory_space<vmem>>, vector<8x1024xbf16>
      %c0_19 = arith.constant 0 : index
      %c0_20 = arith.constant 0 : index
      %c0_21 = arith.constant 0 : index
      %36 = vector.load %arg6[%c0_19, %c0_20, %c0_21] : memref<2x8x1024xbf16, #tpu.memory_space<vmem>>, vector<1x8x1024xbf16>
      %37 = vector.shape_cast %36 : vector<1x8x1024xbf16> to vector<8x1024xbf16>
      %38 = vector.shape_cast %35 : vector<8x1024xbf16> to vector<1x8x1024xbf16>
      tpu.vector_store %arg6[%c0_19, %c0_20, %c0_21], %38 {strides = array<i32>} : memref<2x8x1024xbf16, #tpu.memory_space<vmem>>, vector<1x8x1024xbf16>,
    } else {
    }
    %c2_i32 = arith.constant 2 : i32
    %c0_i32_1 = arith.constant 0 : i32
    %3 = arith.cmpi eq, %c2_i32, %c0_i32_1 : i32
    %c1_i32 = arith.constant 1 : i32
    %4 = arith.select %3, %c1_i32, %c2_i32 : i32
    %5 = arith.remsi %arg0, %4 : i32
    %c0_i32_2 = arith.constant 0 : i32
    %6 = arith.cmpi ne, %5, %c0_i32_2 : i32
    %c0_i32_3 = arith.constant 0 : i32
    %7 = arith.cmpi slt, %5, %c0_i32_3 : i32
    %c0_i32_4 = arith.constant 0 : i32
    %8 = arith.cmpi slt, %4, %c0_i32_4 : i32
    %9 = arith.xori %7, %8 : i1
    %10 = arith.andi %9, %6 : i1
    %11 = arith.addi %5, %4 : i32
    %12 = arith.select %10, %11, %5 : i32
    %13 = arith.index_cast %12 : i32 to index
    %c0 = arith.constant 0 : index
    %c0_5 = arith.constant 0 : index
    %14 = vector.load %arg6[%13, %c0, %c0_5] : memref<2x8x1024xbf16, #tpu.memory_space<vmem>>, vector<1x8x1024xbf16>
    %15 = vector.shape_cast %14 : vector<1x8x1024xbf16> to vector<8x1024xbf16>
    %c0_6 = arith.constant 0 : index
    %c0_7 = arith.constant 0 : index
    %c0_8 = arith.constant 0 : index
    %16 = vector.load %arg3[%c0_6, %c0_7, %c0_8] : memref<1x1024x1024xbf16, #tpu.memory_space<vmem>>, vector<1x1024x1024xbf16>
    %17 = vector.shape_cast %16 : vector<1x1024x1024xbf16> to vector<1024x1024xbf16>
    %cst = arith.constant dense<0.000000e+00> : vector<8x1024xf32>
    %18 = tpu.matmul %15, %17, %cst {dimension_numbers = #tpu.dot_dimension_numbers<[1], [0], [0], [1], [0, 0, 1, 1], [], []>} : vector<8x1024xbf16>, vector<1024x1024xbf16>, vector<8x1024xf32> -> vector<8x1024xf32>
    %c0_9 = arith.constant 0 : index
    %c0_10 = arith.constant 0 : index
    %c0_11 = arith.constant 0 : index
    %19 = vector.load %arg4[%c0_9, %c0_10, %c0_11] : memref<1x1x1024xf32, #tpu.memory_space<vmem>>, vector<1x1x1024xf32>
    %20 = vector.shape_cast %19 : vector<1x1x1024xf32> to vector<1x1024xf32>
    %21 = vector.broadcast %20 : vector<1x1024xf32> to vector<8x1024xf32>
    %22 = arith.addf %18, %21 : vector<8x1024xf32>
    %c0_12 = arith.constant 0 : index
    %23 = memref.load %arg1[%c0_12] : memref<1xf32, #tpu.memory_space<smem>>
    %cst_13 = arith.constant 0.000000e+00 : f32
    %24 = vector.broadcast %cst_13 : f32 to vector<8x1024xf32>
    %25 = arith.cmpf oge, %22, %24 : vector<8x1024xf32>
    %26 = vector.broadcast %23 : f32 to vector<8x1024xf32>
    %27 = arith.mulf %26, %22 : vector<8x1024xf32>
    %28 = arith.select %25, %22, %27 : vector<8x1024xi1>, vector<8x1024xf32>
    %c5_i32 = arith.constant 5 : i32
    %29 = arith.cmpi slt, %arg0, %c5_i32 : i32
    %30 = arith.extui %29 : i1 to i32
    %c0_i32_14 = arith.constant 0 : i32
    %31 = arith.cmpi ne, %30, %c0_i32_14 : i32
    scf.if %31 {
      %35 = arith.truncf %28 : vector<8x1024xf32> to vector<8x1024xbf16>
      %c1_i32_17 = arith.constant 1 : i32
      %36 = arith.addi %arg0, %c1_i32_17 : i32
      %c2_i32_18 = arith.constant 2 : i32
      %c0_i32_19 = arith.constant 0 : i32
      %37 = arith.cmpi eq, %c2_i32_18, %c0_i32_19 : i32
      %c1_i32_20 = arith.constant 1 : i32
      %38 = arith.select %37, %c1_i32_20, %c2_i32_18 : i32
      %39 = arith.remsi %36, %38 : i32
      %c0_i32_21 = arith.constant 0 : i32
      %40 = arith.cmpi ne, %39, %c0_i32_21 : i32
      %c0_i32_22 = arith.constant 0 : i32
      %41 = arith.cmpi slt, %39, %c0_i32_22 : i32
      %c0_i32_23 = arith.constant 0 : i32
      %42 = arith.cmpi slt, %38, %c0_i32_23 : i32
      %43 = arith.xori %41, %42 : i1
      %44 = arith.andi %43, %40 : i1
      %45 = arith.addi %39, %38 : i32
      %46 = arith.select %44, %45, %39 : i32
      %47 = arith.index_cast %46 : i32 to index
      %c0_24 = arith.constant 0 : index
      %c0_25 = arith.constant 0 : index
      %48 = vector.load %arg6[%47, %c0_24, %c0_25] : memref<2x8x1024xbf16, #tpu.memory_space<vmem>>, vector<1x8x1024xbf16>
      %49 = vector.shape_cast %48 : vector<1x8x1024xbf16> to vector<8x1024xbf16>
      %50 = vector.shape_cast %35 : vector<8x1024xbf16> to vector<1x8x1024xbf16>
      tpu.vector_store %arg6[%47, %c0_24, %c0_25], %50 {strides = array<i32>} : memref<2x8x1024xbf16, #tpu.memory_space<vmem>>, vector<1x8x1024xbf16>,
    } else {
    }
    %c5_i32_15 = arith.constant 5 : i32
    %32 = arith.cmpi eq, %arg0, %c5_i32_15 : i32
    %33 = arith.extui %32 : i1 to i32
    %c0_i32_16 = arith.constant 0 : i32
    %34 = arith.cmpi ne, %33, %c0_i32_16 : i32
    scf.if %34 {
      %c0_17 = arith.constant 0 : index
      %c0_18 = arith.constant 0 : index
      %35 = vector.load %arg5[%c0_17, %c0_18] : memref<8x1024xf32, #tpu.memory_space<vmem>>, vector<8x1024xf32>
      tpu.vector_store %arg5[%c0_17, %c0_18], %28 {strides = array<i32>} : memref<8x1024xf32, #tpu.memory_space<vmem>>, vector<8x1024xf32>,
    } else {
    }
    return
  }
  func.func @transform_0(%arg0: i32) -> i32 {
    %c0_i32 = arith.constant 0 : i32
    %c0_i32_0 = arith.constant 0 : i32
    return %c0_i32 : i32
  }
  func.func @transform_1(%arg0: i32) -> (i32, i32) {
    %c0_i32 = arith.constant 0 : i32
    %c0_i32_0 = arith.constant 0 : i32
    %c0_i32_1 = arith.constant 0 : i32
    return %c0_i32, %c0_i32_0 : i32, i32
  }
  func.func @transform_2(%arg0: i32) -> (i32, i32, i32) {
    %c0_i32 = arith.constant 0 : i32
    %c0_i32_0 = arith.constant 0 : i32
    %c0_i32_1 = arith.constant 0 : i32
    return %arg0, %c0_i32, %c0_i32_0 : i32, i32, i32
  }
  func.func @transform_3(%arg0: i32) -> (i32, i32, i32) {
    %c0_i32 = arith.constant 0 : i32
    %c0_i32_0 = arith.constant 0 : i32
    %c0_i32_1 = arith.constant 0 : i32
    return %arg0, %c0_i32, %c0_i32_0 : i32, i32, i32
  }
  func.func @transform_4(%arg0: i32) -> (i32, i32) {
    %c0_i32 = arith.constant 0 : i32
    %c0_i32_0 = arith.constant 0 : i32
    %c0_i32_1 = arith.constant 0 : i32
    return %c0_i32, %c0_i32_0 : i32, i32
  }
}

</mosaic_0001>

<llo_original>
// kernel: mlp_forward.1
$region0: #{mlp_forward.1}
  #allocation0 [shape = 'u32[]', space=smem, size = 0x4, offset = 0x4, fixed_abs, tag = 'smem constant byte address 0x4 - core index']
  #allocation1 [shape = 'u32[72,128]{1,0:T(1,128)}', space=vmem, size = 0x9000, scoped, tag = 'internal scratch']
  #allocation2 [shape = 'bf16[2,8,1024]{2,1,0:T(8,128)(2,1)}', space=vmem, size = 0x8000, scoped, tag = 'scratch operand']
  #allocation3 [shape = 'f32[1]{0:T(128)S(6)}', space=smem, size = 0x200, scoped, tag = 'scoped memory for mlp_forward.1']
  %s0 = inlined_call_operand.<no memory space> [shape: f32[1], index: 0, kind: input, shape index: {}]
  %s1 = inlined_call_operand.vmem [shape: bf16[8,1024], index: 1, kind: input, shape index: {}]
  %s2 = inlined_call_operand.hbm [shape: bf16[6,1024,1024], index: 2, kind: input, shape index: {}]
  %s3 = inlined_call_operand.hbm [shape: f32[6,1,1024], index: 3, kind: input, shape index: {}]
  %s4 = inlined_call_operand.vmem [shape: f32[8,1024], index: 4, kind: output, shape index: {}]
  %s5 = sld [smem:[#allocation0]]
  $region69: #{mlp_forward.1} parent=0
    _
  %s7 = ssub.s32 1, %s5
  %s8 = scalar_select 0, %s7, %s5
  %9 = sst [smem:[#allocation3]] %s0
  $region1: #{mlp_forward.1} parent=0
    #allocation4 [shape = 'u8[4194304]{0}', space=vmem, size = 0x400000, scoped, tag = 'input window, operand 2']
    #allocation5 [shape = 's32[2]{0}', space=sflag, size = 0x8, scoped, tag = 'scoped memory for mlp_forward.1']
    #allocation6 [shape = 'u8[8192]{0}', space=vmem, size = 0x2000, scoped, tag = 'input window, operand 3']
    #allocation7 [shape = 's32[2]{0}', space=sflag, size = 0x8, scoped, tag = 'scoped memory for mlp_forward.1']
    %10 = vsyncpa [#allocation5], 0
    %s11 = scalar_lea.sflag [#allocation5], 1
    %12 = vsyncpa %s11, 0
    %13 = vsyncpa [#allocation7], 0
    %s14 = scalar_lea.sflag [#allocation7], 1
    %15 = vsyncpa %s14, 0
    loop: start=0, step=1, limit=8
    $region2: #{mlp_forward.1} parent=1 // loop_pre_header
      _
    $region3: #{mlp_forward.1} parent=1 // loop_header
      %s17 = sphi 0, %s21
      %p18 = scmp.ge.s32.totalorder %s17, 8
      %s25 = sphi 0, %s25
      %s27 = sphi 0, %s25
      %s28 = sphi 0, %s27
      %s42 = sphi 0, %s28
      %s46 = sphi 0, %s46
      %s48 = sphi 0, %s46
      %s49 = sphi 0, %s48
      %s63 = sphi 0, %s49
      %s69 = sphi 0, %s71
      %s72 = sphi 0, %s69
      %s73 = sphi 0, %s72
      %s89 = sphi 0, %s73
      %s95 = sphi 0, %s97
      %s98 = sphi 0, %s95
      %s99 = sphi 0, %s98
      %s115 = sphi 0, %s99
      %s119 = sphi 0, %s119
      %s121 = sphi 0, %s119
      %s122 = sphi 0, %s121
      %s136 = sphi 0, %s122
    $region4: #{mlp_forward.1} parent=1 // loop_header_branch
      %20 = sbr.rel (%p18) target = $region8
    $region5: #{mlp_forward.1} parent=1 // loop_body
      %s22 = ssub.s32 %s17, 1
      %s23 = ssub.s32 %s17, 2
      %s24 = sadd.s32 %s17, 1
      %s26 = sadd.s32 %s25, 1
      %p29 = scmp.eq.s32.totalorder %s17, 5
      %p30 = scmp.ne.s32.totalorder %s25, %s27
      %p31 = scmp.eq.s32.totalorder %s17, 0
      %p32 = por %p30, %p31
      %p33 = scmp.ne.s32.totalorder %s25, %s27
      %p34 = scmp.eq.s32.totalorder %s22, 5
      %p35 = por %p33, %p34
      %p36 = scmp.ne.s32.totalorder %s27, %s28
      %p37 = scmp.eq.s32.totalorder %s22, 0
      %p38 = por %p36, %p37
      %p39 = scmp.ne.s32.totalorder %s27, %s28
      %p40 = scmp.eq.s32.totalorder %s23, 5
      %p41 = por %p39, %p40
      %p43 = scmp.ne.s32.totalorder %s28, %s42
      %p44 = scmp.eq.s32.totalorder %s23, 0
      %p45 = por %p43, %p44
      %s47 = sadd.s32 %s46, 1
      %p50 = scmp.eq.s32.totalorder %s17, 5
      %p51 = scmp.ne.s32.totalorder %s46, %s48
      %p52 = scmp.eq.s32.totalorder %s17, 0
      %p53 = por %p51, %p52
      %p54 = scmp.ne.s32.totalorder %s46, %s48
      %p55 = scmp.eq.s32.totalorder %s22, 5
      %p56 = por %p54, %p55
      %p57 = scmp.ne.s32.totalorder %s48, %s49
      %p58 = scmp.eq.s32.totalorder %s22, 0
      %p59 = por %p57, %p58
      %p60 = scmp.ne.s32.totalorder %s48, %s49
      %p61 = scmp.eq.s32.totalorder %s23, 5
      %p62 = por %p60, %p61
      %p64 = scmp.ne.s32.totalorder %s49, %s63
      %p65 = scmp.eq.s32.totalorder %s23, 0
      %p66 = por %p64, %p65
      %s67 = ssub.s32 %s17, %s24
      %p68 = scmp.eq.s32.totalorder %s67, 0
      %s70 = sadd.s32 %s69, 1
      %s71 = scalar_select %p68, %s69, %s70
      %p74 = pneg %p68
      %p75 = scmp.eq.s32.totalorder %s17, 5
      %p76 = por %p74, %p75
      %p77 = scmp.ne.s32.totalorder %s69, %s72
      %p78 = scmp.eq.s32.totalorder %s17, 0
      %p79 = por %p77, %p78
      %p80 = scmp.ne.s32.totalorder %s69, %s72
      %p81 = scmp.eq.s32.totalorder %s22, 5
      %p82 = por %p80, %p81
      %p83 = scmp.ne.s32.totalorder %s72, %s73
      %p84 = scmp.eq.s32.totalorder %s22, 0
      %p85 = por %p83, %p84
      %p86 = scmp.ne.s32.totalorder %s72, %s73
      %p87 = scmp.eq.s32.totalorder %s23, 5
      %p88 = por %p86, %p87
      %p90 = scmp.ne.s32.totalorder %s73, %s89
      %p91 = scmp.eq.s32.totalorder %s23, 0
      %p92 = por %p90, %p91
      %s93 = ssub.s32 %s17, %s24
      %p94 = scmp.eq.s32.totalorder %s93, 0
      %s96 = sadd.s32 %s95, 1
      %s97 = scalar_select %p94, %s95, %s96
      %p100 = pneg %p94
      %p101 = scmp.eq.s32.totalorder %s17, 5
      %p102 = por %p100, %p101
      %p103 = scmp.ne.s32.totalorder %s95, %s98
      %p104 = scmp.eq.s32.totalorder %s17, 0
      %p105 = por %p103, %p104
      %p106 = scmp.ne.s32.totalorder %s95, %s98
      %p107 = scmp.eq.s32.totalorder %s22, 5
      %p108 = por %p106, %p107
      %p109 = scmp.ne.s32.totalorder %s98, %s99
      %p110 = scmp.eq.s32.totalorder %s22, 0
      %p111 = por %p109, %p110
      %p112 = scmp.ne.s32.totalorder %s98, %s99
      %p113 = scmp.eq.s32.totalorder %s23, 5
      %p114 = por %p112, %p113
      %p116 = scmp.ne.s32.totalorder %s99, %s115
      %p117 = scmp.eq.s32.totalorder %s23, 0
      %p118 = por %p116, %p117
      %s120 = sadd.s32 %s119, 1
      %p123 = scmp.eq.s32.totalorder %s17, 5
      %p124 = scmp.ne.s32.totalorder %s119, %s121
      %p125 = scmp.eq.s32.totalorder %s17, 0
      %p126 = por %p124, %p125
      %p127 = scmp.ne.s32.totalorder %s119, %s121
      %p128 = scmp.eq.s32.totalorder %s22, 5
      %p129 = por %p127, %p128
      %p130 = scmp.ne.s32.totalorder %s121, %s122
      %p131 = scmp.eq.s32.totalorder %s22, 0
      %p132 = por %p130, %p131
      %p133 = scmp.ne.s32.totalorder %s121, %s122
      %p134 = scmp.eq.s32.totalorder %s23, 5
      %p135 = por %p133, %p134
      %p137 = scmp.ne.s32.totalorder %s122, %s136
      %p138 = scmp.eq.s32.totalorder %s23, 0
      %p139 = por %p137, %p138
      %p140 = scmp.le.s32.totalorder 1, %s17
      %p141 = scmp.lt.s32.totalorder %s17, 7
      %p142 = pnand %p140, %p141
      %p143 = pneg %p142
      // Predicated region
      $region9: #{mlp_forward.1} parent=5 // pred_check
        _
      $region10: #{mlp_forward.1} parent=5 // pred_check_branch
        %145 = sbr.rel (%p142) target = $region12
      $region11: #{mlp_forward.1} parent=5 // pred_region
        %s146 = ssub.s32 %s17, 1
        // Predicated region
        $region13: #{mlp_forward.1} parent=11 // pred_check
          %p147 = pneg %p38
        $region14: #{mlp_forward.1} parent=11 // pred_check_branch
          %149 = sbr.rel (%p147) target = $region16
        $region15: #{mlp_forward.1} parent=11 // pred_region
          _
        $region16: #{mlp_forward.1} parent=11 // pred_fallthru
          _
        // Predicated region
        $region17: #{mlp_forward.1} parent=11 // pred_check
          %p150 = pneg %p59
        $region18: #{mlp_forward.1} parent=11 // pred_check_branch
          %152 = sbr.rel (%p150) target = $region20
        $region19: #{mlp_forward.1} parent=11 // pred_region
          _
        $region20: #{mlp_forward.1} parent=11 // pred_fallthru
          _
      $region12: #{mlp_forward.1} parent=5 // pred_fallthru
        _
      %p153 = scmp.lt.s32.totalorder %s17, 6
      // Predicated region
      $region21: #{mlp_forward.1} parent=5 // pred_check
        %p154 = pneg %p153
      $region22: #{mlp_forward.1} parent=5 // pred_check_branch
        %156 = sbr.rel (%p154) target = $region24
      $region23: #{mlp_forward.1} parent=5 // pred_region
        // Predicated region
        $region25: #{mlp_forward.1} parent=23 // pred_check
          %p157 = pneg %p79
        $region26: #{mlp_forward.1} parent=23 // pred_check_branch
          %159 = sbr.rel (%p157) target = $region28
        $region27: #{mlp_forward.1} parent=23 // pred_region
          %s160 = sand.u32 %s69, 1
          %s161 = scalar_lea.sflag [#allocation5], %s160
          %s162 = sand.u32 %s69, 1
          %s163 = smul.addr %s162, 4096
          %s164 = scalar_lea.vmem [#allocation4], %s163
          %166 = vsyncadd %s161, 0
          %s167 = smul.addr %s17, 1024
          %s168 = smul.addr %s167, 4
          %s169 = scalar_lea.hbm %s2, %s168
          %s170 = sshll.u32 %s169, 4
          %s171 = int_to_ptr.hbm [resolvable:$true] %s170
          %s172 = sshll.u32 %s164, 4
          %s173 = int_to_ptr.vmem [resolvable:$true] %s172
          %178 = dma.hbm_to_vmem [thread:$0]  %s171, 65536, %s173, %s161, 512, 512, 32
        $region28: #{mlp_forward.1} parent=23 // pred_fallthru
          _
        // Predicated region
        $region29: #{mlp_forward.1} parent=23 // pred_check
          %p179 = pneg %p105
        $region30: #{mlp_forward.1} parent=23 // pred_check_branch
          %181 = sbr.rel (%p179) target = $region32
        $region31: #{mlp_forward.1} parent=23 // pred_region
          %s182 = sand.u32 %s95, 1
          %s183 = scalar_lea.sflag [#allocation7], %s182
          %s184 = sand.u32 %s95, 1
          %s185 = smul.addr %s184, 8
          %s186 = scalar_lea.vmem [#allocation6], %s185
          %188 = vsyncadd %s183, 0
          %s189 = smul.addr %s17, 8
          %s190 = scalar_lea.hbm %s3, %s189
          %s192 = sshll.u32 %s190, 4
          %s193 = int_to_ptr.hbm [resolvable:$true] %s192
          %s194 = sshll.u32 %s186, 4
          %s195 = int_to_ptr.vmem [resolvable:$true] %s194
          %197 = dma.hbm_to_vmem [thread:$0]  %s193, 128, %s195, %s183
        $region32: #{mlp_forward.1} parent=23 // pred_fallthru
          _
      $region24: #{mlp_forward.1} parent=5 // pred_fallthru
        _
      %p198 = scmp.le.s32.totalorder 1, %s17
      %p199 = scmp.lt.s32.totalorder %s17, 7
      %p200 = pnand %p198, %p199
      %p201 = pneg %p200
      // Predicated region
      $region33: #{mlp_forward.1} parent=5 // pred_check
        _
      $region34: #{mlp_forward.1} parent=5 // pred_check_branch
        %203 = sbr.rel (%p200) target = $region36
      $region35: #{mlp_forward.1} parent=5 // pred_region
        %s204 = ssub.s32 %s17, 1
        %s205 = sand.u32 %s72, 1
        %s206 = scalar_lea.sflag [#allocation5], %s205
        %s207 = sand.u32 %s72, 1
        %s208 = smul.addr %s207, 4096
        %s209 = scalar_lea.vmem [#allocation4], %s208
        // Predicated region
        $region37: #{mlp_forward.1} parent=35 // pred_check
          %p210 = pneg %p85
        $region38: #{mlp_forward.1} parent=35 // pred_check_branch
          %212 = sbr.rel (%p210) target = $region40
        $region39: #{mlp_forward.1} parent=35 // pred_region
          %214 = dma.done %s206, 65536
        $region40: #{mlp_forward.1} parent=35 // pred_fallthru
          _
        %s215 = sand.u32 %s98, 1
        %s216 = scalar_lea.sflag [#allocation7], %s215
        %s217 = sand.u32 %s98, 1
        %s218 = smul.addr %s217, 8
        %s219 = scalar_lea.vmem [#allocation6], %s218
        // Predicated region
        $region41: #{mlp_forward.1} parent=35 // pred_check
          %p220 = pneg %p111
        $region42: #{mlp_forward.1} parent=35 // pred_check_branch
          %222 = sbr.rel (%p220) target = $region44
        $region43: #{mlp_forward.1} parent=35 // pred_region
          %224 = dma.done %s216, 128
        $region44: #{mlp_forward.1} parent=35 // pred_fallthru
          _
        %p225 = pneg %p38
        %p226 = pneg %p35
        %p227 = pneg %p59
        %p228 = pneg %p56
        %s229 = sand.u32 %s72, 1
        %s230 = scalar_lea.sflag [#allocation5], %s229
        %s231 = sand.u32 %s72, 1
        %s232 = smul.addr %s231, 4096
        %s233 = scalar_lea.vmem [#allocation4], %s232
        %p234 = pneg %p85
        %p235 = pneg %p82
        %s236 = sand.u32 %s98, 1
        %s237 = scalar_lea.sflag [#allocation7], %s236
        %s238 = sand.u32 %s98, 1
        %s239 = smul.addr %s238, 8
        %s240 = scalar_lea.vmem [#allocation6], %s239
        %p241 = pneg %p111
        %p242 = pneg %p108
        %p243 = pneg %p132
        %p244 = pneg %p129
        %p245 = scmp.eq.s32.totalorder %s22, 0
        // Predicated region
        $region45: #{mlp_forward.1} parent=35 // pred_check
          %p246 = pneg %p245
        $region46: #{mlp_forward.1} parent=35 // pred_check_branch
          %248 = sbr.rel (%p246) target = $region48
        $region47: #{mlp_forward.1} parent=35 // pred_region
          %v249 = vld [vmem:[%s1] sm:$0xff]
          %v250 = vld [vmem:[%s1 + $0x8] sm:$0xff]
          %v251 = vld [vmem:[%s1 + $0x10] sm:$0xff]
          %v252 = vld [vmem:[%s1 + $0x18] sm:$0xff]
          %253 = vst [vmem:[#allocation2] sm:$0xff] %v249
          %254 = vst [vmem:[#allocation2 + $0x8] sm:$0xff] %v250
          %255 = vst [vmem:[#allocation2 + $0x10] sm:$0xff] %v251
          %256 = vst [vmem:[#allocation2 + $0x18] sm:$0xff] %v252
        $region48: #{mlp_forward.1} parent=35 // pred_fallthru
          _
        %p257 = scmp.lt.s32.totalorder %s22, 0
        %s258 = ssub.s32 0, %s22
        %s259 = scalar_select %p257, %s258, %s22
        %s260 = sand.u32 %s259, 1
        %s261 = ssub.s32 0, %s260
        %s262 = scalar_select %p257, %s261, %s260
        %p263 = scmp.ne.s32.totalorder %s262, 0
        %p264 = scmp.lt.s32.totalorder %s262, 0
        %p265 = pnand %p264, %p263
        %p266 = pneg %p265
        %s267 = sadd.s32 %s262, 2
        %s268 = scalar_select %p266, %s267, %s262
        %s269 = smul.u32 %s268, 8
        %s270 = smul.addr %s269, 4
        %s271 = scalar_lea.vmem [#allocation2], %s270
        %v272 = vld [vmem:[%s271] sm:$0xff]
        %v273 = vld [vmem:[%s271 + $0x8] sm:$0xff]
        %v274 = vld [vmem:[%s271 + $0x10] sm:$0xff]
        %v275 = vld [vmem:[%s271 + $0x18] sm:$0xff]
        %v276 = vld [vmem:[%s209] sm:$0xff]
        %v277 = vld [vmem:[%s209 + $0x8] sm:$0xff]
        %v278 = vld [vmem:[%s209 + $0x10] sm:$0xff]
        %v279 = vld [vmem:[%s209 + $0x18] sm:$0xff]
        %v280 = vld [vmem:[%s209 + $0x20] sm:$0xff]
        %v281 = vld [vmem:[%s209 + $0x28] sm:$0xff]
        %v282 = vld [vmem:[%s209 + $0x30] sm:$0xff]
        %v283 = vld [vmem:[%s209 + $0x38] sm:$0xff]
        %v284 = vld [vmem:[%s209 + $0x40] sm:$0xff]
        %v285 = vld [vmem:[%s209 + $0x48] sm:$0xff]
        %v286 = vld [vmem:[%s209 + $0x50] sm:$0xff]
        %v287 = vld [vmem:[%s209 + $0x58] sm:$0xff]
        %v288 = vld [vmem:[%s209 + $0x60] sm:$0xff]
        %v289 = vld [vmem:[%s209 + $0x68] sm:$0xff]
        %v290 = vld [vmem:[%s209 + $0x70] sm:$0xff]
        %v291 = vld [vmem:[%s209 + $0x78] sm:$0xff]
        %v292 = vld [vmem:[%s209 + $0x80] sm:$0xff]
        %v293 = vld [vmem:[%s209 + $0x88] sm:$0xff]
        %v294 = vld [vmem:[%s209 + $0x90] sm:$0xff]
        %v295 = vld [vmem:[%s209 + $0x98] sm:$0xff]
        %v296 = vld [vmem:[%s209 + $0xa0] sm:$0xff]
        %v297 = vld [vmem:[%s209 + $0xa8] sm:$0xff]
        %v298 = vld [vmem:[%s209 + $0xb0] sm:$0xff]
        %v299 = vld [vmem:[%s209 + $0xb8] sm:$0xff]
        %v300 = vld [vmem:[%s209 + $0xc0] sm:$0xff]
        %v301 = vld [vmem:[%s209 + $0xc8] sm:$0xff]
        %v302 = vld [vmem:[%s209 + $0xd0] sm:$0xff]
        %v303 = vld [vmem:[%s209 + $0xd8] sm:$0xff]
        %v304 = vld [vmem:[%s209 + $0xe0] sm:$0xff]
        %v305 = vld [vmem:[%s209 + $0xe8] sm:$0xff]
        %v306 = vld [vmem:[%s209 + $0xf0] sm:$0xff]
        %v307 = vld [vmem:[%s209 + $0xf8] sm:$0xff]
        %v308 = vld [vmem:[%s209 + $0x100] sm:$0xff]
        %v309 = vld [vmem:[%s209 + $0x108] sm:$0xff]
        %v310 = vld [vmem:[%s209 + $0x110] sm:$0xff]
        %v311 = vld [vmem:[%s209 + $0x118] sm:$0xff]
        %v312 = vld [vmem:[%s209 + $0x120] sm:$0xff]
        %v313 = vld [vmem:[%s209 + $0x128] sm:$0xff]
        %v314 = vld [vmem:[%s209 + $0x130] sm:$0xff]
        %v315 = vld [vmem:[%s209 + $0x138] sm:$0xff]
        %v316 = vld [vmem:[%s209 + $0x140] sm:$0xff]
        %v317 = vld [vmem:[%s209 + $0x148] sm:$0xff]
        %v318 = vld [vmem:[%s209 + $0x150] sm:$0xff]
        %v319 = vld [vmem:[%s209 + $0x158] sm:$0xff]
        %v320 = vld [vmem:[%s209 + $0x160] sm:$0xff]
        %v321 = vld [vmem:[%s209 + $0x168] sm:$0xff]
        %v322 = vld [vmem:[%s209 + $0x170] sm:$0xff]
        %v323 = vld [vmem:[%s209 + $0x178] sm:$0xff]
        %v324 = vld [vmem:[%s209 + $0x180] sm:$0xff]
        %v325 = vld [vmem:[%s209 + $0x188] sm:$0xff]
        %v326 = vld [vmem:[%s209 + $0x190] sm:$0xff]
        %v327 = vld [vmem:[%s209 + $0x198] sm:$0xff]
        %v328 = vld [vmem:[%s209 + $0x1a0] sm:$0xff]
        %v329 = vld [vmem:[%s209 + $0x1a8] sm:$0xff]
        %v330 = vld [vmem:[%s209 + $0x1b0] sm:$0xff]
        %v331 = vld [vmem:[%s209 + $0x1b8] sm:$0xff]
        %v332 = vld [vmem:[%s209 + $0x1c0] sm:$0xff]
        %v333 = vld [vmem:[%s209 + $0x1c8] sm:$0xff]
        %v334 = vld [vmem:[%s209 + $0x1d0] sm:$0xff]
        %v335 = vld [vmem:[%s209 + $0x1d8] sm:$0xff]
        %v336 = vld [vmem:[%s209 + $0x1e0] sm:$0xff]
        %v337 = vld [vmem:[%s209 + $0x1e8] sm:$0xff]
        %v338 = vld [vmem:[%s209 + $0x1f0] sm:$0xff]
        %v339 = vld [vmem:[%s209 + $0x1f8] sm:$0xff]
        %v340 = vld [vmem:[%s209 + $0x200] sm:$0xff]
        %v341 = vld [vmem:[%s209 + $0x208] sm:$0xff]
        %v342 = vld [vmem:[%s209 + $0x210] sm:$0xff]
        %v343 = vld [vmem:[%s209 + $0x218] sm:$0xff]
        %v344 = vld [vmem:[%s209 + $0x220] sm:$0xff]
        %v345 = vld [vmem:[%s209 + $0x228] sm:$0xff]
        %v346 = vld [vmem:[%s209 + $0x230] sm:$0xff]
        %v347 = vld [vmem:[%s209 + $0x238] sm:$0xff]
        %v348 = vld [vmem:[%s209 + $0x240] sm:$0xff]
        %v349 = vld [vmem:[%s209 + $0x248] sm:$0xff]
        %v350 = vld [vmem:[%s209 + $0x250] sm:$0xff]
        %v351 = vld [vmem:[%s209 + $0x258] sm:$0xff]
        %v352 = vld [vmem:[%s209 + $0x260] sm:$0xff]
        %v353 = vld [vmem:[%s209 + $0x268] sm:$0xff]
        %v354 = vld [vmem:[%s209 + $0x270] sm:$0xff]
        %v355 = vld [vmem:[%s209 + $0x278] sm:$0xff]
        %v356 = vld [vmem:[%s209 + $0x280] sm:$0xff]
        %v357 = vld [vmem:[%s209 + $0x288] sm:$0xff]
        %v358 = vld [vmem:[%s209 + $0x290] sm:$0xff]
        %v359 = vld [vmem:[%s209 + $0x298] sm:$0xff]
        %v360 = vld [vmem:[%s209 + $0x2a0] sm:$0xff]
        %v361 = vld [vmem:[%s209 + $0x2a8] sm:$0xff]
        %v362 = vld [vmem:[%s209 + $0x2b0] sm:$0xff]
        %v363 = vld [vmem:[%s209 + $0x2b8] sm:$0xff]
        %v364 = vld [vmem:[%s209 + $0x2c0] sm:$0xff]
        %v365 = vld [vmem:[%s209 + $0x2c8] sm:$0xff]
        %v366 = vld [vmem:[%s209 + $0x2d0] sm:$0xff]
        %v367 = vld [vmem:[%s209 + $0x2d8] sm:$0xff]
        %v368 = vld [vmem:[%s209 + $0x2e0] sm:$0xff]
        %v369 = vld [vmem:[%s209 + $0x2e8] sm:$0xff]
        %v370 = vld [vmem:[%s209 + $0x2f0] sm:$0xff]
        %v371 = vld [vmem:[%s209 + $0x2f8] sm:$0xff]
        %v372 = vld [vmem:[%s209 + $0x300] sm:$0xff]
        %v373 = vld [vmem:[%s209 + $0x308] sm:$0xff]
        %v374 = vld [vmem:[%s209 + $0x310] sm:$0xff]
        %v375 = vld [vmem:[%s209 + $0x318] sm:$0xff]
        %v376 = vld [vmem:[%s209 + $0x320] sm:$0xff]
        %v377 = vld [vmem:[%s209 + $0x328] sm:$0xff]
        %v378 = vld [vmem:[%s209 + $0x330] sm:$0xff]
        %v379 = vld [vmem:[%s209 + $0x338] sm:$0xff]
        %v380 = vld [vmem:[%s209 + $0x340] sm:$0xff]
        %v381 = vld [vmem:[%s209 + $0x348] sm:$0xff]
        %v382 = vld [vmem:[%s209 + $0x350] sm:$0xff]
        %v383 = vld [vmem:[%s209 + $0x358] sm:$0xff]
        %v384 = vld [vmem:[%s209 + $0x360] sm:$0xff]
        %v385 = vld [vmem:[%s209 + $0x368] sm:$0xff]
        %v386 = vld [vmem:[%s209 + $0x370] sm:$0xff]
        %v387 = vld [vmem:[%s209 + $0x378] sm:$0xff]
        %v388 = vld [vmem:[%s209 + $0x380] sm:$0xff]
        %v389 = vld [vmem:[%s209 + $0x388] sm:$0xff]
        %v390 = vld [vmem:[%s209 + $0x390] sm:$0xff]
        %v391 = vld [vmem:[%s209 + $0x398] sm:$0xff]
        %v392 = vld [vmem:[%s209 + $0x3a0] sm:$0xff]
        %v393 = vld [vmem:[%s209 + $0x3a8] sm:$0xff]
        %v394 = vld [vmem:[%s209 + $0x3b0] sm:$0xff]
        %v395 = vld [vmem:[%s209 + $0x3b8] sm:$0xff]
        %v396 = vld [vmem:[%s209 + $0x3c0] sm:$0xff]
        %v397 = vld [vmem:[%s209 + $0x3c8] sm:$0xff]
        %v398 = vld [vmem:[%s209 + $0x3d0] sm:$0xff]
        %v399 = vld [vmem:[%s209 + $0x3d8] sm:$0xff]
        %v400 = vld [vmem:[%s209 + $0x3e0] sm:$0xff]
        %v401 = vld [vmem:[%s209 + $0x3e8] sm:$0xff]
        %v402 = vld [vmem:[%s209 + $0x3f0] sm:$0xff]
        %v403 = vld [vmem:[%s209 + $0x3f8] sm:$0xff]
        %v404 = vld [vmem:[%s209 + $0x400] sm:$0xff]
        %v405 = vld [vmem:[%s209 + $0x408] sm:$0xff]
        %v406 = vld [vmem:[%s209 + $0x410] sm:$0xff]
        %v407 = vld [vmem:[%s209 + $0x418] sm:$0xff]
        %v408 = vld [vmem:[%s209 + $0x420] sm:$0xff]
        %v409 = vld [vmem:[%s209 + $0x428] sm:$0xff]
        %v410 = vld [vmem:[%s209 + $0x430] sm:$0xff]
        %v411 = vld [vmem:[%s209 + $0x438] sm:$0xff]
        %v412 = vld [vmem:[%s209 + $0x440] sm:$0xff]
        %v413 = vld [vmem:[%s209 + $0x448] sm:$0xff]
        %v414 = vld [vmem:[%s209 + $0x450] sm:$0xff]
        %v415 = vld [vmem:[%s209 + $0x458] sm:$0xff]
        %v416 = vld [vmem:[%s209 + $0x460] sm:$0xff]
        %v417 = vld [vmem:[%s209 + $0x468] sm:$0xff]
        %v418 = vld [vmem:[%s209 + $0x470] sm:$0xff]
        %v419 = vld [vmem:[%s209 + $0x478] sm:$0xff]
        %v420 = vld [vmem:[%s209 + $0x480] sm:$0xff]
        %v421 = vld [vmem:[%s209 + $0x488] sm:$0xff]
        %v422 = vld [vmem:[%s209 + $0x490] sm:$0xff]
        %v423 = vld [vmem:[%s209 + $0x498] sm:$0xff]
        %v424 = vld [vmem:[%s209 + $0x4a0] sm:$0xff]
        %v425 = vld [vmem:[%s209 + $0x4a8] sm:$0xff]
        %v426 = vld [vmem:[%s209 + $0x4b0] sm:$0xff]
        %v427 = vld [vmem:[%s209 + $0x4b8] sm:$0xff]
        %v428 = vld [vmem:[%s209 + $0x4c0] sm:$0xff]
        %v429 = vld [vmem:[%s209 + $0x4c8] sm:$0xff]
        %v430 = vld [vmem:[%s209 + $0x4d0] sm:$0xff]
        %v431 = vld [vmem:[%s209 + $0x4d8] sm:$0xff]
        %v432 = vld [vmem:[%s209 + $0x4e0] sm:$0xff]
        %v433 = vld [vmem:[%s209 + $0x4e8] sm:$0xff]
        %v434 = vld [vmem:[%s209 + $0x4f0] sm:$0xff]
        %v435 = vld [vmem:[%s209 + $0x4f8] sm:$0xff]
        %v436 = vld [vmem:[%s209 + $0x500] sm:$0xff]
        %v437 = vld [vmem:[%s209 + $0x508] sm:$0xff]
        %v438 = vld [vmem:[%s209 + $0x510] sm:$0xff]
        %v439 = vld [vmem:[%s209 + $0x518] sm:$0xff]
        %v440 = vld [vmem:[%s209 + $0x520] sm:$0xff]
        %v441 = vld [vmem:[%s209 + $0x528] sm:$0xff]
        %v442 = vld [vmem:[%s209 + $0x530] sm:$0xff]
        %v443 = vld [vmem:[%s209 + $0x538] sm:$0xff]
        %v444 = vld [vmem:[%s209 + $0x540] sm:$0xff]
        %v445 = vld [vmem:[%s209 + $0x548] sm:$0xff]
        %v446 = vld [vmem:[%s209 + $0x550] sm:$0xff]
        %v447 = vld [vmem:[%s209 + $0x558] sm:$0xff]
        %v448 = vld [vmem:[%s209 + $0x560] sm:$0xff]
        %v449 = vld [vmem:[%s209 + $0x568] sm:$0xff]
        %v450 = vld [vmem:[%s209 + $0x570] sm:$0xff]
        %v451 = vld [vmem:[%s209 + $0x578] sm:$0xff]
        %v452 = vld [vmem:[%s209 + $0x580] sm:$0xff]
        %v453 = vld [vmem:[%s209 + $0x588] sm:$0xff]
        %v454 = vld [vmem:[%s209 + $0x590] sm:$0xff]
        %v455 = vld [vmem:[%s209 + $0x598] sm:$0xff]
        %v456 = vld [vmem:[%s209 + $0x5a0] sm:$0xff]
        %v457 = vld [vmem:[%s209 + $0x5a8] sm:$0xff]
        %v458 = vld [vmem:[%s209 + $0x5b0] sm:$0xff]
        %v459 = vld [vmem:[%s209 + $0x5b8] sm:$0xff]
        %v460 = vld [vmem:[%s209 + $0x5c0] sm:$0xff]
        %v461 = vld [vmem:[%s209 + $0x5c8] sm:$0xff]
        %v462 = vld [vmem:[%s209 + $0x5d0] sm:$0xff]
        %v463 = vld [vmem:[%s209 + $0x5d8] sm:$0xff]
        %v464 = vld [vmem:[%s209 + $0x5e0] sm:$0xff]
        %v465 = vld [vmem:[%s209 + $0x5e8] sm:$0xff]
        %v466 = vld [vmem:[%s209 + $0x5f0] sm:$0xff]
        %v467 = vld [vmem:[%s209 + $0x5f8] sm:$0xff]
        %v468 = vld [vmem:[%s209 + $0x600] sm:$0xff]
        %v469 = vld [vmem:[%s209 + $0x608] sm:$0xff]
        %v470 = vld [vmem:[%s209 + $0x610] sm:$0xff]
        %v471 = vld [vmem:[%s209 + $0x618] sm:$0xff]
        %v472 = vld [vmem:[%s209 + $0x620] sm:$0xff]
        %v473 = vld [vmem:[%s209 + $0x628] sm:$0xff]
        %v474 = vld [vmem:[%s209 + $0x630] sm:$0xff]
        %v475 = vld [vmem:[%s209 + $0x638] sm:$0xff]
        %v476 = vld [vmem:[%s209 + $0x640] sm:$0xff]
        %v477 = vld [vmem:[%s209 + $0x648] sm:$0xff]
        %v478 = vld [vmem:[%s209 + $0x650] sm:$0xff]
        %v479 = vld [vmem:[%s209 + $0x658] sm:$0xff]
        %v480 = vld [vmem:[%s209 + $0x660] sm:$0xff]
        %v481 = vld [vmem:[%s209 + $0x668] sm:$0xff]
        %v482 = vld [vmem:[%s209 + $0x670] sm:$0xff]
        %v483 = vld [vmem:[%s209 + $0x678] sm:$0xff]
        %v484 = vld [vmem:[%s209 + $0x680] sm:$0xff]
        %v485 = vld [vmem:[%s209 + $0x688] sm:$0xff]
        %v486 = vld [vmem:[%s209 + $0x690] sm:$0xff]
        %v487 = vld [vmem:[%s209 + $0x698] sm:$0xff]
        %v488 = vld [vmem:[%s209 + $0x6a0] sm:$0xff]
        %v489 = vld [vmem:[%s209 + $0x6a8] sm:$0xff]
        %v490 = vld [vmem:[%s209 + $0x6b0] sm:$0xff]
        %v491 = vld [vmem:[%s209 + $0x6b8] sm:$0xff]
        %v492 = vld [vmem:[%s209 + $0x6c0] sm:$0xff]
        %v493 = vld [vmem:[%s209 + $0x6c8] sm:$0xff]
        %v494 = vld [vmem:[%s209 + $0x6d0] sm:$0xff]
        %v495 = vld [vmem:[%s209 + $0x6d8] sm:$0xff]
        %v496 = vld [vmem:[%s209 + $0x6e0] sm:$0xff]
        %v497 = vld [vmem:[%s209 + $0x6e8] sm:$0xff]
        %v498 = vld [vmem:[%s209 + $0x6f0] sm:$0xff]
        %v499 = vld [vmem:[%s209 + $0x6f8] sm:$0xff]
        %v500 = vld [vmem:[%s209 + $0x700] sm:$0xff]
        %v501 = vld [vmem:[%s209 + $0x708] sm:$0xff]
        %v502 = vld [vmem:[%s209 + $0x710] sm:$0xff]
        %v503 = vld [vmem:[%s209 + $0x718] sm:$0xff]
        %v504 = vld [vmem:[%s209 + $0x720] sm:$0xff]
        %v505 = vld [vmem:[%s209 + $0x728] sm:$0xff]
        %v506 = vld [vmem:[%s209 + $0x730] sm:$0xff]
        %v507 = vld [vmem:[%s209 + $0x738] sm:$0xff]
        %v508 = vld [vmem:[%s209 + $0x740] sm:$0xff]
        %v509 = vld [vmem:[%s209 + $0x748] sm:$0xff]
        %v510 = vld [vmem:[%s209 + $0x750] sm:$0xff]
        %v511 = vld [vmem:[%s209 + $0x758] sm:$0xff]
        %v512 = vld [vmem:[%s209 + $0x760] sm:$0xff]
        %v513 = vld [vmem:[%s209 + $0x768] sm:$0xff]
        %v514 = vld [vmem:[%s209 + $0x770] sm:$0xff]
        %v515 = vld [vmem:[%s209 + $0x778] sm:$0xff]
        %v516 = vld [vmem:[%s209 + $0x780] sm:$0xff]
        %v517 = vld [vmem:[%s209 + $0x788] sm:$0xff]
        %v518 = vld [vmem:[%s209 + $0x790] sm:$0xff]
        %v519 = vld [vmem:[%s209 + $0x798] sm:$0xff]
        %v520 = vld [vmem:[%s209 + $0x7a0] sm:$0xff]
        %v521 = vld [vmem:[%s209 + $0x7a8] sm:$0xff]
        %v522 = vld [vmem:[%s209 + $0x7b0] sm:$0xff]
        %v523 = vld [vmem:[%s209 + $0x7b8] sm:$0xff]
        %v524 = vld [vmem:[%s209 + $0x7c0] sm:$0xff]
        %v525 = vld [vmem:[%s209 + $0x7c8] sm:$0xff]
        %v526 = vld [vmem:[%s209 + $0x7d0] sm:$0xff]
        %v527 = vld [vmem:[%s209 + $0x7d8] sm:$0xff]
        %v528 = vld [vmem:[%s209 + $0x7e0] sm:$0xff]
        %v529 = vld [vmem:[%s209 + $0x7e8] sm:$0xff]
        %v530 = vld [vmem:[%s209 + $0x7f0] sm:$0xff]
        %v531 = vld [vmem:[%s209 + $0x7f8] sm:$0xff]
        %v532 = vld [vmem:[%s209 + $0x800] sm:$0xff]
        %v533 = vld [vmem:[%s209 + $0x808] sm:$0xff]
        %v534 = vld [vmem:[%s209 + $0x810] sm:$0xff]
        %v535 = vld [vmem:[%s209 + $0x818] sm:$0xff]
        %v536 = vld [vmem:[%s209 + $0x820] sm:$0xff]
        %v537 = vld [vmem:[%s209 + $0x828] sm:$0xff]
        %v538 = vld [vmem:[%s209 + $0x830] sm:$0xff]
        %v539 = vld [vmem:[%s209 + $0x838] sm:$0xff]
        %v540 = vld [vmem:[%s209 + $0x840] sm:$0xff]
        %v541 = vld [vmem:[%s209 + $0x848] sm:$0xff]
        %v542 = vld [vmem:[%s209 + $0x850] sm:$0xff]
        %v543 = vld [vmem:[%s209 + $0x858] sm:$0xff]
        %v544 = vld [vmem:[%s209 + $0x860] sm:$0xff]
        %v545 = vld [vmem:[%s209 + $0x868] sm:$0xff]
        %v546 = vld [vmem:[%s209 + $0x870] sm:$0xff]
        %v547 = vld [vmem:[%s209 + $0x878] sm:$0xff]
        %v548 = vld [vmem:[%s209 + $0x880] sm:$0xff]
        %v549 = vld [vmem:[%s209 + $0x888] sm:$0xff]
        %v550 = vld [vmem:[%s209 + $0x890] sm:$0xff]
        %v551 = vld [vmem:[%s209 + $0x898] sm:$0xff]
        %v552 = vld [vmem:[%s209 + $0x8a0] sm:$0xff]
        %v553 = vld [vmem:[%s209 + $0x8a8] sm:$0xff]
        %v554 = vld [vmem:[%s209 + $0x8b0] sm:$0xff]
        %v555 = vld [vmem:[%s209 + $0x8b8] sm:$0xff]
        %v556 = vld [vmem:[%s209 + $0x8c0] sm:$0xff]
        %v557 = vld [vmem:[%s209 + $0x8c8] sm:$0xff]
        %v558 = vld [vmem:[%s209 + $0x8d0] sm:$0xff]
        %v559 = vld [vmem:[%s209 + $0x8d8] sm:$0xff]
        %v560 = vld [vmem:[%s209 + $0x8e0] sm:$0xff]
        %v561 = vld [vmem:[%s209 + $0x8e8] sm:$0xff]
        %v562 = vld [vmem:[%s209 + $0x8f0] sm:$0xff]
        %v563 = vld [vmem:[%s209 + $0x8f8] sm:$0xff]
        %v564 = vld [vmem:[%s209 + $0x900] sm:$0xff]
        %v565 = vld [vmem:[%s209 + $0x908] sm:$0xff]
        %v566 = vld [vmem:[%s209 + $0x910] sm:$0xff]
        %v567 = vld [vmem:[%s209 + $0x918] sm:$0xff]
        %v568 = vld [vmem:[%s209 + $0x920] sm:$0xff]
        %v569 = vld [vmem:[%s209 + $0x928] sm:$0xff]
        %v570 = vld [vmem:[%s209 + $0x930] sm:$0xff]
        %v571 = vld [vmem:[%s209 + $0x938] sm:$0xff]
        %v572 = vld [vmem:[%s209 + $0x940] sm:$0xff]
        %v573 = vld [vmem:[%s209 + $0x948] sm:$0xff]
        %v574 = vld [vmem:[%s209 + $0x950] sm:$0xff]
        %v575 = vld [vmem:[%s209 + $0x958] sm:$0xff]
        %v576 = vld [vmem:[%s209 + $0x960] sm:$0xff]
        %v577 = vld [vmem:[%s209 + $0x968] sm:$0xff]
        %v578 = vld [vmem:[%s209 + $0x970] sm:$0xff]
        %v579 = vld [vmem:[%s209 + $0x978] sm:$0xff]
        %v580 = vld [vmem:[%s209 + $0x980] sm:$0xff]
        %v581 = vld [vmem:[%s209 + $0x988] sm:$0xff]
        %v582 = vld [vmem:[%s209 + $0x990] sm:$0xff]
        %v583 = vld [vmem:[%s209 + $0x998] sm:$0xff]
        %v584 = vld [vmem:[%s209 + $0x9a0] sm:$0xff]
        %v585 = vld [vmem:[%s209 + $0x9a8] sm:$0xff]
        %v586 = vld [vmem:[%s209 + $0x9b0] sm:$0xff]
        %v587 = vld [vmem:[%s209 + $0x9b8] sm:$0xff]
        %v588 = vld [vmem:[%s209 + $0x9c0] sm:$0xff]
        %v589 = vld [vmem:[%s209 + $0x9c8] sm:$0xff]
        %v590 = vld [vmem:[%s209 + $0x9d0] sm:$0xff]
        %v591 = vld [vmem:[%s209 + $0x9d8] sm:$0xff]
        %v592 = vld [vmem:[%s209 + $0x9e0] sm:$0xff]
        %v593 = vld [vmem:[%s209 + $0x9e8] sm:$0xff]
        %v594 = vld [vmem:[%s209 + $0x9f0] sm:$0xff]
        %v595 = vld [vmem:[%s209 + $0x9f8] sm:$0xff]
        %v596 = vld [vmem:[%s209 + $0xa00] sm:$0xff]
        %v597 = vld [vmem:[%s209 + $0xa08] sm:$0xff]
        %v598 = vld [vmem:[%s209 + $0xa10] sm:$0xff]
        %v599 = vld [vmem:[%s209 + $0xa18] sm:$0xff]
        %v600 = vld [vmem:[%s209 + $0xa20] sm:$0xff]
        %v601 = vld [vmem:[%s209 + $0xa28] sm:$0xff]
        %v602 = vld [vmem:[%s209 + $0xa30] sm:$0xff]
        %v603 = vld [vmem:[%s209 + $0xa38] sm:$0xff]
        %v604 = vld [vmem:[%s209 + $0xa40] sm:$0xff]
        %v605 = vld [vmem:[%s209 + $0xa48] sm:$0xff]
        %v606 = vld [vmem:[%s209 + $0xa50] sm:$0xff]
        %v607 = vld [vmem:[%s209 + $0xa58] sm:$0xff]
        %v608 = vld [vmem:[%s209 + $0xa60] sm:$0xff]
        %v609 = vld [vmem:[%s209 + $0xa68] sm:$0xff]
        %v610 = vld [vmem:[%s209 + $0xa70] sm:$0xff]
        %v611 = vld [vmem:[%s209 + $0xa78] sm:$0xff]
        %v612 = vld [vmem:[%s209 + $0xa80] sm:$0xff]
        %v613 = vld [vmem:[%s209 + $0xa88] sm:$0xff]
        %v614 = vld [vmem:[%s209 + $0xa90] sm:$0xff]
        %v615 = vld [vmem:[%s209 + $0xa98] sm:$0xff]
        %v616 = vld [vmem:[%s209 + $0xaa0] sm:$0xff]
        %v617 = vld [vmem:[%s209 + $0xaa8] sm:$0xff]
        %v618 = vld [vmem:[%s209 + $0xab0] sm:$0xff]
        %v619 = vld [vmem:[%s209 + $0xab8] sm:$0xff]
        %v620 = vld [vmem:[%s209 + $0xac0] sm:$0xff]
        %v621 = vld [vmem:[%s209 + $0xac8] sm:$0xff]
        %v622 = vld [vmem:[%s209 + $0xad0] sm:$0xff]
        %v623 = vld [vmem:[%s209 + $0xad8] sm:$0xff]
        %v624 = vld [vmem:[%s209 + $0xae0] sm:$0xff]
        %v625 = vld [vmem:[%s209 + $0xae8] sm:$0xff]
        %v626 = vld [vmem:[%s209 + $0xaf0] sm:$0xff]
        %v627 = vld [vmem:[%s209 + $0xaf8] sm:$0xff]
        %v628 = vld [vmem:[%s209 + $0xb00] sm:$0xff]
        %v629 = vld [vmem:[%s209 + $0xb08] sm:$0xff]
        %v630 = vld [vmem:[%s209 + $0xb10] sm:$0xff]
        %v631 = vld [vmem:[%s209 + $0xb18] sm:$0xff]
        %v632 = vld [vmem:[%s209 + $0xb20] sm:$0xff]
        %v633 = vld [vmem:[%s209 + $0xb28] sm:$0xff]
        %v634 = vld [vmem:[%s209 + $0xb30] sm:$0xff]
        %v635 = vld [vmem:[%s209 + $0xb38] sm:$0xff]
        %v636 = vld [vmem:[%s209 + $0xb40] sm:$0xff]
        %v637 = vld [vmem:[%s209 + $0xb48] sm:$0xff]
        %v638 = vld [vmem:[%s209 + $0xb50] sm:$0xff]
        %v639 = vld [vmem:[%s209 + $0xb58] sm:$0xff]
        %v640 = vld [vmem:[%s209 + $0xb60] sm:$0xff]
        %v641 = vld [vmem:[%s209 + $0xb68] sm:$0xff]
        %v642 = vld [vmem:[%s209 + $0xb70] sm:$0xff]
        %v643 = vld [vmem:[%s209 + $0xb78] sm:$0xff]
        %v644 = vld [vmem:[%s209 + $0xb80] sm:$0xff]
        %v645 = vld [vmem:[%s209 + $0xb88] sm:$0xff]
        %v646 = vld [vmem:[%s209 + $0xb90] sm:$0xff]
        %v647 = vld [vmem:[%s209 + $0xb98] sm:$0xff]
        %v648 = vld [vmem:[%s209 + $0xba0] sm:$0xff]
        %v649 = vld [vmem:[%s209 + $0xba8] sm:$0xff]
        %v650 = vld [vmem:[%s209 + $0xbb0] sm:$0xff]
        %v651 = vld [vmem:[%s209 + $0xbb8] sm:$0xff]
        %v652 = vld [vmem:[%s209 + $0xbc0] sm:$0xff]
        %v653 = vld [vmem:[%s209 + $0xbc8] sm:$0xff]
        %v654 = vld [vmem:[%s209 + $0xbd0] sm:$0xff]
        %v655 = vld [vmem:[%s209 + $0xbd8] sm:$0xff]
        %v656 = vld [vmem:[%s209 + $0xbe0] sm:$0xff]
        %v657 = vld [vmem:[%s209 + $0xbe8] sm:$0xff]
        %v658 = vld [vmem:[%s209 + $0xbf0] sm:$0xff]
        %v659 = vld [vmem:[%s209 + $0xbf8] sm:$0xff]
        %v660 = vld [vmem:[%s209 + $0xc00] sm:$0xff]
        %v661 = vld [vmem:[%s209 + $0xc08] sm:$0xff]
        %v662 = vld [vmem:[%s209 + $0xc10] sm:$0xff]
        %v663 = vld [vmem:[%s209 + $0xc18] sm:$0xff]
        %v664 = vld [vmem:[%s209 + $0xc20] sm:$0xff]
        %v665 = vld [vmem:[%s209 + $0xc28] sm:$0xff]
        %v666 = vld [vmem:[%s209 + $0xc30] sm:$0xff]
        %v667 = vld [vmem:[%s209 + $0xc38] sm:$0xff]
        %v668 = vld [vmem:[%s209 + $0xc40] sm:$0xff]
        %v669 = vld [vmem:[%s209 + $0xc48] sm:$0xff]
        %v670 = vld [vmem:[%s209 + $0xc50] sm:$0xff]
        %v671 = vld [vmem:[%s209 + $0xc58] sm:$0xff]
        %v672 = vld [vmem:[%s209 + $0xc60] sm:$0xff]
        %v673 = vld [vmem:[%s209 + $0xc68] sm:$0xff]
        %v674 = vld [vmem:[%s209 + $0xc70] sm:$0xff]
        %v675 = vld [vmem:[%s209 + $0xc78] sm:$0xff]
        %v676 = vld [vmem:[%s209 + $0xc80] sm:$0xff]
        %v677 = vld [vmem:[%s209 + $0xc88] sm:$0xff]
        %v678 = vld [vmem:[%s209 + $0xc90] sm:$0xff]
        %v679 = vld [vmem:[%s209 + $0xc98] sm:$0xff]
        %v680 = vld [vmem:[%s209 + $0xca0] sm:$0xff]
        %v681 = vld [vmem:[%s209 + $0xca8] sm:$0xff]
        %v682 = vld [vmem:[%s209 + $0xcb0] sm:$0xff]
        %v683 = vld [vmem:[%s209 + $0xcb8] sm:$0xff]
        %v684 = vld [vmem:[%s209 + $0xcc0] sm:$0xff]
        %v685 = vld [vmem:[%s209 + $0xcc8] sm:$0xff]
        %v686 = vld [vmem:[%s209 + $0xcd0] sm:$0xff]
        %v687 = vld [vmem:[%s209 + $0xcd8] sm:$0xff]
        %v688 = vld [vmem:[%s209 + $0xce0] sm:$0xff]
        %v689 = vld [vmem:[%s209 + $0xce8] sm:$0xff]
        %v690 = vld [vmem:[%s209 + $0xcf0] sm:$0xff]
        %v691 = vld [vmem:[%s209 + $0xcf8] sm:$0xff]
        %v692 = vld [vmem:[%s209 + $0xd00] sm:$0xff]
        %v693 = vld [vmem:[%s209 + $0xd08] sm:$0xff]
        %v694 = vld [vmem:[%s209 + $0xd10] sm:$0xff]
        %v695 = vld [vmem:[%s209 + $0xd18] sm:$0xff]
        %v696 = vld [vmem:[%s209 + $0xd20] sm:$0xff]
        %v697 = vld [vmem:[%s209 + $0xd28] sm:$0xff]
        %v698 = vld [vmem:[%s209 + $0xd30] sm:$0xff]
        %v699 = vld [vmem:[%s209 + $0xd38] sm:$0xff]
        %v700 = vld [vmem:[%s209 + $0xd40] sm:$0xff]
        %v701 = vld [vmem:[%s209 + $0xd48] sm:$0xff]
        %v702 = vld [vmem:[%s209 + $0xd50] sm:$0xff]
        %v703 = vld [vmem:[%s209 + $0xd58] sm:$0xff]
        %v704 = vld [vmem:[%s209 + $0xd60] sm:$0xff]
        %v705 = vld [vmem:[%s209 + $0xd68] sm:$0xff]
        %v706 = vld [vmem:[%s209 + $0xd70] sm:$0xff]
        %v707 = vld [vmem:[%s209 + $0xd78] sm:$0xff]
        %v708 = vld [vmem:[%s209 + $0xd80] sm:$0xff]
        %v709 = vld [vmem:[%s209 + $0xd88] sm:$0xff]
        %v710 = vld [vmem:[%s209 + $0xd90] sm:$0xff]
        %v711 = vld [vmem:[%s209 + $0xd98] sm:$0xff]
        %v712 = vld [vmem:[%s209 + $0xda0] sm:$0xff]
        %v713 = vld [vmem:[%s209 + $0xda8] sm:$0xff]
        %v714 = vld [vmem:[%s209 + $0xdb0] sm:$0xff]
        %v715 = vld [vmem:[%s209 + $0xdb8] sm:$0xff]
        %v716 = vld [vmem:[%s209 + $0xdc0] sm:$0xff]
        %v717 = vld [vmem:[%s209 + $0xdc8] sm:$0xff]
        %v718 = vld [vmem:[%s209 + $0xdd0] sm:$0xff]
        %v719 = vld [vmem:[%s209 + $0xdd8] sm:$0xff]
        %v720 = vld [vmem:[%s209 + $0xde0] sm:$0xff]
        %v721 = vld [vmem:[%s209 + $0xde8] sm:$0xff]
        %v722 = vld [vmem:[%s209 + $0xdf0] sm:$0xff]
        %v723 = vld [vmem:[%s209 + $0xdf8] sm:$0xff]
        %v724 = vld [vmem:[%s209 + $0xe00] sm:$0xff]
        %v725 = vld [vmem:[%s209 + $0xe08] sm:$0xff]
        %v726 = vld [vmem:[%s209 + $0xe10] sm:$0xff]
        %v727 = vld [vmem:[%s209 + $0xe18] sm:$0xff]
        %v728 = vld [vmem:[%s209 + $0xe20] sm:$0xff]
        %v729 = vld [vmem:[%s209 + $0xe28] sm:$0xff]
        %v730 = vld [vmem:[%s209 + $0xe30] sm:$0xff]
        %v731 = vld [vmem:[%s209 + $0xe38] sm:$0xff]
        %v732 = vld [vmem:[%s209 + $0xe40] sm:$0xff]
        %v733 = vld [vmem:[%s209 + $0xe48] sm:$0xff]
        %v734 = vld [vmem:[%s209 + $0xe50] sm:$0xff]
        %v735 = vld [vmem:[%s209 + $0xe58] sm:$0xff]
        %v736 = vld [vmem:[%s209 + $0xe60] sm:$0xff]
        %v737 = vld [vmem:[%s209 + $0xe68] sm:$0xff]
        %v738 = vld [vmem:[%s209 + $0xe70] sm:$0xff]
        %v739 = vld [vmem:[%s209 + $0xe78] sm:$0xff]
        %v740 = vld [vmem:[%s209 + $0xe80] sm:$0xff]
        %v741 = vld [vmem:[%s209 + $0xe88] sm:$0xff]
        %v742 = vld [vmem:[%s209 + $0xe90] sm:$0xff]
        %v743 = vld [vmem:[%s209 + $0xe98] sm:$0xff]
        %v744 = vld [vmem:[%s209 + $0xea0] sm:$0xff]
        %v745 = vld [vmem:[%s209 + $0xea8] sm:$0xff]
        %v746 = vld [vmem:[%s209 + $0xeb0] sm:$0xff]
        %v747 = vld [vmem:[%s209 + $0xeb8] sm:$0xff]
        %v748 = vld [vmem:[%s209 + $0xec0] sm:$0xff]
        %v749 = vld [vmem:[%s209 + $0xec8] sm:$0xff]
        %v750 = vld [vmem:[%s209 + $0xed0] sm:$0xff]
        %v751 = vld [vmem:[%s209 + $0xed8] sm:$0xff]
        %v752 = vld [vmem:[%s209 + $0xee0] sm:$0xff]
        %v753 = vld [vmem:[%s209 + $0xee8] sm:$0xff]
        %v754 = vld [vmem:[%s209 + $0xef0] sm:$0xff]
        %v755 = vld [vmem:[%s209 + $0xef8] sm:$0xff]
        %v756 = vld [vmem:[%s209 + $0xf00] sm:$0xff]
        %v757 = vld [vmem:[%s209 + $0xf08] sm:$0xff]
        %v758 = vld [vmem:[%s209 + $0xf10] sm:$0xff]
        %v759 = vld [vmem:[%s209 + $0xf18] sm:$0xff]
        %v760 = vld [vmem:[%s209 + $0xf20] sm:$0xff]
        %v761 = vld [vmem:[%s209 + $0xf28] sm:$0xff]
        %v762 = vld [vmem:[%s209 + $0xf30] sm:$0xff]
        %v763 = vld [vmem:[%s209 + $0xf38] sm:$0xff]
        %v764 = vld [vmem:[%s209 + $0xf40] sm:$0xff]
        %v765 = vld [vmem:[%s209 + $0xf48] sm:$0xff]
        %v766 = vld [vmem:[%s209 + $0xf50] sm:$0xff]
        %v767 = vld [vmem:[%s209 + $0xf58] sm:$0xff]
        %v768 = vld [vmem:[%s209 + $0xf60] sm:$0xff]
        %v769 = vld [vmem:[%s209 + $0xf68] sm:$0xff]
        %v770 = vld [vmem:[%s209 + $0xf70] sm:$0xff]
        %v771 = vld [vmem:[%s209 + $0xf78] sm:$0xff]
        %v772 = vld [vmem:[%s209 + $0xf80] sm:$0xff]
        %v773 = vld [vmem:[%s209 + $0xf88] sm:$0xff]
        %v774 = vld [vmem:[%s209 + $0xf90] sm:$0xff]
        %v775 = vld [vmem:[%s209 + $0xf98] sm:$0xff]
        %v776 = vld [vmem:[%s209 + $0xfa0] sm:$0xff]
        %v777 = vld [vmem:[%s209 + $0xfa8] sm:$0xff]
        %v778 = vld [vmem:[%s209 + $0xfb0] sm:$0xff]
        %v779 = vld [vmem:[%s209 + $0xfb8] sm:$0xff]
        %v780 = vld [vmem:[%s209 + $0xfc0] sm:$0xff]
        %v781 = vld [vmem:[%s209 + $0xfc8] sm:$0xff]
        %v782 = vld [vmem:[%s209 + $0xfd0] sm:$0xff]
        %v783 = vld [vmem:[%s209 + $0xfd8] sm:$0xff]
        %v784 = vld [vmem:[%s209 + $0xfe0] sm:$0xff]
        %v785 = vld [vmem:[%s209 + $0xfe8] sm:$0xff]
        %v786 = vld [vmem:[%s209 + $0xff0] sm:$0xff]
        %v787 = vld [vmem:[%s209 + $0xff8] sm:$0xff]
        %v788 = vld [vmem:[%s219] sm:$0xff]
        %v790 = vperm.slane %v788, 0
        %v791 = vperm.slane %v788, 1
        %v792 = vperm.slane %v788, 2
        %v793 = vperm.slane %v788, 3
        %v794 = vperm.slane %v788, 4
        %v795 = vperm.slane %v788, 5
        %v796 = vperm.slane %v788, 6
        %v797 = vperm.slane %v788, 7
        %v810 = vunpack.c.l.b16 %v272
        %v811 = vunpack.c.h.b16 %v272
        %v812 = vunpack.c.l.b16 %v273
        %v813 = vunpack.c.h.b16 %v273
        %v814 = vunpack.c.l.b16 %v274
        %v815 = vunpack.c.h.b16 %v274
        %v816 = vunpack.c.l.b16 %v275
        %v817 = vunpack.c.h.b16 %v275
        %v818 = vpack.c.b16 %v810, %v810
        %v819 = vpack.c.b16 %v811, %v811
        %v820 = vpack.c.b16 %v812, %v812
        %v821 = vpack.c.b16 %v813, %v813
        %v822 = vpack.c.b16 %v814, %v814
        %v823 = vpack.c.b16 %v815, %v815
        %v824 = vpack.c.b16 %v816, %v816
        %v825 = vpack.c.b16 %v817, %v817
        %v1346 = vunpack.c.l.b16 %v276
        %v1347 = vunpack.c.h.b16 %v276
        %v1348 = vunpack.c.l.b16 %v277
        %v1349 = vunpack.c.h.b16 %v277
        %v1350 = vunpack.c.l.b16 %v278
        %v1351 = vunpack.c.h.b16 %v278
        %v1352 = vunpack.c.l.b16 %v279
        %v1353 = vunpack.c.h.b16 %v279
        %v1354 = vunpack.c.l.b16 %v280
        %v1355 = vunpack.c.h.b16 %v280
        %v1356 = vunpack.c.l.b16 %v281
        %v1357 = vunpack.c.h.b16 %v281
        %v1358 = vunpack.c.l.b16 %v282
        %v1359 = vunpack.c.h.b16 %v282
        %v1360 = vunpack.c.l.b16 %v283
        %v1361 = vunpack.c.h.b16 %v283
        %v1362 = vunpack.c.l.b16 %v284
        %v1363 = vunpack.c.h.b16 %v284
        %v1364 = vunpack.c.l.b16 %v285
        %v1365 = vunpack.c.h.b16 %v285
        %v1366 = vunpack.c.l.b16 %v286
        %v1367 = vunpack.c.h.b16 %v286
        %v1368 = vunpack.c.l.b16 %v287
        %v1369 = vunpack.c.h.b16 %v287
        %v1370 = vunpack.c.l.b16 %v288
        %v1371 = vunpack.c.h.b16 %v288
        %v1372 = vunpack.c.l.b16 %v289
        %v1373 = vunpack.c.h.b16 %v289
        %v1374 = vunpack.c.l.b16 %v290
        %v1375 = vunpack.c.h.b16 %v290
        %v1376 = vunpack.c.l.b16 %v291
        %v1377 = vunpack.c.h.b16 %v291
        %v1378 = vunpack.c.l.b16 %v292
        %v1379 = vunpack.c.h.b16 %v292
        %v1380 = vunpack.c.l.b16 %v293
        %v1381 = vunpack.c.h.b16 %v293
        %v1382 = vunpack.c.l.b16 %v294
        %v1383 = vunpack.c.h.b16 %v294
        %v1384 = vunpack.c.l.b16 %v295
        %v1385 = vunpack.c.h.b16 %v295
        %v1386 = vunpack.c.l.b16 %v296
        %v1387 = vunpack.c.h.b16 %v296
        %v1388 = vunpack.c.l.b16 %v297
        %v1389 = vunpack.c.h.b16 %v297
        %v1390 = vunpack.c.l.b16 %v298
        %v1391 = vunpack.c.h.b16 %v298
        %v1392 = vunpack.c.l.b16 %v299
        %v1393 = vunpack.c.h.b16 %v299
        %v1394 = vunpack.c.l.b16 %v300
        %v1395 = vunpack.c.h.b16 %v300
        %v1396 = vunpack.c.l.b16 %v301
        %v1397 = vunpack.c.h.b16 %v301
        %v1398 = vunpack.c.l.b16 %v302
        %v1399 = vunpack.c.h.b16 %v302
        %v1400 = vunpack.c.l.b16 %v303
        %v1401 = vunpack.c.h.b16 %v303
        %v1402 = vunpack.c.l.b16 %v304
        %v1403 = vunpack.c.h.b16 %v304
        %v1404 = vunpack.c.l.b16 %v305
        %v1405 = vunpack.c.h.b16 %v305
        %v1406 = vunpack.c.l.b16 %v306
        %v1407 = vunpack.c.h.b16 %v306
        %v1408 = vunpack.c.l.b16 %v307
        %v1409 = vunpack.c.h.b16 %v307
        %v1410 = vunpack.c.l.b16 %v308
        %v1411 = vunpack.c.h.b16 %v308
        %v1412 = vunpack.c.l.b16 %v309
        %v1413 = vunpack.c.h.b16 %v309
        %v1414 = vunpack.c.l.b16 %v310
        %v1415 = vunpack.c.h.b16 %v310
        %v1416 = vunpack.c.l.b16 %v311
        %v1417 = vunpack.c.h.b16 %v311
        %v1418 = vunpack.c.l.b16 %v312
        %v1419 = vunpack.c.h.b16 %v312
        %v1420 = vunpack.c.l.b16 %v313
        %v1421 = vunpack.c.h.b16 %v313
        %v1422 = vunpack.c.l.b16 %v314
        %v1423 = vunpack.c.h.b16 %v314
        %v1424 = vunpack.c.l.b16 %v315
        %v1425 = vunpack.c.h.b16 %v315
        %v1426 = vunpack.c.l.b16 %v316
        %v1427 = vunpack.c.h.b16 %v316
        %v1428 = vunpack.c.l.b16 %v317
        %v1429 = vunpack.c.h.b16 %v317
        %v1430 = vunpack.c.l.b16 %v318
        %v1431 = vunpack.c.h.b16 %v318
        %v1432 = vunpack.c.l.b16 %v319
        %v1433 = vunpack.c.h.b16 %v319
        %v1434 = vunpack.c.l.b16 %v320
        %v1435 = vunpack.c.h.b16 %v320
        %v1436 = vunpack.c.l.b16 %v321
        %v1437 = vunpack.c.h.b16 %v321
        %v1438 = vunpack.c.l.b16 %v322
        %v1439 = vunpack.c.h.b16 %v322
        %v1440 = vunpack.c.l.b16 %v323
        %v1441 = vunpack.c.h.b16 %v323
        %v1442 = vunpack.c.l.b16 %v324
        %v1443 = vunpack.c.h.b16 %v324
        %v1444 = vunpack.c.l.b16 %v325
        %v1445 = vunpack.c.h.b16 %v325
        %v1446 = vunpack.c.l.b16 %v326
        %v1447 = vunpack.c.h.b16 %v326
        %v1448 = vunpack.c.l.b16 %v327
        %v1449 = vunpack.c.h.b16 %v327
        %v1450 = vunpack.c.l.b16 %v328
        %v1451 = vunpack.c.h.b16 %v328
        %v1452 = vunpack.c.l.b16 %v329
        %v1453 = vunpack.c.h.b16 %v329
        %v1454 = vunpack.c.l.b16 %v330
        %v1455 = vunpack.c.h.b16 %v330
        %v1456 = vunpack.c.l.b16 %v331
        %v1457 = vunpack.c.h.b16 %v331
        %v1458 = vunpack.c.l.b16 %v332
        %v1459 = vunpack.c.h.b16 %v332
        %v1460 = vunpack.c.l.b16 %v333
        %v1461 = vunpack.c.h.b16 %v333
        %v1462 = vunpack.c.l.b16 %v334
        %v1463 = vunpack.c.h.b16 %v334
        %v1464 = vunpack.c.l.b16 %v335
        %v1465 = vunpack.c.h.b16 %v335
        %v1466 = vunpack.c.l.b16 %v336
        %v1467 = vunpack.c.h.b16 %v336
        %v1468 = vunpack.c.l.b16 %v337
        %v1469 = vunpack.c.h.b16 %v337
        %v1470 = vunpack.c.l.b16 %v338
        %v1471 = vunpack.c.h.b16 %v338
        %v1472 = vunpack.c.l.b16 %v339
        %v1473 = vunpack.c.h.b16 %v339
        %v1474 = vunpack.c.l.b16 %v340
        %v1475 = vunpack.c.h.b16 %v340
        %v1476 = vunpack.c.l.b16 %v341
        %v1477 = vunpack.c.h.b16 %v341
        %v1478 = vunpack.c.l.b16 %v342
        %v1479 = vunpack.c.h.b16 %v342
        %v1480 = vunpack.c.l.b16 %v343
        %v1481 = vunpack.c.h.b16 %v343
        %v1482 = vunpack.c.l.b16 %v344
        %v1483 = vunpack.c.h.b16 %v344
        %v1484 = vunpack.c.l.b16 %v345
        %v1485 = vunpack.c.h.b16 %v345
        %v1486 = vunpack.c.l.b16 %v346
        %v1487 = vunpack.c.h.b16 %v346
        %v1488 = vunpack.c.l.b16 %v347
        %v1489 = vunpack.c.h.b16 %v347
        %v1490 = vunpack.c.l.b16 %v348
        %v1491 = vunpack.c.h.b16 %v348
        %v1492 = vunpack.c.l.b16 %v349
        %v1493 = vunpack.c.h.b16 %v349
        %v1494 = vunpack.c.l.b16 %v350
        %v1495 = vunpack.c.h.b16 %v350
        %v1496 = vunpack.c.l.b16 %v351
        %v1497 = vunpack.c.h.b16 %v351
        %v1498 = vunpack.c.l.b16 %v352
        %v1499 = vunpack.c.h.b16 %v352
        %v1500 = vunpack.c.l.b16 %v353
        %v1501 = vunpack.c.h.b16 %v353
        %v1502 = vunpack.c.l.b16 %v354
        %v1503 = vunpack.c.h.b16 %v354
        %v1504 = vunpack.c.l.b16 %v355
        %v1505 = vunpack.c.h.b16 %v355
        %v1506 = vunpack.c.l.b16 %v356
        %v1507 = vunpack.c.h.b16 %v356
        %v1508 = vunpack.c.l.b16 %v357
        %v1509 = vunpack.c.h.b16 %v357
        %v1510 = vunpack.c.l.b16 %v358
        %v1511 = vunpack.c.h.b16 %v358
        %v1512 = vunpack.c.l.b16 %v359
        %v1513 = vunpack.c.h.b16 %v359
        %v1514 = vunpack.c.l.b16 %v360
        %v1515 = vunpack.c.h.b16 %v360
        %v1516 = vunpack.c.l.b16 %v361
        %v1517 = vunpack.c.h.b16 %v361
        %v1518 = vunpack.c.l.b16 %v362
        %v1519 = vunpack.c.h.b16 %v362
        %v1520 = vunpack.c.l.b16 %v363
        %v1521 = vunpack.c.h.b16 %v363
        %v1522 = vunpack.c.l.b16 %v364
        %v1523 = vunpack.c.h.b16 %v364
        %v1524 = vunpack.c.l.b16 %v365
        %v1525 = vunpack.c.h.b16 %v365
        %v1526 = vunpack.c.l.b16 %v366
        %v1527 = vunpack.c.h.b16 %v366
        %v1528 = vunpack.c.l.b16 %v367
        %v1529 = vunpack.c.h.b16 %v367
        %v1530 = vunpack.c.l.b16 %v368
        %v1531 = vunpack.c.h.b16 %v368
        %v1532 = vunpack.c.l.b16 %v369
        %v1533 = vunpack.c.h.b16 %v369
        %v1534 = vunpack.c.l.b16 %v370
        %v1535 = vunpack.c.h.b16 %v370
        %v1536 = vunpack.c.l.b16 %v371
        %v1537 = vunpack.c.h.b16 %v371
        %v1538 = vunpack.c.l.b16 %v372
        %v1539 = vunpack.c.h.b16 %v372
        %v1540 = vunpack.c.l.b16 %v373
        %v1541 = vunpack.c.h.b16 %v373
        %v1542 = vunpack.c.l.b16 %v374
        %v1543 = vunpack.c.h.b16 %v374
        %v1544 = vunpack.c.l.b16 %v375
        %v1545 = vunpack.c.h.b16 %v375
        %v1546 = vunpack.c.l.b16 %v376
        %v1547 = vunpack.c.h.b16 %v376
        %v1548 = vunpack.c.l.b16 %v377
        %v1549 = vunpack.c.h.b16 %v377
        %v1550 = vunpack.c.l.b16 %v378
        %v1551 = vunpack.c.h.b16 %v378
        %v1552 = vunpack.c.l.b16 %v379
        %v1553 = vunpack.c.h.b16 %v379
        %v1554 = vunpack.c.l.b16 %v380
        %v1555 = vunpack.c.h.b16 %v380
        %v1556 = vunpack.c.l.b16 %v381
        %v1557 = vunpack.c.h.b16 %v381
        %v1558 = vunpack.c.l.b16 %v382
        %v1559 = vunpack.c.h.b16 %v382
        %v1560 = vunpack.c.l.b16 %v383
        %v1561 = vunpack.c.h.b16 %v383
        %v1562 = vunpack.c.l.b16 %v384
        %v1563 = vunpack.c.h.b16 %v384
        %v1564 = vunpack.c.l.b16 %v385
        %v1565 = vunpack.c.h.b16 %v385
        %v1566 = vunpack.c.l.b16 %v386
        %v1567 = vunpack.c.h.b16 %v386
        %v1568 = vunpack.c.l.b16 %v387
        %v1569 = vunpack.c.h.b16 %v387
        %v1570 = vunpack.c.l.b16 %v388
        %v1571 = vunpack.c.h.b16 %v388
        %v1572 = vunpack.c.l.b16 %v389
        %v1573 = vunpack.c.h.b16 %v389
        %v1574 = vunpack.c.l.b16 %v390
        %v1575 = vunpack.c.h.b16 %v390
        %v1576 = vunpack.c.l.b16 %v391
        %v1577 = vunpack.c.h.b16 %v391
        %v1578 = vunpack.c.l.b16 %v392
        %v1579 = vunpack.c.h.b16 %v392
        %v1580 = vunpack.c.l.b16 %v393
        %v1581 = vunpack.c.h.b16 %v393
        %v1582 = vunpack.c.l.b16 %v394
        %v1583 = vunpack.c.h.b16 %v394
        %v1584 = vunpack.c.l.b16 %v395
        %v1585 = vunpack.c.h.b16 %v395
        %v1586 = vunpack.c.l.b16 %v396
        %v1587 = vunpack.c.h.b16 %v396
        %v1588 = vunpack.c.l.b16 %v397
        %v1589 = vunpack.c.h.b16 %v397
        %v1590 = vunpack.c.l.b16 %v398
        %v1591 = vunpack.c.h.b16 %v398
        %v1592 = vunpack.c.l.b16 %v399
        %v1593 = vunpack.c.h.b16 %v399
        %v1594 = vunpack.c.l.b16 %v400
        %v1595 = vunpack.c.h.b16 %v400
        %v1596 = vunpack.c.l.b16 %v401
        %v1597 = vunpack.c.h.b16 %v401
        %v1598 = vunpack.c.l.b16 %v402
        %v1599 = vunpack.c.h.b16 %v402
        %v1600 = vunpack.c.l.b16 %v403
        %v1601 = vunpack.c.h.b16 %v403
        %v1602 = vunpack.c.l.b16 %v404
        %v1603 = vunpack.c.h.b16 %v404
        %v1604 = vunpack.c.l.b16 %v405
        %v1605 = vunpack.c.h.b16 %v405
        %v1606 = vunpack.c.l.b16 %v406
        %v1607 = vunpack.c.h.b16 %v406
        %v1608 = vunpack.c.l.b16 %v407
        %v1609 = vunpack.c.h.b16 %v407
        %v1610 = vunpack.c.l.b16 %v408
        %v1611 = vunpack.c.h.b16 %v408
        %v1612 = vunpack.c.l.b16 %v409
        %v1613 = vunpack.c.h.b16 %v409
        %v1614 = vunpack.c.l.b16 %v410
        %v1615 = vunpack.c.h.b16 %v410
        %v1616 = vunpack.c.l.b16 %v411
        %v1617 = vunpack.c.h.b16 %v411
        %v1618 = vunpack.c.l.b16 %v412
        %v1619 = vunpack.c.h.b16 %v412
        %v1620 = vunpack.c.l.b16 %v413
        %v1621 = vunpack.c.h.b16 %v413
        %v1622 = vunpack.c.l.b16 %v414
        %v1623 = vunpack.c.h.b16 %v414
        %v1624 = vunpack.c.l.b16 %v415
        %v1625 = vunpack.c.h.b16 %v415
        %v1626 = vunpack.c.l.b16 %v416
        %v1627 = vunpack.c.h.b16 %v416
        %v1628 = vunpack.c.l.b16 %v417
        %v1629 = vunpack.c.h.b16 %v417
        %v1630 = vunpack.c.l.b16 %v418
        %v1631 = vunpack.c.h.b16 %v418
        %v1632 = vunpack.c.l.b16 %v419
        %v1633 = vunpack.c.h.b16 %v419
        %v1634 = vunpack.c.l.b16 %v420
        %v1635 = vunpack.c.h.b16 %v420
        %v1636 = vunpack.c.l.b16 %v421
        %v1637 = vunpack.c.h.b16 %v421
        %v1638 = vunpack.c.l.b16 %v422
        %v1639 = vunpack.c.h.b16 %v422
        %v1640 = vunpack.c.l.b16 %v423
        %v1641 = vunpack.c.h.b16 %v423
        %v1642 = vunpack.c.l.b16 %v424
        %v1643 = vunpack.c.h.b16 %v424
        %v1644 = vunpack.c.l.b16 %v425
        %v1645 = vunpack.c.h.b16 %v425
        %v1646 = vunpack.c.l.b16 %v426
        %v1647 = vunpack.c.h.b16 %v426
        %v1648 = vunpack.c.l.b16 %v427
        %v1649 = vunpack.c.h.b16 %v427
        %v1650 = vunpack.c.l.b16 %v428
        %v1651 = vunpack.c.h.b16 %v428
        %v1652 = vunpack.c.l.b16 %v429
        %v1653 = vunpack.c.h.b16 %v429
        %v1654 = vunpack.c.l.b16 %v430
        %v1655 = vunpack.c.h.b16 %v430
        %v1656 = vunpack.c.l.b16 %v431
        %v1657 = vunpack.c.h.b16 %v431
        %v1658 = vunpack.c.l.b16 %v432
        %v1659 = vunpack.c.h.b16 %v432
        %v1660 = vunpack.c.l.b16 %v433
        %v1661 = vunpack.c.h.b16 %v433
        %v1662 = vunpack.c.l.b16 %v434
        %v1663 = vunpack.c.h.b16 %v434
        %v1664 = vunpack.c.l.b16 %v435
        %v1665 = vunpack.c.h.b16 %v435
        %v1666 = vunpack.c.l.b16 %v436
        %v1667 = vunpack.c.h.b16 %v436
        %v1668 = vunpack.c.l.b16 %v437
        %v1669 = vunpack.c.h.b16 %v437
        %v1670 = vunpack.c.l.b16 %v438
        %v1671 = vunpack.c.h.b16 %v438
        %v1672 = vunpack.c.l.b16 %v439
        %v1673 = vunpack.c.h.b16 %v439
        %v1674 = vunpack.c.l.b16 %v440
        %v1675 = vunpack.c.h.b16 %v440
        %v1676 = vunpack.c.l.b16 %v441
        %v1677 = vunpack.c.h.b16 %v441
        %v1678 = vunpack.c.l.b16 %v442
        %v1679 = vunpack.c.h.b16 %v442
        %v1680 = vunpack.c.l.b16 %v443
        %v1681 = vunpack.c.h.b16 %v443
        %v1682 = vunpack.c.l.b16 %v444
        %v1683 = vunpack.c.h.b16 %v444
        %v1684 = vunpack.c.l.b16 %v445
        %v1685 = vunpack.c.h.b16 %v445
        %v1686 = vunpack.c.l.b16 %v446
        %v1687 = vunpack.c.h.b16 %v446
        %v1688 = vunpack.c.l.b16 %v447
        %v1689 = vunpack.c.h.b16 %v447
        %v1690 = vunpack.c.l.b16 %v448
        %v1691 = vunpack.c.h.b16 %v448
        %v1692 = vunpack.c.l.b16 %v449
        %v1693 = vunpack.c.h.b16 %v449
        %v1694 = vunpack.c.l.b16 %v450
        %v1695 = vunpack.c.h.b16 %v450
        %v1696 = vunpack.c.l.b16 %v451
        %v1697 = vunpack.c.h.b16 %v451
        %v1698 = vunpack.c.l.b16 %v452
        %v1699 = vunpack.c.h.b16 %v452
        %v1700 = vunpack.c.l.b16 %v453
        %v1701 = vunpack.c.h.b16 %v453
        %v1702 = vunpack.c.l.b16 %v454
        %v1703 = vunpack.c.h.b16 %v454
        %v1704 = vunpack.c.l.b16 %v455
        %v1705 = vunpack.c.h.b16 %v455
        %v1706 = vunpack.c.l.b16 %v456
        %v1707 = vunpack.c.h.b16 %v456
        %v1708 = vunpack.c.l.b16 %v457
        %v1709 = vunpack.c.h.b16 %v457
        %v1710 = vunpack.c.l.b16 %v458
        %v1711 = vunpack.c.h.b16 %v458
        %v1712 = vunpack.c.l.b16 %v459
        %v1713 = vunpack.c.h.b16 %v459
        %v1714 = vunpack.c.l.b16 %v460
        %v1715 = vunpack.c.h.b16 %v460
        %v1716 = vunpack.c.l.b16 %v461
        %v1717 = vunpack.c.h.b16 %v461
        %v1718 = vunpack.c.l.b16 %v462
        %v1719 = vunpack.c.h.b16 %v462
        %v1720 = vunpack.c.l.b16 %v463
        %v1721 = vunpack.c.h.b16 %v463
        %v1722 = vunpack.c.l.b16 %v464
        %v1723 = vunpack.c.h.b16 %v464
        %v1724 = vunpack.c.l.b16 %v465
        %v1725 = vunpack.c.h.b16 %v465
        %v1726 = vunpack.c.l.b16 %v466
        %v1727 = vunpack.c.h.b16 %v466
        %v1728 = vunpack.c.l.b16 %v467
        %v1729 = vunpack.c.h.b16 %v467
        %v1730 = vunpack.c.l.b16 %v468
        %v1731 = vunpack.c.h.b16 %v468
        %v1732 = vunpack.c.l.b16 %v469
        %v1733 = vunpack.c.h.b16 %v469
        %v1734 = vunpack.c.l.b16 %v470
        %v1735 = vunpack.c.h.b16 %v470
        %v1736 = vunpack.c.l.b16 %v471
        %v1737 = vunpack.c.h.b16 %v471
        %v1738 = vunpack.c.l.b16 %v472
        %v1739 = vunpack.c.h.b16 %v472
        %v1740 = vunpack.c.l.b16 %v473
        %v1741 = vunpack.c.h.b16 %v473
        %v1742 = vunpack.c.l.b16 %v474
        %v1743 = vunpack.c.h.b16 %v474
        %v1744 = vunpack.c.l.b16 %v475
        %v1745 = vunpack.c.h.b16 %v475
        %v1746 = vunpack.c.l.b16 %v476
        %v1747 = vunpack.c.h.b16 %v476
        %v1748 = vunpack.c.l.b16 %v477
        %v1749 = vunpack.c.h.b16 %v477
        %v1750 = vunpack.c.l.b16 %v478
        %v1751 = vunpack.c.h.b16 %v478
        %v1752 = vunpack.c.l.b16 %v479
        %v1753 = vunpack.c.h.b16 %v479
        %v1754 = vunpack.c.l.b16 %v480
        %v1755 = vunpack.c.h.b16 %v480
        %v1756 = vunpack.c.l.b16 %v481
        %v1757 = vunpack.c.h.b16 %v481
        %v1758 = vunpack.c.l.b16 %v482
        %v1759 = vunpack.c.h.b16 %v482
        %v1760 = vunpack.c.l.b16 %v483
        %v1761 = vunpack.c.h.b16 %v483
        %v1762 = vunpack.c.l.b16 %v484
        %v1763 = vunpack.c.h.b16 %v484
        %v1764 = vunpack.c.l.b16 %v485
        %v1765 = vunpack.c.h.b16 %v485
        %v1766 = vunpack.c.l.b16 %v486
        %v1767 = vunpack.c.h.b16 %v486
        %v1768 = vunpack.c.l.b16 %v487
        %v1769 = vunpack.c.h.b16 %v487
        %v1770 = vunpack.c.l.b16 %v488
        %v1771 = vunpack.c.h.b16 %v488
        %v1772 = vunpack.c.l.b16 %v489
        %v1773 = vunpack.c.h.b16 %v489
        %v1774 = vunpack.c.l.b16 %v490
        %v1775 = vunpack.c.h.b16 %v490
        %v1776 = vunpack.c.l.b16 %v491
        %v1777 = vunpack.c.h.b16 %v491
        %v1778 = vunpack.c.l.b16 %v492
        %v1779 = vunpack.c.h.b16 %v492
        %v1780 = vunpack.c.l.b16 %v493
        %v1781 = vunpack.c.h.b16 %v493
        %v1782 = vunpack.c.l.b16 %v494
        %v1783 = vunpack.c.h.b16 %v494
        %v1784 = vunpack.c.l.b16 %v495
        %v1785 = vunpack.c.h.b16 %v495
        %v1786 = vunpack.c.l.b16 %v496
        %v1787 = vunpack.c.h.b16 %v496
        %v1788 = vunpack.c.l.b16 %v497
        %v1789 = vunpack.c.h.b16 %v497
        %v1790 = vunpack.c.l.b16 %v498
        %v1791 = vunpack.c.h.b16 %v498
        %v1792 = vunpack.c.l.b16 %v499
        %v1793 = vunpack.c.h.b16 %v499
        %v1794 = vunpack.c.l.b16 %v500
        %v1795 = vunpack.c.h.b16 %v500
        %v1796 = vunpack.c.l.b16 %v501
        %v1797 = vunpack.c.h.b16 %v501
        %v1798 = vunpack.c.l.b16 %v502
        %v1799 = vunpack.c.h.b16 %v502
        %v1800 = vunpack.c.l.b16 %v503
        %v1801 = vunpack.c.h.b16 %v503
        %v1802 = vunpack.c.l.b16 %v504
        %v1803 = vunpack.c.h.b16 %v504
        %v1804 = vunpack.c.l.b16 %v505
        %v1805 = vunpack.c.h.b16 %v505
        %v1806 = vunpack.c.l.b16 %v506
        %v1807 = vunpack.c.h.b16 %v506
        %v1808 = vunpack.c.l.b16 %v507
        %v1809 = vunpack.c.h.b16 %v507
        %v1810 = vunpack.c.l.b16 %v508
        %v1811 = vunpack.c.h.b16 %v508
        %v1812 = vunpack.c.l.b16 %v509
        %v1813 = vunpack.c.h.b16 %v509
        %v1814 = vunpack.c.l.b16 %v510
        %v1815 = vunpack.c.h.b16 %v510
        %v1816 = vunpack.c.l.b16 %v511
        %v1817 = vunpack.c.h.b16 %v511
        %v1818 = vunpack.c.l.b16 %v512
        %v1819 = vunpack.c.h.b16 %v512
        %v1820 = vunpack.c.l.b16 %v513
        %v1821 = vunpack.c.h.b16 %v513
        %v1822 = vunpack.c.l.b16 %v514
        %v1823 = vunpack.c.h.b16 %v514
        %v1824 = vunpack.c.l.b16 %v515
        %v1825 = vunpack.c.h.b16 %v515
        %v1826 = vunpack.c.l.b16 %v516
        %v1827 = vunpack.c.h.b16 %v516
        %v1828 = vunpack.c.l.b16 %v517
        %v1829 = vunpack.c.h.b16 %v517
        %v1830 = vunpack.c.l.b16 %v518
        %v1831 = vunpack.c.h.b16 %v518
        %v1832 = vunpack.c.l.b16 %v519
        %v1833 = vunpack.c.h.b16 %v519
        %v1834 = vunpack.c.l.b16 %v520
        %v1835 = vunpack.c.h.b16 %v520
        %v1836 = vunpack.c.l.b16 %v521
        %v1837 = vunpack.c.h.b16 %v521
        %v1838 = vunpack.c.l.b16 %v522
        %v1839 = vunpack.c.h.b16 %v522
        %v1840 = vunpack.c.l.b16 %v523
        %v1841 = vunpack.c.h.b16 %v523
        %v1842 = vunpack.c.l.b16 %v524
        %v1843 = vunpack.c.h.b16 %v524
        %v1844 = vunpack.c.l.b16 %v525
        %v1845 = vunpack.c.h.b16 %v525
        %v1846 = vunpack.c.l.b16 %v526
        %v1847 = vunpack.c.h.b16 %v526
        %v1848 = vunpack.c.l.b16 %v527
        %v1849 = vunpack.c.h.b16 %v527
        %v1850 = vunpack.c.l.b16 %v528
        %v1851 = vunpack.c.h.b16 %v528
        %v1852 = vunpack.c.l.b16 %v529
        %v1853 = vunpack.c.h.b16 %v529
        %v1854 = vunpack.c.l.b16 %v530
        %v1855 = vunpack.c.h.b16 %v530
        %v1856 = vunpack.c.l.b16 %v531
        %v1857 = vunpack.c.h.b16 %v531
        %v1858 = vunpack.c.l.b16 %v532
        %v1859 = vunpack.c.h.b16 %v532
        %v1860 = vunpack.c.l.b16 %v533
        %v1861 = vunpack.c.h.b16 %v533
        %v1862 = vunpack.c.l.b16 %v534
        %v1863 = vunpack.c.h.b16 %v534
        %v1864 = vunpack.c.l.b16 %v535
        %v1865 = vunpack.c.h.b16 %v535
        %v1866 = vunpack.c.l.b16 %v536
        %v1867 = vunpack.c.h.b16 %v536
        %v1868 = vunpack.c.l.b16 %v537
        %v1869 = vunpack.c.h.b16 %v537
        %v1870 = vunpack.c.l.b16 %v538
        %v1871 = vunpack.c.h.b16 %v538
        %v1872 = vunpack.c.l.b16 %v539
        %v1873 = vunpack.c.h.b16 %v539
        %v1874 = vunpack.c.l.b16 %v540
        %v1875 = vunpack.c.h.b16 %v540
        %v1876 = vunpack.c.l.b16 %v541
        %v1877 = vunpack.c.h.b16 %v541
        %v1878 = vunpack.c.l.b16 %v542
        %v1879 = vunpack.c.h.b16 %v542
        %v1880 = vunpack.c.l.b16 %v543
        %v1881 = vunpack.c.h.b16 %v543
        %v1882 = vunpack.c.l.b16 %v544
        %v1883 = vunpack.c.h.b16 %v544
        %v1884 = vunpack.c.l.b16 %v545
        %v1885 = vunpack.c.h.b16 %v545
        %v1886 = vunpack.c.l.b16 %v546
        %v1887 = vunpack.c.h.b16 %v546
        %v1888 = vunpack.c.l.b16 %v547
        %v1889 = vunpack.c.h.b16 %v547
        %v1890 = vunpack.c.l.b16 %v548
        %v1891 = vunpack.c.h.b16 %v548
        %v1892 = vunpack.c.l.b16 %v549
        %v1893 = vunpack.c.h.b16 %v549
        %v1894 = vunpack.c.l.b16 %v550
        %v1895 = vunpack.c.h.b16 %v550
        %v1896 = vunpack.c.l.b16 %v551
        %v1897 = vunpack.c.h.b16 %v551
        %v1898 = vunpack.c.l.b16 %v552
        %v1899 = vunpack.c.h.b16 %v552
        %v1900 = vunpack.c.l.b16 %v553
        %v1901 = vunpack.c.h.b16 %v553
        %v1902 = vunpack.c.l.b16 %v554
        %v1903 = vunpack.c.h.b16 %v554
        %v1904 = vunpack.c.l.b16 %v555
        %v1905 = vunpack.c.h.b16 %v555
        %v1906 = vunpack.c.l.b16 %v556
        %v1907 = vunpack.c.h.b16 %v556
        %v1908 = vunpack.c.l.b16 %v557
        %v1909 = vunpack.c.h.b16 %v557
        %v1910 = vunpack.c.l.b16 %v558
        %v1911 = vunpack.c.h.b16 %v558
        %v1912 = vunpack.c.l.b16 %v559
        %v1913 = vunpack.c.h.b16 %v559
        %v1914 = vunpack.c.l.b16 %v560
        %v1915 = vunpack.c.h.b16 %v560
        %v1916 = vunpack.c.l.b16 %v561
        %v1917 = vunpack.c.h.b16 %v561
        %v1918 = vunpack.c.l.b16 %v562
        %v1919 = vunpack.c.h.b16 %v562
        %v1920 = vunpack.c.l.b16 %v563
        %v1921 = vunpack.c.h.b16 %v563
        %v1922 = vunpack.c.l.b16 %v564
        %v1923 = vunpack.c.h.b16 %v564
        %v1924 = vunpack.c.l.b16 %v565
        %v1925 = vunpack.c.h.b16 %v565
        %v1926 = vunpack.c.l.b16 %v566
        %v1927 = vunpack.c.h.b16 %v566
        %v1928 = vunpack.c.l.b16 %v567
        %v1929 = vunpack.c.h.b16 %v567
        %v1930 = vunpack.c.l.b16 %v568
        %v1931 = vunpack.c.h.b16 %v568
        %v1932 = vunpack.c.l.b16 %v569
        %v1933 = vunpack.c.h.b16 %v569
        %v1934 = vunpack.c.l.b16 %v570
        %v1935 = vunpack.c.h.b16 %v570
        %v1936 = vunpack.c.l.b16 %v571
        %v1937 = vunpack.c.h.b16 %v571
        %v1938 = vunpack.c.l.b16 %v572
        %v1939 = vunpack.c.h.b16 %v572
        %v1940 = vunpack.c.l.b16 %v573
        %v1941 = vunpack.c.h.b16 %v573
        %v1942 = vunpack.c.l.b16 %v574
        %v1943 = vunpack.c.h.b16 %v574
        %v1944 = vunpack.c.l.b16 %v575
        %v1945 = vunpack.c.h.b16 %v575
        %v1946 = vunpack.c.l.b16 %v576
        %v1947 = vunpack.c.h.b16 %v576
        %v1948 = vunpack.c.l.b16 %v577
        %v1949 = vunpack.c.h.b16 %v577
        %v1950 = vunpack.c.l.b16 %v578
        %v1951 = vunpack.c.h.b16 %v578
        %v1952 = vunpack.c.l.b16 %v579
        %v1953 = vunpack.c.h.b16 %v579
        %v1954 = vunpack.c.l.b16 %v580
        %v1955 = vunpack.c.h.b16 %v580
        %v1956 = vunpack.c.l.b16 %v581
        %v1957 = vunpack.c.h.b16 %v581
        %v1958 = vunpack.c.l.b16 %v582
        %v1959 = vunpack.c.h.b16 %v582
        %v1960 = vunpack.c.l.b16 %v583
        %v1961 = vunpack.c.h.b16 %v583
        %v1962 = vunpack.c.l.b16 %v584
        %v1963 = vunpack.c.h.b16 %v584
        %v1964 = vunpack.c.l.b16 %v585
        %v1965 = vunpack.c.h.b16 %v585
        %v1966 = vunpack.c.l.b16 %v586
        %v1967 = vunpack.c.h.b16 %v586
        %v1968 = vunpack.c.l.b16 %v587
        %v1969 = vunpack.c.h.b16 %v587
        %v1970 = vunpack.c.l.b16 %v588
        %v1971 = vunpack.c.h.b16 %v588
        %v1972 = vunpack.c.l.b16 %v589
        %v1973 = vunpack.c.h.b16 %v589
        %v1974 = vunpack.c.l.b16 %v590
        %v1975 = vunpack.c.h.b16 %v590
        %v1976 = vunpack.c.l.b16 %v591
        %v1977 = vunpack.c.h.b16 %v591
        %v1978 = vunpack.c.l.b16 %v592
        %v1979 = vunpack.c.h.b16 %v592
        %v1980 = vunpack.c.l.b16 %v593
        %v1981 = vunpack.c.h.b16 %v593
        %v1982 = vunpack.c.l.b16 %v594
        %v1983 = vunpack.c.h.b16 %v594
        %v1984 = vunpack.c.l.b16 %v595
        %v1985 = vunpack.c.h.b16 %v595
        %v1986 = vunpack.c.l.b16 %v596
        %v1987 = vunpack.c.h.b16 %v596
        %v1988 = vunpack.c.l.b16 %v597
        %v1989 = vunpack.c.h.b16 %v597
        %v1990 = vunpack.c.l.b16 %v598
        %v1991 = vunpack.c.h.b16 %v598
        %v1992 = vunpack.c.l.b16 %v599
        %v1993 = vunpack.c.h.b16 %v599
        %v1994 = vunpack.c.l.b16 %v600
        %v1995 = vunpack.c.h.b16 %v600
        %v1996 = vunpack.c.l.b16 %v601
        %v1997 = vunpack.c.h.b16 %v601
        %v1998 = vunpack.c.l.b16 %v602
        %v1999 = vunpack.c.h.b16 %v602
        %v2000 = vunpack.c.l.b16 %v603
        %v2001 = vunpack.c.h.b16 %v603
        %v2002 = vunpack.c.l.b16 %v604
        %v2003 = vunpack.c.h.b16 %v604
        %v2004 = vunpack.c.l.b16 %v605
        %v2005 = vunpack.c.h.b16 %v605
        %v2006 = vunpack.c.l.b16 %v606
        %v2007 = vunpack.c.h.b16 %v606
        %v2008 = vunpack.c.l.b16 %v607
        %v2009 = vunpack.c.h.b16 %v607
        %v2010 = vunpack.c.l.b16 %v608
        %v2011 = vunpack.c.h.b16 %v608
        %v2012 = vunpack.c.l.b16 %v609
        %v2013 = vunpack.c.h.b16 %v609
        %v2014 = vunpack.c.l.b16 %v610
        %v2015 = vunpack.c.h.b16 %v610
        %v2016 = vunpack.c.l.b16 %v611
        %v2017 = vunpack.c.h.b16 %v611
        %v2018 = vunpack.c.l.b16 %v612
        %v2019 = vunpack.c.h.b16 %v612
        %v2020 = vunpack.c.l.b16 %v613
        %v2021 = vunpack.c.h.b16 %v613
        %v2022 = vunpack.c.l.b16 %v614
        %v2023 = vunpack.c.h.b16 %v614
        %v2024 = vunpack.c.l.b16 %v615
        %v2025 = vunpack.c.h.b16 %v615
        %v2026 = vunpack.c.l.b16 %v616
        %v2027 = vunpack.c.h.b16 %v616
        %v2028 = vunpack.c.l.b16 %v617
        %v2029 = vunpack.c.h.b16 %v617
        %v2030 = vunpack.c.l.b16 %v618
        %v2031 = vunpack.c.h.b16 %v618
        %v2032 = vunpack.c.l.b16 %v619
        %v2033 = vunpack.c.h.b16 %v619
        %v2034 = vunpack.c.l.b16 %v620
        %v2035 = vunpack.c.h.b16 %v620
        %v2036 = vunpack.c.l.b16 %v621
        %v2037 = vunpack.c.h.b16 %v621
        %v2038 = vunpack.c.l.b16 %v622
        %v2039 = vunpack.c.h.b16 %v622
        %v2040 = vunpack.c.l.b16 %v623
        %v2041 = vunpack.c.h.b16 %v623
        %v2042 = vunpack.c.l.b16 %v624
        %v2043 = vunpack.c.h.b16 %v624
        %v2044 = vunpack.c.l.b16 %v625
        %v2045 = vunpack.c.h.b16 %v625
        %v2046 = vunpack.c.l.b16 %v626
        %v2047 = vunpack.c.h.b16 %v626
        %v2048 = vunpack.c.l.b16 %v627
        %v2049 = vunpack.c.h.b16 %v627
        %v2050 = vunpack.c.l.b16 %v628
        %v2051 = vunpack.c.h.b16 %v628
        %v2052 = vunpack.c.l.b16 %v629
        %v2053 = vunpack.c.h.b16 %v629
        %v2054 = vunpack.c.l.b16 %v630
        %v2055 = vunpack.c.h.b16 %v630
        %v2056 = vunpack.c.l.b16 %v631
        %v2057 = vunpack.c.h.b16 %v631
        %v2058 = vunpack.c.l.b16 %v632
        %v2059 = vunpack.c.h.b16 %v632
        %v2060 = vunpack.c.l.b16 %v633
        %v2061 = vunpack.c.h.b16 %v633
        %v2062 = vunpack.c.l.b16 %v634
        %v2063 = vunpack.c.h.b16 %v634
        %v2064 = vunpack.c.l.b16 %v635
        %v2065 = vunpack.c.h.b16 %v635
        %v2066 = vunpack.c.l.b16 %v636
        %v2067 = vunpack.c.h.b16 %v636
        %v2068 = vunpack.c.l.b16 %v637
        %v2069 = vunpack.c.h.b16 %v637
        %v2070 = vunpack.c.l.b16 %v638
        %v2071 = vunpack.c.h.b16 %v638
        %v2072 = vunpack.c.l.b16 %v639
        %v2073 = vunpack.c.h.b16 %v639
        %v2074 = vunpack.c.l.b16 %v640
        %v2075 = vunpack.c.h.b16 %v640
        %v2076 = vunpack.c.l.b16 %v641
        %v2077 = vunpack.c.h.b16 %v641
        %v2078 = vunpack.c.l.b16 %v642
        %v2079 = vunpack.c.h.b16 %v642
        %v2080 = vunpack.c.l.b16 %v643
        %v2081 = vunpack.c.h.b16 %v643
        %v2082 = vunpack.c.l.b16 %v644
        %v2083 = vunpack.c.h.b16 %v644
        %v2084 = vunpack.c.l.b16 %v645
        %v2085 = vunpack.c.h.b16 %v645
        %v2086 = vunpack.c.l.b16 %v646
        %v2087 = vunpack.c.h.b16 %v646
        %v2088 = vunpack.c.l.b16 %v647
        %v2089 = vunpack.c.h.b16 %v647
        %v2090 = vunpack.c.l.b16 %v648
        %v2091 = vunpack.c.h.b16 %v648
        %v2092 = vunpack.c.l.b16 %v649
        %v2093 = vunpack.c.h.b16 %v649
        %v2094 = vunpack.c.l.b16 %v650
        %v2095 = vunpack.c.h.b16 %v650
        %v2096 = vunpack.c.l.b16 %v651
        %v2097 = vunpack.c.h.b16 %v651
        %v2098 = vunpack.c.l.b16 %v652
        %v2099 = vunpack.c.h.b16 %v652
        %v2100 = vunpack.c.l.b16 %v653
        %v2101 = vunpack.c.h.b16 %v653
        %v2102 = vunpack.c.l.b16 %v654
        %v2103 = vunpack.c.h.b16 %v654
        %v2104 = vunpack.c.l.b16 %v655
        %v2105 = vunpack.c.h.b16 %v655
        %v2106 = vunpack.c.l.b16 %v656
        %v2107 = vunpack.c.h.b16 %v656
        %v2108 = vunpack.c.l.b16 %v657
        %v2109 = vunpack.c.h.b16 %v657
        %v2110 = vunpack.c.l.b16 %v658
        %v2111 = vunpack.c.h.b16 %v658
        %v2112 = vunpack.c.l.b16 %v659
        %v2113 = vunpack.c.h.b16 %v659
        %v2114 = vunpack.c.l.b16 %v660
        %v2115 = vunpack.c.h.b16 %v660
        %v2116 = vunpack.c.l.b16 %v661
        %v2117 = vunpack.c.h.b16 %v661
        %v2118 = vunpack.c.l.b16 %v662
        %v2119 = vunpack.c.h.b16 %v662
        %v2120 = vunpack.c.l.b16 %v663
        %v2121 = vunpack.c.h.b16 %v663
        %v2122 = vunpack.c.l.b16 %v664
        %v2123 = vunpack.c.h.b16 %v664
        %v2124 = vunpack.c.l.b16 %v665
        %v2125 = vunpack.c.h.b16 %v665
        %v2126 = vunpack.c.l.b16 %v666
        %v2127 = vunpack.c.h.b16 %v666
        %v2128 = vunpack.c.l.b16 %v667
        %v2129 = vunpack.c.h.b16 %v667
        %v2130 = vunpack.c.l.b16 %v668
        %v2131 = vunpack.c.h.b16 %v668
        %v2132 = vunpack.c.l.b16 %v669
        %v2133 = vunpack.c.h.b16 %v669
        %v2134 = vunpack.c.l.b16 %v670
        %v2135 = vunpack.c.h.b16 %v670
        %v2136 = vunpack.c.l.b16 %v671
        %v2137 = vunpack.c.h.b16 %v671
        %v2138 = vunpack.c.l.b16 %v672
        %v2139 = vunpack.c.h.b16 %v672
        %v2140 = vunpack.c.l.b16 %v673
        %v2141 = vunpack.c.h.b16 %v673
        %v2142 = vunpack.c.l.b16 %v674
        %v2143 = vunpack.c.h.b16 %v674
        %v2144 = vunpack.c.l.b16 %v675
        %v2145 = vunpack.c.h.b16 %v675
        %v2146 = vunpack.c.l.b16 %v676
        %v2147 = vunpack.c.h.b16 %v676
        %v2148 = vunpack.c.l.b16 %v677
        %v2149 = vunpack.c.h.b16 %v677
        %v2150 = vunpack.c.l.b16 %v678
        %v2151 = vunpack.c.h.b16 %v678
        %v2152 = vunpack.c.l.b16 %v679
        %v2153 = vunpack.c.h.b16 %v679
        %v2154 = vunpack.c.l.b16 %v680
        %v2155 = vunpack.c.h.b16 %v680
        %v2156 = vunpack.c.l.b16 %v681
        %v2157 = vunpack.c.h.b16 %v681
        %v2158 = vunpack.c.l.b16 %v682
        %v2159 = vunpack.c.h.b16 %v682
        %v2160 = vunpack.c.l.b16 %v683
        %v2161 = vunpack.c.h.b16 %v683
        %v2162 = vunpack.c.l.b16 %v684
        %v2163 = vunpack.c.h.b16 %v684
        %v2164 = vunpack.c.l.b16 %v685
        %v2165 = vunpack.c.h.b16 %v685
        %v2166 = vunpack.c.l.b16 %v686
        %v2167 = vunpack.c.h.b16 %v686
        %v2168 = vunpack.c.l.b16 %v687
        %v2169 = vunpack.c.h.b16 %v687
        %v2170 = vunpack.c.l.b16 %v688
        %v2171 = vunpack.c.h.b16 %v688
        %v2172 = vunpack.c.l.b16 %v689
        %v2173 = vunpack.c.h.b16 %v689
        %v2174 = vunpack.c.l.b16 %v690
        %v2175 = vunpack.c.h.b16 %v690
        %v2176 = vunpack.c.l.b16 %v691
        %v2177 = vunpack.c.h.b16 %v691
        %v2178 = vunpack.c.l.b16 %v692
        %v2179 = vunpack.c.h.b16 %v692
        %v2180 = vunpack.c.l.b16 %v693
        %v2181 = vunpack.c.h.b16 %v693
        %v2182 = vunpack.c.l.b16 %v694
        %v2183 = vunpack.c.h.b16 %v694
        %v2184 = vunpack.c.l.b16 %v695
        %v2185 = vunpack.c.h.b16 %v695
        %v2186 = vunpack.c.l.b16 %v696
        %v2187 = vunpack.c.h.b16 %v696
        %v2188 = vunpack.c.l.b16 %v697
        %v2189 = vunpack.c.h.b16 %v697
        %v2190 = vunpack.c.l.b16 %v698
        %v2191 = vunpack.c.h.b16 %v698
        %v2192 = vunpack.c.l.b16 %v699
        %v2193 = vunpack.c.h.b16 %v699
        %v2194 = vunpack.c.l.b16 %v700
        %v2195 = vunpack.c.h.b16 %v700
        %v2196 = vunpack.c.l.b16 %v701
        %v2197 = vunpack.c.h.b16 %v701
        %v2198 = vunpack.c.l.b16 %v702
        %v2199 = vunpack.c.h.b16 %v702
        %v2200 = vunpack.c.l.b16 %v703
        %v2201 = vunpack.c.h.b16 %v703
        %v2202 = vunpack.c.l.b16 %v704
        %v2203 = vunpack.c.h.b16 %v704
        %v2204 = vunpack.c.l.b16 %v705
        %v2205 = vunpack.c.h.b16 %v705
        %v2206 = vunpack.c.l.b16 %v706
        %v2207 = vunpack.c.h.b16 %v706
        %v2208 = vunpack.c.l.b16 %v707
        %v2209 = vunpack.c.h.b16 %v707
        %v2210 = vunpack.c.l.b16 %v708
        %v2211 = vunpack.c.h.b16 %v708
        %v2212 = vunpack.c.l.b16 %v709
        %v2213 = vunpack.c.h.b16 %v709
        %v2214 = vunpack.c.l.b16 %v710
        %v2215 = vunpack.c.h.b16 %v710
        %v2216 = vunpack.c.l.b16 %v711
        %v2217 = vunpack.c.h.b16 %v711
        %v2218 = vunpack.c.l.b16 %v712
        %v2219 = vunpack.c.h.b16 %v712
        %v2220 = vunpack.c.l.b16 %v713
        %v2221 = vunpack.c.h.b16 %v713
        %v2222 = vunpack.c.l.b16 %v714
        %v2223 = vunpack.c.h.b16 %v714
        %v2224 = vunpack.c.l.b16 %v715
        %v2225 = vunpack.c.h.b16 %v715
        %v2226 = vunpack.c.l.b16 %v716
        %v2227 = vunpack.c.h.b16 %v716
        %v2228 = vunpack.c.l.b16 %v717
        %v2229 = vunpack.c.h.b16 %v717
        %v2230 = vunpack.c.l.b16 %v718
        %v2231 = vunpack.c.h.b16 %v718
        %v2232 = vunpack.c.l.b16 %v719
        %v2233 = vunpack.c.h.b16 %v719
        %v2234 = vunpack.c.l.b16 %v720
        %v2235 = vunpack.c.h.b16 %v720
        %v2236 = vunpack.c.l.b16 %v721
        %v2237 = vunpack.c.h.b16 %v721
        %v2238 = vunpack.c.l.b16 %v722
        %v2239 = vunpack.c.h.b16 %v722
        %v2240 = vunpack.c.l.b16 %v723
        %v2241 = vunpack.c.h.b16 %v723
        %v2242 = vunpack.c.l.b16 %v724
        %v2243 = vunpack.c.h.b16 %v724
        %v2244 = vunpack.c.l.b16 %v725
        %v2245 = vunpack.c.h.b16 %v725
        %v2246 = vunpack.c.l.b16 %v726
        %v2247 = vunpack.c.h.b16 %v726
        %v2248 = vunpack.c.l.b16 %v727
        %v2249 = vunpack.c.h.b16 %v727
        %v2250 = vunpack.c.l.b16 %v728
        %v2251 = vunpack.c.h.b16 %v728
        %v2252 = vunpack.c.l.b16 %v729
        %v2253 = vunpack.c.h.b16 %v729
        %v2254 = vunpack.c.l.b16 %v730
        %v2255 = vunpack.c.h.b16 %v730
        %v2256 = vunpack.c.l.b16 %v731
        %v2257 = vunpack.c.h.b16 %v731
        %v2258 = vunpack.c.l.b16 %v732
        %v2259 = vunpack.c.h.b16 %v732
        %v2260 = vunpack.c.l.b16 %v733
        %v2261 = vunpack.c.h.b16 %v733
        %v2262 = vunpack.c.l.b16 %v734
        %v2263 = vunpack.c.h.b16 %v734
        %v2264 = vunpack.c.l.b16 %v735
        %v2265 = vunpack.c.h.b16 %v735
        %v2266 = vunpack.c.l.b16 %v736
        %v2267 = vunpack.c.h.b16 %v736
        %v2268 = vunpack.c.l.b16 %v737
        %v2269 = vunpack.c.h.b16 %v737
        %v2270 = vunpack.c.l.b16 %v738
        %v2271 = vunpack.c.h.b16 %v738
        %v2272 = vunpack.c.l.b16 %v739
        %v2273 = vunpack.c.h.b16 %v739
        %v2274 = vunpack.c.l.b16 %v740
        %v2275 = vunpack.c.h.b16 %v740
        %v2276 = vunpack.c.l.b16 %v741
        %v2277 = vunpack.c.h.b16 %v741
        %v2278 = vunpack.c.l.b16 %v742
        %v2279 = vunpack.c.h.b16 %v742
        %v2280 = vunpack.c.l.b16 %v743
        %v2281 = vunpack.c.h.b16 %v743
        %v2282 = vunpack.c.l.b16 %v744
        %v2283 = vunpack.c.h.b16 %v744
        %v2284 = vunpack.c.l.b16 %v745
        %v2285 = vunpack.c.h.b16 %v745
        %v2286 = vunpack.c.l.b16 %v746
        %v2287 = vunpack.c.h.b16 %v746
        %v2288 = vunpack.c.l.b16 %v747
        %v2289 = vunpack.c.h.b16 %v747
        %v2290 = vunpack.c.l.b16 %v748
        %v2291 = vunpack.c.h.b16 %v748
        %v2292 = vunpack.c.l.b16 %v749
        %v2293 = vunpack.c.h.b16 %v749
        %v2294 = vunpack.c.l.b16 %v750
        %v2295 = vunpack.c.h.b16 %v750
        %v2296 = vunpack.c.l.b16 %v751
        %v2297 = vunpack.c.h.b16 %v751
        %v2298 = vunpack.c.l.b16 %v752
        %v2299 = vunpack.c.h.b16 %v752
        %v2300 = vunpack.c.l.b16 %v753
        %v2301 = vunpack.c.h.b16 %v753
        %v2302 = vunpack.c.l.b16 %v754
        %v2303 = vunpack.c.h.b16 %v754
        %v2304 = vunpack.c.l.b16 %v755
        %v2305 = vunpack.c.h.b16 %v755
        %v2306 = vunpack.c.l.b16 %v756
        %v2307 = vunpack.c.h.b16 %v756
        %v2308 = vunpack.c.l.b16 %v757
        %v2309 = vunpack.c.h.b16 %v757
        %v2310 = vunpack.c.l.b16 %v758
        %v2311 = vunpack.c.h.b16 %v758
        %v2312 = vunpack.c.l.b16 %v759
        %v2313 = vunpack.c.h.b16 %v759
        %v2314 = vunpack.c.l.b16 %v760
        %v2315 = vunpack.c.h.b16 %v760
        %v2316 = vunpack.c.l.b16 %v761
        %v2317 = vunpack.c.h.b16 %v761
        %v2318 = vunpack.c.l.b16 %v762
        %v2319 = vunpack.c.h.b16 %v762
        %v2320 = vunpack.c.l.b16 %v763
        %v2321 = vunpack.c.h.b16 %v763
        %v2322 = vunpack.c.l.b16 %v764
        %v2323 = vunpack.c.h.b16 %v764
        %v2324 = vunpack.c.l.b16 %v765
        %v2325 = vunpack.c.h.b16 %v765
        %v2326 = vunpack.c.l.b16 %v766
        %v2327 = vunpack.c.h.b16 %v766
        %v2328 = vunpack.c.l.b16 %v767
        %v2329 = vunpack.c.h.b16 %v767
        %v2330 = vunpack.c.l.b16 %v768
        %v2331 = vunpack.c.h.b16 %v768
        %v2332 = vunpack.c.l.b16 %v769
        %v2333 = vunpack.c.h.b16 %v769
        %v2334 = vunpack.c.l.b16 %v770
        %v2335 = vunpack.c.h.b16 %v770
        %v2336 = vunpack.c.l.b16 %v771
        %v2337 = vunpack.c.h.b16 %v771
        %v2338 = vunpack.c.l.b16 %v772
        %v2339 = vunpack.c.h.b16 %v772
        %v2340 = vunpack.c.l.b16 %v773
        %v2341 = vunpack.c.h.b16 %v773
        %v2342 = vunpack.c.l.b16 %v774
        %v2343 = vunpack.c.h.b16 %v774
        %v2344 = vunpack.c.l.b16 %v775
        %v2345 = vunpack.c.h.b16 %v775
        %v2346 = vunpack.c.l.b16 %v776
        %v2347 = vunpack.c.h.b16 %v776
        %v2348 = vunpack.c.l.b16 %v777
        %v2349 = vunpack.c.h.b16 %v777
        %v2350 = vunpack.c.l.b16 %v778
        %v2351 = vunpack.c.h.b16 %v778
        %v2352 = vunpack.c.l.b16 %v779
        %v2353 = vunpack.c.h.b16 %v779
        %v2354 = vunpack.c.l.b16 %v780
        %v2355 = vunpack.c.h.b16 %v780
        %v2356 = vunpack.c.l.b16 %v781
        %v2357 = vunpack.c.h.b16 %v781
        %v2358 = vunpack.c.l.b16 %v782
        %v2359 = vunpack.c.h.b16 %v782
        %v2360 = vunpack.c.l.b16 %v783
        %v2361 = vunpack.c.h.b16 %v783
        %v2362 = vunpack.c.l.b16 %v784
        %v2363 = vunpack.c.h.b16 %v784
        %v2364 = vunpack.c.l.b16 %v785
        %v2365 = vunpack.c.h.b16 %v785
        %v2366 = vunpack.c.l.b16 %v786
        %v2367 = vunpack.c.h.b16 %v786
        %v2368 = vunpack.c.l.b16 %v787
        %v2369 = vunpack.c.h.b16 %v787
        %v2370 = vpack.c.b16 %v1354, %v1346
        %v2371 = vpack.c.b16 %v1355, %v1347
        %v2372 = vpack.c.b16 %v1356, %v1348
        %v2373 = vpack.c.b16 %v1357, %v1349
        %v2374 = vpack.c.b16 %v1358, %v1350
        %v2375 = vpack.c.b16 %v1359, %v1351
        %v2376 = vpack.c.b16 %v1360, %v1352
        %v2377 = vpack.c.b16 %v1361, %v1353
        %v2378 = vpack.c.b16 %v1370, %v1362
        %v2379 = vpack.c.b16 %v1371, %v1363
        %v2380 = vpack.c.b16 %v1372, %v1364
        %v2381 = vpack.c.b16 %v1373, %v1365
        %v2382 = vpack.c.b16 %v1374, %v1366
        %v2383 = vpack.c.b16 %v1375, %v1367
        %v2384 = vpack.c.b16 %v1376, %v1368
        %v2385 = vpack.c.b16 %v1377, %v1369
        %v2386 = vpack.c.b16 %v1386, %v1378
        %v2387 = vpack.c.b16 %v1387, %v1379
        %v2388 = vpack.c.b16 %v1388, %v1380
        %v2389 = vpack.c.b16 %v1389, %v1381
        %v2390 = vpack.c.b16 %v1390, %v1382
        %v2391 = vpack.c.b16 %v1391, %v1383
        %v2392 = vpack.c.b16 %v1392, %v1384
        %v2393 = vpack.c.b16 %v1393, %v1385
        %v2394 = vpack.c.b16 %v1402, %v1394
        %v2395 = vpack.c.b16 %v1403, %v1395
        %v2396 = vpack.c.b16 %v1404, %v1396
        %v2397 = vpack.c.b16 %v1405, %v1397
        %v2398 = vpack.c.b16 %v1406, %v1398
        %v2399 = vpack.c.b16 %v1407, %v1399
        %v2400 = vpack.c.b16 %v1408, %v1400
        %v2401 = vpack.c.b16 %v1409, %v1401
        %v2402 = vpack.c.b16 %v1418, %v1410
        %v2403 = vpack.c.b16 %v1419, %v1411
        %v2404 = vpack.c.b16 %v1420, %v1412
        %v2405 = vpack.c.b16 %v1421, %v1413
        %v2406 = vpack.c.b16 %v1422, %v1414
        %v2407 = vpack.c.b16 %v1423, %v1415
        %v2408 = vpack.c.b16 %v1424, %v1416
        %v2409 = vpack.c.b16 %v1425, %v1417
        %v2410 = vpack.c.b16 %v1434, %v1426
        %v2411 = vpack.c.b16 %v1435, %v1427
        %v2412 = vpack.c.b16 %v1436, %v1428
        %v2413 = vpack.c.b16 %v1437, %v1429
        %v2414 = vpack.c.b16 %v1438, %v1430
        %v2415 = vpack.c.b16 %v1439, %v1431
        %v2416 = vpack.c.b16 %v1440, %v1432
        %v2417 = vpack.c.b16 %v1441, %v1433
        %v2418 = vpack.c.b16 %v1450, %v1442
        %v2419 = vpack.c.b16 %v1451, %v1443
        %v2420 = vpack.c.b16 %v1452, %v1444
        %v2421 = vpack.c.b16 %v1453, %v1445
        %v2422 = vpack.c.b16 %v1454, %v1446
        %v2423 = vpack.c.b16 %v1455, %v1447
        %v2424 = vpack.c.b16 %v1456, %v1448
        %v2425 = vpack.c.b16 %v1457, %v1449
        %v2426 = vpack.c.b16 %v1466, %v1458
        %v2427 = vpack.c.b16 %v1467, %v1459
        %v2428 = vpack.c.b16 %v1468, %v1460
        %v2429 = vpack.c.b16 %v1469, %v1461
        %v2430 = vpack.c.b16 %v1470, %v1462
        %v2431 = vpack.c.b16 %v1471, %v1463
        %v2432 = vpack.c.b16 %v1472, %v1464
        %v2433 = vpack.c.b16 %v1473, %v1465
        %v2434 = vpack.c.b16 %v1482, %v1474
        %v2435 = vpack.c.b16 %v1483, %v1475
        %v2436 = vpack.c.b16 %v1484, %v1476
        %v2437 = vpack.c.b16 %v1485, %v1477
        %v2438 = vpack.c.b16 %v1486, %v1478
        %v2439 = vpack.c.b16 %v1487, %v1479
        %v2440 = vpack.c.b16 %v1488, %v1480
        %v2441 = vpack.c.b16 %v1489, %v1481
        %v2442 = vpack.c.b16 %v1498, %v1490
        %v2443 = vpack.c.b16 %v1499, %v1491
        %v2444 = vpack.c.b16 %v1500, %v1492
        %v2445 = vpack.c.b16 %v1501, %v1493
        %v2446 = vpack.c.b16 %v1502, %v1494
        %v2447 = vpack.c.b16 %v1503, %v1495
        %v2448 = vpack.c.b16 %v1504, %v1496
        %v2449 = vpack.c.b16 %v1505, %v1497
        %v2450 = vpack.c.b16 %v1514, %v1506
        %v2451 = vpack.c.b16 %v1515, %v1507
        %v2452 = vpack.c.b16 %v1516, %v1508
        %v2453 = vpack.c.b16 %v1517, %v1509
        %v2454 = vpack.c.b16 %v1518, %v1510
        %v2455 = vpack.c.b16 %v1519, %v1511
        %v2456 = vpack.c.b16 %v1520, %v1512
        %v2457 = vpack.c.b16 %v1521, %v1513
        %v2458 = vpack.c.b16 %v1530, %v1522
        %v2459 = vpack.c.b16 %v1531, %v1523
        %v2460 = vpack.c.b16 %v1532, %v1524
        %v2461 = vpack.c.b16 %v1533, %v1525
        %v2462 = vpack.c.b16 %v1534, %v1526
        %v2463 = vpack.c.b16 %v1535, %v1527
        %v2464 = vpack.c.b16 %v1536, %v1528
        %v2465 = vpack.c.b16 %v1537, %v1529
        %v2466 = vpack.c.b16 %v1546, %v1538
        %v2467 = vpack.c.b16 %v1547, %v1539
        %v2468 = vpack.c.b16 %v1548, %v1540
        %v2469 = vpack.c.b16 %v1549, %v1541
        %v2470 = vpack.c.b16 %v1550, %v1542
        %v2471 = vpack.c.b16 %v1551, %v1543
        %v2472 = vpack.c.b16 %v1552, %v1544
        %v2473 = vpack.c.b16 %v1553, %v1545
        %v2474 = vpack.c.b16 %v1562, %v1554
        %v2475 = vpack.c.b16 %v1563, %v1555
        %v2476 = vpack.c.b16 %v1564, %v1556
        %v2477 = vpack.c.b16 %v1565, %v1557
        %v2478 = vpack.c.b16 %v1566, %v1558
        %v2479 = vpack.c.b16 %v1567, %v1559
        %v2480 = vpack.c.b16 %v1568, %v1560
        %v2481 = vpack.c.b16 %v1569, %v1561
        %v2482 = vpack.c.b16 %v1578, %v1570
        %v2483 = vpack.c.b16 %v1579, %v1571
        %v2484 = vpack.c.b16 %v1580, %v1572
        %v2485 = vpack.c.b16 %v1581, %v1573
        %v2486 = vpack.c.b16 %v1582, %v1574
        %v2487 = vpack.c.b16 %v1583, %v1575
        %v2488 = vpack.c.b16 %v1584, %v1576
        %v2489 = vpack.c.b16 %v1585, %v1577
        %v2490 = vpack.c.b16 %v1594, %v1586
        %v2491 = vpack.c.b16 %v1595, %v1587
        %v2492 = vpack.c.b16 %v1596, %v1588
        %v2493 = vpack.c.b16 %v1597, %v1589
        %v2494 = vpack.c.b16 %v1598, %v1590
        %v2495 = vpack.c.b16 %v1599, %v1591
        %v2496 = vpack.c.b16 %v1600, %v1592
        %v2497 = vpack.c.b16 %v1601, %v1593
        %v2498 = vpack.c.b16 %v1610, %v1602
        %v2499 = vpack.c.b16 %v1611, %v1603
        %v2500 = vpack.c.b16 %v1612, %v1604
        %v2501 = vpack.c.b16 %v1613, %v1605
        %v2502 = vpack.c.b16 %v1614, %v1606
        %v2503 = vpack.c.b16 %v1615, %v1607
        %v2504 = vpack.c.b16 %v1616, %v1608
        %v2505 = vpack.c.b16 %v1617, %v1609
        %v2506 = vpack.c.b16 %v1626, %v1618
        %v2507 = vpack.c.b16 %v1627, %v1619
        %v2508 = vpack.c.b16 %v1628, %v1620
        %v2509 = vpack.c.b16 %v1629, %v1621
        %v2510 = vpack.c.b16 %v1630, %v1622
        %v2511 = vpack.c.b16 %v1631, %v1623
        %v2512 = vpack.c.b16 %v1632, %v1624
        %v2513 = vpack.c.b16 %v1633, %v1625
        %v2514 = vpack.c.b16 %v1642, %v1634
        %v2515 = vpack.c.b16 %v1643, %v1635
        %v2516 = vpack.c.b16 %v1644, %v1636
        %v2517 = vpack.c.b16 %v1645, %v1637
        %v2518 = vpack.c.b16 %v1646, %v1638
        %v2519 = vpack.c.b16 %v1647, %v1639
        %v2520 = vpack.c.b16 %v1648, %v1640
        %v2521 = vpack.c.b16 %v1649, %v1641
        %v2522 = vpack.c.b16 %v1658, %v1650
        %v2523 = vpack.c.b16 %v1659, %v1651
        %v2524 = vpack.c.b16 %v1660, %v1652
        %v2525 = vpack.c.b16 %v1661, %v1653
        %v2526 = vpack.c.b16 %v1662, %v1654
        %v2527 = vpack.c.b16 %v1663, %v1655
        %v2528 = vpack.c.b16 %v1664, %v1656
        %v2529 = vpack.c.b16 %v1665, %v1657
        %v2530 = vpack.c.b16 %v1674, %v1666
        %v2531 = vpack.c.b16 %v1675, %v1667
        %v2532 = vpack.c.b16 %v1676, %v1668
        %v2533 = vpack.c.b16 %v1677, %v1669
        %v2534 = vpack.c.b16 %v1678, %v1670
        %v2535 = vpack.c.b16 %v1679, %v1671
        %v2536 = vpack.c.b16 %v1680, %v1672
        %v2537 = vpack.c.b16 %v1681, %v1673
        %v2538 = vpack.c.b16 %v1690, %v1682
        %v2539 = vpack.c.b16 %v1691, %v1683
        %v2540 = vpack.c.b16 %v1692, %v1684
        %v2541 = vpack.c.b16 %v1693, %v1685
        %v2542 = vpack.c.b16 %v1694, %v1686
        %v2543 = vpack.c.b16 %v1695, %v1687
        %v2544 = vpack.c.b16 %v1696, %v1688
        %v2545 = vpack.c.b16 %v1697, %v1689
        %v2546 = vpack.c.b16 %v1706, %v1698
        %v2547 = vpack.c.b16 %v1707, %v1699
        %v2548 = vpack.c.b16 %v1708, %v1700
        %v2549 = vpack.c.b16 %v1709, %v1701
        %v2550 = vpack.c.b16 %v1710, %v1702
        %v2551 = vpack.c.b16 %v1711, %v1703
        %v2552 = vpack.c.b16 %v1712, %v1704
        %v2553 = vpack.c.b16 %v1713, %v1705
        %v2554 = vpack.c.b16 %v1722, %v1714
        %v2555 = vpack.c.b16 %v1723, %v1715
        %v2556 = vpack.c.b16 %v1724, %v1716
        %v2557 = vpack.c.b16 %v1725, %v1717
        %v2558 = vpack.c.b16 %v1726, %v1718
        %v2559 = vpack.c.b16 %v1727, %v1719
        %v2560 = vpack.c.b16 %v1728, %v1720
        %v2561 = vpack.c.b16 %v1729, %v1721
        %v2562 = vpack.c.b16 %v1738, %v1730
        %v2563 = vpack.c.b16 %v1739, %v1731
        %v2564 = vpack.c.b16 %v1740, %v1732
        %v2565 = vpack.c.b16 %v1741, %v1733
        %v2566 = vpack.c.b16 %v1742, %v1734
        %v2567 = vpack.c.b16 %v1743, %v1735
        %v2568 = vpack.c.b16 %v1744, %v1736
        %v2569 = vpack.c.b16 %v1745, %v1737
        %v2570 = vpack.c.b16 %v1754, %v1746
        %v2571 = vpack.c.b16 %v1755, %v1747
        %v2572 = vpack.c.b16 %v1756, %v1748
        %v2573 = vpack.c.b16 %v1757, %v1749
        %v2574 = vpack.c.b16 %v1758, %v1750
        %v2575 = vpack.c.b16 %v1759, %v1751
        %v2576 = vpack.c.b16 %v1760, %v1752
        %v2577 = vpack.c.b16 %v1761, %v1753
        %v2578 = vpack.c.b16 %v1770, %v1762
        %v2579 = vpack.c.b16 %v1771, %v1763
        %v2580 = vpack.c.b16 %v1772, %v1764
        %v2581 = vpack.c.b16 %v1773, %v1765
        %v2582 = vpack.c.b16 %v1774, %v1766
        %v2583 = vpack.c.b16 %v1775, %v1767
        %v2584 = vpack.c.b16 %v1776, %v1768
        %v2585 = vpack.c.b16 %v1777, %v1769
        %v2586 = vpack.c.b16 %v1786, %v1778
        %v2587 = vpack.c.b16 %v1787, %v1779
        %v2588 = vpack.c.b16 %v1788, %v1780
        %v2589 = vpack.c.b16 %v1789, %v1781
        %v2590 = vpack.c.b16 %v1790, %v1782
        %v2591 = vpack.c.b16 %v1791, %v1783
        %v2592 = vpack.c.b16 %v1792, %v1784
        %v2593 = vpack.c.b16 %v1793, %v1785
        %v2594 = vpack.c.b16 %v1802, %v1794
        %v2595 = vpack.c.b16 %v1803, %v1795
        %v2596 = vpack.c.b16 %v1804, %v1796
        %v2597 = vpack.c.b16 %v1805, %v1797
        %v2598 = vpack.c.b16 %v1806, %v1798
        %v2599 = vpack.c.b16 %v1807, %v1799
        %v2600 = vpack.c.b16 %v1808, %v1800
        %v2601 = vpack.c.b16 %v1809, %v1801
        %v2602 = vpack.c.b16 %v1818, %v1810
        %v2603 = vpack.c.b16 %v1819, %v1811
        %v2604 = vpack.c.b16 %v1820, %v1812
        %v2605 = vpack.c.b16 %v1821, %v1813
        %v2606 = vpack.c.b16 %v1822, %v1814
        %v2607 = vpack.c.b16 %v1823, %v1815
        %v2608 = vpack.c.b16 %v1824, %v1816
        %v2609 = vpack.c.b16 %v1825, %v1817
        %v2610 = vpack.c.b16 %v1834, %v1826
        %v2611 = vpack.c.b16 %v1835, %v1827
        %v2612 = vpack.c.b16 %v1836, %v1828
        %v2613 = vpack.c.b16 %v1837, %v1829
        %v2614 = vpack.c.b16 %v1838, %v1830
        %v2615 = vpack.c.b16 %v1839, %v1831
        %v2616 = vpack.c.b16 %v1840, %v1832
        %v2617 = vpack.c.b16 %v1841, %v1833
        %v2618 = vpack.c.b16 %v1850, %v1842
        %v2619 = vpack.c.b16 %v1851, %v1843
        %v2620 = vpack.c.b16 %v1852, %v1844
        %v2621 = vpack.c.b16 %v1853, %v1845
        %v2622 = vpack.c.b16 %v1854, %v1846
        %v2623 = vpack.c.b16 %v1855, %v1847
        %v2624 = vpack.c.b16 %v1856, %v1848
        %v2625 = vpack.c.b16 %v1857, %v1849
        %v2626 = vpack.c.b16 %v1866, %v1858
        %v2627 = vpack.c.b16 %v1867, %v1859
        %v2628 = vpack.c.b16 %v1868, %v1860
        %v2629 = vpack.c.b16 %v1869, %v1861
        %v2630 = vpack.c.b16 %v1870, %v1862
        %v2631 = vpack.c.b16 %v1871, %v1863
        %v2632 = vpack.c.b16 %v1872, %v1864
        %v2633 = vpack.c.b16 %v1873, %v1865
        %v2634 = vpack.c.b16 %v1882, %v1874
        %v2635 = vpack.c.b16 %v1883, %v1875
        %v2636 = vpack.c.b16 %v1884, %v1876
        %v2637 = vpack.c.b16 %v1885, %v1877
        %v2638 = vpack.c.b16 %v1886, %v1878
        %v2639 = vpack.c.b16 %v1887, %v1879
        %v2640 = vpack.c.b16 %v1888, %v1880
        %v2641 = vpack.c.b16 %v1889, %v1881
        %v2642 = vpack.c.b16 %v1898, %v1890
        %v2643 = vpack.c.b16 %v1899, %v1891
        %v2644 = vpack.c.b16 %v1900, %v1892
        %v2645 = vpack.c.b16 %v1901, %v1893
        %v2646 = vpack.c.b16 %v1902, %v1894
        %v2647 = vpack.c.b16 %v1903, %v1895
        %v2648 = vpack.c.b16 %v1904, %v1896
        %v2649 = vpack.c.b16 %v1905, %v1897
        %v2650 = vpack.c.b16 %v1914, %v1906
        %v2651 = vpack.c.b16 %v1915, %v1907
        %v2652 = vpack.c.b16 %v1916, %v1908
        %v2653 = vpack.c.b16 %v1917, %v1909
        %v2654 = vpack.c.b16 %v1918, %v1910
        %v2655 = vpack.c.b16 %v1919, %v1911
        %v2656 = vpack.c.b16 %v1920, %v1912
        %v2657 = vpack.c.b16 %v1921, %v1913
        %v2658 = vpack.c.b16 %v1930, %v1922
        %v2659 = vpack.c.b16 %v1931, %v1923
        %v2660 = vpack.c.b16 %v1932, %v1924
        %v2661 = vpack.c.b16 %v1933, %v1925
        %v2662 = vpack.c.b16 %v1934, %v1926
        %v2663 = vpack.c.b16 %v1935, %v1927
        %v2664 = vpack.c.b16 %v1936, %v1928
        %v2665 = vpack.c.b16 %v1937, %v1929
        %v2666 = vpack.c.b16 %v1946, %v1938
        %v2667 = vpack.c.b16 %v1947, %v1939
        %v2668 = vpack.c.b16 %v1948, %v1940
        %v2669 = vpack.c.b16 %v1949, %v1941
        %v2670 = vpack.c.b16 %v1950, %v1942
        %v2671 = vpack.c.b16 %v1951, %v1943
        %v2672 = vpack.c.b16 %v1952, %v1944
        %v2673 = vpack.c.b16 %v1953, %v1945
        %v2674 = vpack.c.b16 %v1962, %v1954
        %v2675 = vpack.c.b16 %v1963, %v1955
        %v2676 = vpack.c.b16 %v1964, %v1956
        %v2677 = vpack.c.b16 %v1965, %v1957
        %v2678 = vpack.c.b16 %v1966, %v1958
        %v2679 = vpack.c.b16 %v1967, %v1959
        %v2680 = vpack.c.b16 %v1968, %v1960
        %v2681 = vpack.c.b16 %v1969, %v1961
        %v2682 = vpack.c.b16 %v1978, %v1970
        %v2683 = vpack.c.b16 %v1979, %v1971
        %v2684 = vpack.c.b16 %v1980, %v1972
        %v2685 = vpack.c.b16 %v1981, %v1973
        %v2686 = vpack.c.b16 %v1982, %v1974
        %v2687 = vpack.c.b16 %v1983, %v1975
        %v2688 = vpack.c.b16 %v1984, %v1976
        %v2689 = vpack.c.b16 %v1985, %v1977
        %v2690 = vpack.c.b16 %v1994, %v1986
        %v2691 = vpack.c.b16 %v1995, %v1987
        %v2692 = vpack.c.b16 %v1996, %v1988
        %v2693 = vpack.c.b16 %v1997, %v1989
        %v2694 = vpack.c.b16 %v1998, %v1990
        %v2695 = vpack.c.b16 %v1999, %v1991
        %v2696 = vpack.c.b16 %v2000, %v1992
        %v2697 = vpack.c.b16 %v2001, %v1993
        %v2698 = vpack.c.b16 %v2010, %v2002
        %v2699 = vpack.c.b16 %v2011, %v2003
        %v2700 = vpack.c.b16 %v2012, %v2004
        %v2701 = vpack.c.b16 %v2013, %v2005
        %v2702 = vpack.c.b16 %v2014, %v2006
        %v2703 = vpack.c.b16 %v2015, %v2007
        %v2704 = vpack.c.b16 %v2016, %v2008
        %v2705 = vpack.c.b16 %v2017, %v2009
        %v2706 = vpack.c.b16 %v2026, %v2018
        %v2707 = vpack.c.b16 %v2027, %v2019
        %v2708 = vpack.c.b16 %v2028, %v2020
        %v2709 = vpack.c.b16 %v2029, %v2021
        %v2710 = vpack.c.b16 %v2030, %v2022
        %v2711 = vpack.c.b16 %v2031, %v2023
        %v2712 = vpack.c.b16 %v2032, %v2024
        %v2713 = vpack.c.b16 %v2033, %v2025
        %v2714 = vpack.c.b16 %v2042, %v2034
        %v2715 = vpack.c.b16 %v2043, %v2035
        %v2716 = vpack.c.b16 %v2044, %v2036
        %v2717 = vpack.c.b16 %v2045, %v2037
        %v2718 = vpack.c.b16 %v2046, %v2038
        %v2719 = vpack.c.b16 %v2047, %v2039
        %v2720 = vpack.c.b16 %v2048, %v2040
        %v2721 = vpack.c.b16 %v2049, %v2041
        %v2722 = vpack.c.b16 %v2058, %v2050
        %v2723 = vpack.c.b16 %v2059, %v2051
        %v2724 = vpack.c.b16 %v2060, %v2052
        %v2725 = vpack.c.b16 %v2061, %v2053
        %v2726 = vpack.c.b16 %v2062, %v2054
        %v2727 = vpack.c.b16 %v2063, %v2055
        %v2728 = vpack.c.b16 %v2064, %v2056
        %v2729 = vpack.c.b16 %v2065, %v2057
        %v2730 = vpack.c.b16 %v2074, %v2066
        %v2731 = vpack.c.b16 %v2075, %v2067
        %v2732 = vpack.c.b16 %v2076, %v2068
        %v2733 = vpack.c.b16 %v2077, %v2069
        %v2734 = vpack.c.b16 %v2078, %v2070
        %v2735 = vpack.c.b16 %v2079, %v2071
        %v2736 = vpack.c.b16 %v2080, %v2072
        %v2737 = vpack.c.b16 %v2081, %v2073
        %v2738 = vpack.c.b16 %v2090, %v2082
        %v2739 = vpack.c.b16 %v2091, %v2083
        %v2740 = vpack.c.b16 %v2092, %v2084
        %v2741 = vpack.c.b16 %v2093, %v2085
        %v2742 = vpack.c.b16 %v2094, %v2086
        %v2743 = vpack.c.b16 %v2095, %v2087
        %v2744 = vpack.c.b16 %v2096, %v2088
        %v2745 = vpack.c.b16 %v2097, %v2089
        %v2746 = vpack.c.b16 %v2106, %v2098
        %v2747 = vpack.c.b16 %v2107, %v2099
        %v2748 = vpack.c.b16 %v2108, %v2100
        %v2749 = vpack.c.b16 %v2109, %v2101
        %v2750 = vpack.c.b16 %v2110, %v2102
        %v2751 = vpack.c.b16 %v2111, %v2103
        %v2752 = vpack.c.b16 %v2112, %v2104
        %v2753 = vpack.c.b16 %v2113, %v2105
        %v2754 = vpack.c.b16 %v2122, %v2114
        %v2755 = vpack.c.b16 %v2123, %v2115
        %v2756 = vpack.c.b16 %v2124, %v2116
        %v2757 = vpack.c.b16 %v2125, %v2117
        %v2758 = vpack.c.b16 %v2126, %v2118
        %v2759 = vpack.c.b16 %v2127, %v2119
        %v2760 = vpack.c.b16 %v2128, %v2120
        %v2761 = vpack.c.b16 %v2129, %v2121
        %v2762 = vpack.c.b16 %v2138, %v2130
        %v2763 = vpack.c.b16 %v2139, %v2131
        %v2764 = vpack.c.b16 %v2140, %v2132
        %v2765 = vpack.c.b16 %v2141, %v2133
        %v2766 = vpack.c.b16 %v2142, %v2134
        %v2767 = vpack.c.b16 %v2143, %v2135
        %v2768 = vpack.c.b16 %v2144, %v2136
        %v2769 = vpack.c.b16 %v2145, %v2137
        %v2770 = vpack.c.b16 %v2154, %v2146
        %v2771 = vpack.c.b16 %v2155, %v2147
        %v2772 = vpack.c.b16 %v2156, %v2148
        %v2773 = vpack.c.b16 %v2157, %v2149
        %v2774 = vpack.c.b16 %v2158, %v2150
        %v2775 = vpack.c.b16 %v2159, %v2151
        %v2776 = vpack.c.b16 %v2160, %v2152
        %v2777 = vpack.c.b16 %v2161, %v2153
        %v2778 = vpack.c.b16 %v2170, %v2162
        %v2779 = vpack.c.b16 %v2171, %v2163
        %v2780 = vpack.c.b16 %v2172, %v2164
        %v2781 = vpack.c.b16 %v2173, %v2165
        %v2782 = vpack.c.b16 %v2174, %v2166
        %v2783 = vpack.c.b16 %v2175, %v2167
        %v2784 = vpack.c.b16 %v2176, %v2168
        %v2785 = vpack.c.b16 %v2177, %v2169
        %v2786 = vpack.c.b16 %v2186, %v2178
        %v2787 = vpack.c.b16 %v2187, %v2179
        %v2788 = vpack.c.b16 %v2188, %v2180
        %v2789 = vpack.c.b16 %v2189, %v2181
        %v2790 = vpack.c.b16 %v2190, %v2182
        %v2791 = vpack.c.b16 %v2191, %v2183
        %v2792 = vpack.c.b16 %v2192, %v2184
        %v2793 = vpack.c.b16 %v2193, %v2185
        %v2794 = vpack.c.b16 %v2202, %v2194
        %v2795 = vpack.c.b16 %v2203, %v2195
        %v2796 = vpack.c.b16 %v2204, %v2196
        %v2797 = vpack.c.b16 %v2205, %v2197
        %v2798 = vpack.c.b16 %v2206, %v2198
        %v2799 = vpack.c.b16 %v2207, %v2199
        %v2800 = vpack.c.b16 %v2208, %v2200
        %v2801 = vpack.c.b16 %v2209, %v2201
        %v2802 = vpack.c.b16 %v2218, %v2210
        %v2803 = vpack.c.b16 %v2219, %v2211
        %v2804 = vpack.c.b16 %v2220, %v2212
        %v2805 = vpack.c.b16 %v2221, %v2213
        %v2806 = vpack.c.b16 %v2222, %v2214
        %v2807 = vpack.c.b16 %v2223, %v2215
        %v2808 = vpack.c.b16 %v2224, %v2216
        %v2809 = vpack.c.b16 %v2225, %v2217
        %v2810 = vpack.c.b16 %v2234, %v2226
        %v2811 = vpack.c.b16 %v2235, %v2227
        %v2812 = vpack.c.b16 %v2236, %v2228
        %v2813 = vpack.c.b16 %v2237, %v2229
        %v2814 = vpack.c.b16 %v2238, %v2230
        %v2815 = vpack.c.b16 %v2239, %v2231
        %v2816 = vpack.c.b16 %v2240, %v2232
        %v2817 = vpack.c.b16 %v2241, %v2233
        %v2818 = vpack.c.b16 %v2250, %v2242
        %v2819 = vpack.c.b16 %v2251, %v2243
        %v2820 = vpack.c.b16 %v2252, %v2244
        %v2821 = vpack.c.b16 %v2253, %v2245
        %v2822 = vpack.c.b16 %v2254, %v2246
        %v2823 = vpack.c.b16 %v2255, %v2247
        %v2824 = vpack.c.b16 %v2256, %v2248
        %v2825 = vpack.c.b16 %v2257, %v2249
        %v2826 = vpack.c.b16 %v2266, %v2258
        %v2827 = vpack.c.b16 %v2267, %v2259
        %v2828 = vpack.c.b16 %v2268, %v2260
        %v2829 = vpack.c.b16 %v2269, %v2261
        %v2830 = vpack.c.b16 %v2270, %v2262
        %v2831 = vpack.c.b16 %v2271, %v2263
        %v2832 = vpack.c.b16 %v2272, %v2264
        %v2833 = vpack.c.b16 %v2273, %v2265
        %v2834 = vpack.c.b16 %v2282, %v2274
        %v2835 = vpack.c.b16 %v2283, %v2275
        %v2836 = vpack.c.b16 %v2284, %v2276
        %v2837 = vpack.c.b16 %v2285, %v2277
        %v2838 = vpack.c.b16 %v2286, %v2278
        %v2839 = vpack.c.b16 %v2287, %v2279
        %v2840 = vpack.c.b16 %v2288, %v2280
        %v2841 = vpack.c.b16 %v2289, %v2281
        %v2842 = vpack.c.b16 %v2298, %v2290
        %v2843 = vpack.c.b16 %v2299, %v2291
        %v2844 = vpack.c.b16 %v2300, %v2292
        %v2845 = vpack.c.b16 %v2301, %v2293
        %v2846 = vpack.c.b16 %v2302, %v2294
        %v2847 = vpack.c.b16 %v2303, %v2295
        %v2848 = vpack.c.b16 %v2304, %v2296
        %v2849 = vpack.c.b16 %v2305, %v2297
        %v2850 = vpack.c.b16 %v2314, %v2306
        %v2851 = vpack.c.b16 %v2315, %v2307
        %v2852 = vpack.c.b16 %v2316, %v2308
        %v2853 = vpack.c.b16 %v2317, %v2309
        %v2854 = vpack.c.b16 %v2318, %v2310
        %v2855 = vpack.c.b16 %v2319, %v2311
        %v2856 = vpack.c.b16 %v2320, %v2312
        %v2857 = vpack.c.b16 %v2321, %v2313
        %v2858 = vpack.c.b16 %v2330, %v2322
        %v2859 = vpack.c.b16 %v2331, %v2323
        %v2860 = vpack.c.b16 %v2332, %v2324
        %v2861 = vpack.c.b16 %v2333, %v2325
        %v2862 = vpack.c.b16 %v2334, %v2326
        %v2863 = vpack.c.b16 %v2335, %v2327
        %v2864 = vpack.c.b16 %v2336, %v2328
        %v2865 = vpack.c.b16 %v2337, %v2329
        %v2866 = vpack.c.b16 %v2346, %v2338
        %v2867 = vpack.c.b16 %v2347, %v2339
        %v2868 = vpack.c.b16 %v2348, %v2340
        %v2869 = vpack.c.b16 %v2349, %v2341
        %v2870 = vpack.c.b16 %v2350, %v2342
        %v2871 = vpack.c.b16 %v2351, %v2343
        %v2872 = vpack.c.b16 %v2352, %v2344
        %v2873 = vpack.c.b16 %v2353, %v2345
        %v2874 = vpack.c.b16 %v2362, %v2354
        %v2875 = vpack.c.b16 %v2363, %v2355
        %v2876 = vpack.c.b16 %v2364, %v2356
        %v2877 = vpack.c.b16 %v2365, %v2357
        %v2878 = vpack.c.b16 %v2366, %v2358
        %v2879 = vpack.c.b16 %v2367, %v2359
        %v2880 = vpack.c.b16 %v2368, %v2360
        %v2881 = vpack.c.b16 %v2369, %v2361
        %3394 = vmatpush.bf16.msra.mxu0 %v2426
        %3395 = vmatpush.bf16.msra.mxu0 %v2418
        %3396 = vmatpush.bf16.msra.mxu0 %v2410
        %3397 = vmatpush.bf16.msra.mxu0 %v2402
        %3398 = vmatpush.bf16.msra.mxu0 %v2394
        %3399 = vmatpush.bf16.msra.mxu0 %v2386
        %3400 = vmatpush.bf16.msra.mxu0 %v2378
        %3401 = vmatpush.bf16.msra.mxu0 %v2370
        %3402 = vmatmul.bf16.gmra.mxu0 %v818
        %v3403 = vpop.f32.mrf.mxu0
        %v3404 = vadd.f32 %v790, %v3403
        %v3405 = vpop.f32.mrf.mxu0
        %3406 = vdwg.mxu0
        %3407 = vmatpush.bf16.msra.mxu0 %v2490
        %3408 = vmatpush.bf16.msra.mxu0 %v2482
        %3409 = vmatpush.bf16.msra.mxu0 %v2474
        %3410 = vmatpush.bf16.msra.mxu0 %v2466
        %3411 = vmatpush.bf16.msra.mxu0 %v2458
        %3412 = vmatpush.bf16.msra.mxu0 %v2450
        %3413 = vmatpush.bf16.msra.mxu0 %v2442
        %3414 = vmatpush.bf16.msra.mxu0 %v2434
        %3415 = vmatmul.bf16.gmra.mxu0 %v819
        %v3416 = vpop.f32.mrf.mxu0
        %v3417 = vadd.f32 %v3404, %v3416
        %v3418 = vpop.f32.mrf.mxu0
        %3419 = vdwg.mxu0
        %3420 = vmatpush.bf16.msra.mxu0 %v2554
        %3421 = vmatpush.bf16.msra.mxu0 %v2546
        %3422 = vmatpush.bf16.msra.mxu0 %v2538
        %3423 = vmatpush.bf16.msra.mxu0 %v2530
        %3424 = vmatpush.bf16.msra.mxu0 %v2522
        %3425 = vmatpush.bf16.msra.mxu0 %v2514
        %3426 = vmatpush.bf16.msra.mxu0 %v2506
        %3427 = vmatpush.bf16.msra.mxu0 %v2498
        %3428 = vmatmul.bf16.gmra.mxu0 %v820
        %v3429 = vpop.f32.mrf.mxu0
        %v3430 = vadd.f32 %v3417, %v3429
        %v3431 = vpop.f32.mrf.mxu0
        %3432 = vdwg.mxu0
        %3433 = vmatpush.bf16.msra.mxu0 %v2618
        %3434 = vmatpush.bf16.msra.mxu0 %v2610
        %3435 = vmatpush.bf16.msra.mxu0 %v2602
        %3436 = vmatpush.bf16.msra.mxu0 %v2594
        %3437 = vmatpush.bf16.msra.mxu0 %v2586
        %3438 = vmatpush.bf16.msra.mxu0 %v2578
        %3439 = vmatpush.bf16.msra.mxu0 %v2570
        %3440 = vmatpush.bf16.msra.mxu0 %v2562
        %3441 = vmatmul.bf16.gmra.mxu0 %v821
        %v3442 = vpop.f32.mrf.mxu0
        %v3443 = vadd.f32 %v3430, %v3442
        %v3444 = vpop.f32.mrf.mxu0
        %3445 = vdwg.mxu0
        %3446 = vmatpush.bf16.msra.mxu0 %v2682
        %3447 = vmatpush.bf16.msra.mxu0 %v2674
        %3448 = vmatpush.bf16.msra.mxu0 %v2666
        %3449 = vmatpush.bf16.msra.mxu0 %v2658
        %3450 = vmatpush.bf16.msra.mxu0 %v2650
        %3451 = vmatpush.bf16.msra.mxu0 %v2642
        %3452 = vmatpush.bf16.msra.mxu0 %v2634
        %3453 = vmatpush.bf16.msra.mxu0 %v2626
        %3454 = vmatmul.bf16.gmra.mxu0 %v822
        %v3455 = vpop.f32.mrf.mxu0
        %v3456 = vadd.f32 %v3443, %v3455
        %v3457 = vpop.f32.mrf.mxu0
        %3458 = vdwg.mxu0
        %3459 = vmatpush.bf16.msra.mxu0 %v2746
        %3460 = vmatpush.bf16.msra.mxu0 %v2738
        %3461 = vmatpush.bf16.msra.mxu0 %v2730
        %3462 = vmatpush.bf16.msra.mxu0 %v2722
        %3463 = vmatpush.bf16.msra.mxu0 %v2714
        %3464 = vmatpush.bf16.msra.mxu0 %v2706
        %3465 = vmatpush.bf16.msra.mxu0 %v2698
        %3466 = vmatpush.bf16.msra.mxu0 %v2690
        %3467 = vmatmul.bf16.gmra.mxu0 %v823
        %v3468 = vpop.f32.mrf.mxu0
        %v3469 = vadd.f32 %v3456, %v3468
        %v3470 = vpop.f32.mrf.mxu0
        %3471 = vdwg.mxu0
        %3472 = vmatpush.bf16.msra.mxu0 %v2810
        %3473 = vmatpush.bf16.msra.mxu0 %v2802
        %3474 = vmatpush.bf16.msra.mxu0 %v2794
        %3475 = vmatpush.bf16.msra.mxu0 %v2786
        %3476 = vmatpush.bf16.msra.mxu0 %v2778
        %3477 = vmatpush.bf16.msra.mxu0 %v2770
        %3478 = vmatpush.bf16.msra.mxu0 %v2762
        %3479 = vmatpush.bf16.msra.mxu0 %v2754
        %3480 = vmatmul.bf16.gmra.mxu0 %v824
        %v3481 = vpop.f32.mrf.mxu0
        %v3482 = vadd.f32 %v3469, %v3481
        %v3483 = vpop.f32.mrf.mxu0
        %3484 = vdwg.mxu0
        %3485 = vmatpush.bf16.msra.mxu0 %v2874
        %3486 = vmatpush.bf16.msra.mxu0 %v2866
        %3487 = vmatpush.bf16.msra.mxu0 %v2858
        %3488 = vmatpush.bf16.msra.mxu0 %v2850
        %3489 = vmatpush.bf16.msra.mxu0 %v2842
        %3490 = vmatpush.bf16.msra.mxu0 %v2834
        %3491 = vmatpush.bf16.msra.mxu0 %v2826
        %3492 = vmatpush.bf16.msra.mxu0 %v2818
        %3493 = vmatmul.bf16.gmra.mxu0 %v825
        %v3494 = vpop.f32.mrf.mxu0
        %v3495 = vadd.f32 %v3482, %v3494
        %v3496 = vpop.f32.mrf.mxu0
        %3497 = vdwg.mxu0
        %3498 = vmatpush.bf16.msra.mxu0 %v2427
        %3499 = vmatpush.bf16.msra.mxu0 %v2419
        %3500 = vmatpush.bf16.msra.mxu0 %v2411
        %3501 = vmatpush.bf16.msra.mxu0 %v2403
        %3502 = vmatpush.bf16.msra.mxu0 %v2395
        %3503 = vmatpush.bf16.msra.mxu0 %v2387
        %3504 = vmatpush.bf16.msra.mxu0 %v2379
        %3505 = vmatpush.bf16.msra.mxu0 %v2371
        %3506 = vmatmul.bf16.gmra.mxu0 %v818
        %v3507 = vpop.f32.mrf.mxu0
        %v3508 = vadd.f32 %v791, %v3507
        %v3509 = vpop.f32.mrf.mxu0
        %3510 = vdwg.mxu0
        %3511 = vmatpush.bf16.msra.mxu0 %v2491
        %3512 = vmatpush.bf16.msra.mxu0 %v2483
        %3513 = vmatpush.bf16.msra.mxu0 %v2475
        %3514 = vmatpush.bf16.msra.mxu0 %v2467
        %3515 = vmatpush.bf16.msra.mxu0 %v2459
        %3516 = vmatpush.bf16.msra.mxu0 %v2451
        %3517 = vmatpush.bf16.msra.mxu0 %v2443
        %3518 = vmatpush.bf16.msra.mxu0 %v2435
        %3519 = vmatmul.bf16.gmra.mxu0 %v819
        %v3520 = vpop.f32.mrf.mxu0
        %v3521 = vadd.f32 %v3508, %v3520
        %v3522 = vpop.f32.mrf.mxu0
        %3523 = vdwg.mxu0
        %3524 = vmatpush.bf16.msra.mxu0 %v2555
        %3525 = vmatpush.bf16.msra.mxu0 %v2547
        %3526 = vmatpush.bf16.msra.mxu0 %v2539
        %3527 = vmatpush.bf16.msra.mxu0 %v2531
        %3528 = vmatpush.bf16.msra.mxu0 %v2523
        %3529 = vmatpush.bf16.msra.mxu0 %v2515
        %3530 = vmatpush.bf16.msra.mxu0 %v2507
        %3531 = vmatpush.bf16.msra.mxu0 %v2499
        %3532 = vmatmul.bf16.gmra.mxu0 %v820
        %v3533 = vpop.f32.mrf.mxu0
        %v3534 = vadd.f32 %v3521, %v3533
        %v3535 = vpop.f32.mrf.mxu0
        %3536 = vdwg.mxu0
        %3537 = vmatpush.bf16.msra.mxu0 %v2619
        %3538 = vmatpush.bf16.msra.mxu0 %v2611
        %3539 = vmatpush.bf16.msra.mxu0 %v2603
        %3540 = vmatpush.bf16.msra.mxu0 %v2595
        %3541 = vmatpush.bf16.msra.mxu0 %v2587
        %3542 = vmatpush.bf16.msra.mxu0 %v2579
        %3543 = vmatpush.bf16.msra.mxu0 %v2571
        %3544 = vmatpush.bf16.msra.mxu0 %v2563
        %3545 = vmatmul.bf16.gmra.mxu0 %v821
        %v3546 = vpop.f32.mrf.mxu0
        %v3547 = vadd.f32 %v3534, %v3546
        %v3548 = vpop.f32.mrf.mxu0
        %3549 = vdwg.mxu0
        %3550 = vmatpush.bf16.msra.mxu0 %v2683
        %3551 = vmatpush.bf16.msra.mxu0 %v2675
        %3552 = vmatpush.bf16.msra.mxu0 %v2667
        %3553 = vmatpush.bf16.msra.mxu0 %v2659
        %3554 = vmatpush.bf16.msra.mxu0 %v2651
        %3555 = vmatpush.bf16.msra.mxu0 %v2643
        %3556 = vmatpush.bf16.msra.mxu0 %v2635
        %3557 = vmatpush.bf16.msra.mxu0 %v2627
        %3558 = vmatmul.bf16.gmra.mxu0 %v822
        %v3559 = vpop.f32.mrf.mxu0
        %v3560 = vadd.f32 %v3547, %v3559
        %v3561 = vpop.f32.mrf.mxu0
        %3562 = vdwg.mxu0
        %3563 = vmatpush.bf16.msra.mxu0 %v2747
        %3564 = vmatpush.bf16.msra.mxu0 %v2739
        %3565 = vmatpush.bf16.msra.mxu0 %v2731
        %3566 = vmatpush.bf16.msra.mxu0 %v2723
        %3567 = vmatpush.bf16.msra.mxu0 %v2715
        %3568 = vmatpush.bf16.msra.mxu0 %v2707
        %3569 = vmatpush.bf16.msra.mxu0 %v2699
        %3570 = vmatpush.bf16.msra.mxu0 %v2691
        %3571 = vmatmul.bf16.gmra.mxu0 %v823
        %v3572 = vpop.f32.mrf.mxu0
        %v3573 = vadd.f32 %v3560, %v3572
        %v3574 = vpop.f32.mrf.mxu0
        %3575 = vdwg.mxu0
        %3576 = vmatpush.bf16.msra.mxu0 %v2811
        %3577 = vmatpush.bf16.msra.mxu0 %v2803
        %3578 = vmatpush.bf16.msra.mxu0 %v2795
        %3579 = vmatpush.bf16.msra.mxu0 %v2787
        %3580 = vmatpush.bf16.msra.mxu0 %v2779
        %3581 = vmatpush.bf16.msra.mxu0 %v2771
        %3582 = vmatpush.bf16.msra.mxu0 %v2763
        %3583 = vmatpush.bf16.msra.mxu0 %v2755
        %3584 = vmatmul.bf16.gmra.mxu0 %v824
        %v3585 = vpop.f32.mrf.mxu0
        %v3586 = vadd.f32 %v3573, %v3585
        %v3587 = vpop.f32.mrf.mxu0
        %3588 = vdwg.mxu0
        %3589 = vmatpush.bf16.msra.mxu0 %v2875
        %3590 = vmatpush.bf16.msra.mxu0 %v2867
        %3591 = vmatpush.bf16.msra.mxu0 %v2859
        %3592 = vmatpush.bf16.msra.mxu0 %v2851
        %3593 = vmatpush.bf16.msra.mxu0 %v2843
        %3594 = vmatpush.bf16.msra.mxu0 %v2835
        %3595 = vmatpush.bf16.msra.mxu0 %v2827
        %3596 = vmatpush.bf16.msra.mxu0 %v2819
        %3597 = vmatmul.bf16.gmra.mxu0 %v825
        %v3598 = vpop.f32.mrf.mxu0
        %v3599 = vadd.f32 %v3586, %v3598
        %v3600 = vpop.f32.mrf.mxu0
        %3601 = vdwg.mxu0
        %3602 = vmatpush.bf16.msra.mxu0 %v2428
        %3603 = vmatpush.bf16.msra.mxu0 %v2420
        %3604 = vmatpush.bf16.msra.mxu0 %v2412
        %3605 = vmatpush.bf16.msra.mxu0 %v2404
        %3606 = vmatpush.bf16.msra.mxu0 %v2396
        %3607 = vmatpush.bf16.msra.mxu0 %v2388
        %3608 = vmatpush.bf16.msra.mxu0 %v2380
        %3609 = vmatpush.bf16.msra.mxu0 %v2372
        %3610 = vmatmul.bf16.gmra.mxu0 %v818
        %v3611 = vpop.f32.mrf.mxu0
        %v3612 = vadd.f32 %v792, %v3611
        %v3613 = vpop.f32.mrf.mxu0
        %3614 = vdwg.mxu0
        %3615 = vmatpush.bf16.msra.mxu0 %v2492
        %3616 = vmatpush.bf16.msra.mxu0 %v2484
        %3617 = vmatpush.bf16.msra.mxu0 %v2476
        %3618 = vmatpush.bf16.msra.mxu0 %v2468
        %3619 = vmatpush.bf16.msra.mxu0 %v2460
        %3620 = vmatpush.bf16.msra.mxu0 %v2452
        %3621 = vmatpush.bf16.msra.mxu0 %v2444
        %3622 = vmatpush.bf16.msra.mxu0 %v2436
        %3623 = vmatmul.bf16.gmra.mxu0 %v819
        %v3624 = vpop.f32.mrf.mxu0
        %v3625 = vadd.f32 %v3612, %v3624
        %v3626 = vpop.f32.mrf.mxu0
        %3627 = vdwg.mxu0
        %3628 = vmatpush.bf16.msra.mxu0 %v2556
        %3629 = vmatpush.bf16.msra.mxu0 %v2548
        %3630 = vmatpush.bf16.msra.mxu0 %v2540
        %3631 = vmatpush.bf16.msra.mxu0 %v2532
        %3632 = vmatpush.bf16.msra.mxu0 %v2524
        %3633 = vmatpush.bf16.msra.mxu0 %v2516
        %3634 = vmatpush.bf16.msra.mxu0 %v2508
        %3635 = vmatpush.bf16.msra.mxu0 %v2500
        %3636 = vmatmul.bf16.gmra.mxu0 %v820
        %v3637 = vpop.f32.mrf.mxu0
        %v3638 = vadd.f32 %v3625, %v3637
        %v3639 = vpop.f32.mrf.mxu0
        %3640 = vdwg.mxu0
        %3641 = vmatpush.bf16.msra.mxu0 %v2620
        %3642 = vmatpush.bf16.msra.mxu0 %v2612
        %3643 = vmatpush.bf16.msra.mxu0 %v2604
        %3644 = vmatpush.bf16.msra.mxu0 %v2596
        %3645 = vmatpush.bf16.msra.mxu0 %v2588
        %3646 = vmatpush.bf16.msra.mxu0 %v2580
        %3647 = vmatpush.bf16.msra.mxu0 %v2572
        %3648 = vmatpush.bf16.msra.mxu0 %v2564
        %3649 = vmatmul.bf16.gmra.mxu0 %v821
        %v3650 = vpop.f32.mrf.mxu0
        %v3651 = vadd.f32 %v3638, %v3650
        %v3652 = vpop.f32.mrf.mxu0
        %3653 = vdwg.mxu0
        %3654 = vmatpush.bf16.msra.mxu0 %v2684
        %3655 = vmatpush.bf16.msra.mxu0 %v2676
        %3656 = vmatpush.bf16.msra.mxu0 %v2668
        %3657 = vmatpush.bf16.msra.mxu0 %v2660
        %3658 = vmatpush.bf16.msra.mxu0 %v2652
        %3659 = vmatpush.bf16.msra.mxu0 %v2644
        %3660 = vmatpush.bf16.msra.mxu0 %v2636
        %3661 = vmatpush.bf16.msra.mxu0 %v2628
        %3662 = vmatmul.bf16.gmra.mxu0 %v822
        %v3663 = vpop.f32.mrf.mxu0
        %v3664 = vadd.f32 %v3651, %v3663
        %v3665 = vpop.f32.mrf.mxu0
        %3666 = vdwg.mxu0
        %3667 = vmatpush.bf16.msra.mxu0 %v2748
        %3668 = vmatpush.bf16.msra.mxu0 %v2740
        %3669 = vmatpush.bf16.msra.mxu0 %v2732
        %3670 = vmatpush.bf16.msra.mxu0 %v2724
        %3671 = vmatpush.bf16.msra.mxu0 %v2716
        %3672 = vmatpush.bf16.msra.mxu0 %v2708
        %3673 = vmatpush.bf16.msra.mxu0 %v2700
        %3674 = vmatpush.bf16.msra.mxu0 %v2692
        %3675 = vmatmul.bf16.gmra.mxu0 %v823
        %v3676 = vpop.f32.mrf.mxu0
        %v3677 = vadd.f32 %v3664, %v3676
        %v3678 = vpop.f32.mrf.mxu0
        %3679 = vdwg.mxu0
        %3680 = vmatpush.bf16.msra.mxu0 %v2812
        %3681 = vmatpush.bf16.msra.mxu0 %v2804
        %3682 = vmatpush.bf16.msra.mxu0 %v2796
        %3683 = vmatpush.bf16.msra.mxu0 %v2788
        %3684 = vmatpush.bf16.msra.mxu0 %v2780
        %3685 = vmatpush.bf16.msra.mxu0 %v2772
        %3686 = vmatpush.bf16.msra.mxu0 %v2764
        %3687 = vmatpush.bf16.msra.mxu0 %v2756
        %3688 = vmatmul.bf16.gmra.mxu0 %v824
        %v3689 = vpop.f32.mrf.mxu0
        %v3690 = vadd.f32 %v3677, %v3689
        %v3691 = vpop.f32.mrf.mxu0
        %3692 = vdwg.mxu0
        %3693 = vmatpush.bf16.msra.mxu0 %v2876
        %3694 = vmatpush.bf16.msra.mxu0 %v2868
        %3695 = vmatpush.bf16.msra.mxu0 %v2860
        %3696 = vmatpush.bf16.msra.mxu0 %v2852
        %3697 = vmatpush.bf16.msra.mxu0 %v2844
        %3698 = vmatpush.bf16.msra.mxu0 %v2836
        %3699 = vmatpush.bf16.msra.mxu0 %v2828
        %3700 = vmatpush.bf16.msra.mxu0 %v2820
        %3701 = vmatmul.bf16.gmra.mxu0 %v825
        %v3702 = vpop.f32.mrf.mxu0
        %v3703 = vadd.f32 %v3690, %v3702
        %v3704 = vpop.f32.mrf.mxu0
        %3705 = vdwg.mxu0
        %3706 = vmatpush.bf16.msra.mxu0 %v2429
        %3707 = vmatpush.bf16.msra.mxu0 %v2421
        %3708 = vmatpush.bf16.msra.mxu0 %v2413
        %3709 = vmatpush.bf16.msra.mxu0 %v2405
        %3710 = vmatpush.bf16.msra.mxu0 %v2397
        %3711 = vmatpush.bf16.msra.mxu0 %v2389
        %3712 = vmatpush.bf16.msra.mxu0 %v2381
        %3713 = vmatpush.bf16.msra.mxu0 %v2373
        %3714 = vmatmul.bf16.gmra.mxu0 %v818
        %v3715 = vpop.f32.mrf.mxu0
        %v3716 = vadd.f32 %v793, %v3715
        %v3717 = vpop.f32.mrf.mxu0
        %3718 = vdwg.mxu0
        %3719 = vmatpush.bf16.msra.mxu0 %v2493
        %3720 = vmatpush.bf16.msra.mxu0 %v2485
        %3721 = vmatpush.bf16.msra.mxu0 %v2477
        %3722 = vmatpush.bf16.msra.mxu0 %v2469
        %3723 = vmatpush.bf16.msra.mxu0 %v2461
        %3724 = vmatpush.bf16.msra.mxu0 %v2453
        %3725 = vmatpush.bf16.msra.mxu0 %v2445
        %3726 = vmatpush.bf16.msra.mxu0 %v2437
        %3727 = vmatmul.bf16.gmra.mxu0 %v819
        %v3728 = vpop.f32.mrf.mxu0
        %v3729 = vadd.f32 %v3716, %v3728
        %v3730 = vpop.f32.mrf.mxu0
        %3731 = vdwg.mxu0
        %3732 = vmatpush.bf16.msra.mxu0 %v2557
        %3733 = vmatpush.bf16.msra.mxu0 %v2549
        %3734 = vmatpush.bf16.msra.mxu0 %v2541
        %3735 = vmatpush.bf16.msra.mxu0 %v2533
        %3736 = vmatpush.bf16.msra.mxu0 %v2525
        %3737 = vmatpush.bf16.msra.mxu0 %v2517
        %3738 = vmatpush.bf16.msra.mxu0 %v2509
        %3739 = vmatpush.bf16.msra.mxu0 %v2501
        %3740 = vmatmul.bf16.gmra.mxu0 %v820
        %v3741 = vpop.f32.mrf.mxu0
        %v3742 = vadd.f32 %v3729, %v3741
        %v3743 = vpop.f32.mrf.mxu0
        %3744 = vdwg.mxu0
        %3745 = vmatpush.bf16.msra.mxu0 %v2621
        %3746 = vmatpush.bf16.msra.mxu0 %v2613
        %3747 = vmatpush.bf16.msra.mxu0 %v2605
        %3748 = vmatpush.bf16.msra.mxu0 %v2597
        %3749 = vmatpush.bf16.msra.mxu0 %v2589
        %3750 = vmatpush.bf16.msra.mxu0 %v2581
        %3751 = vmatpush.bf16.msra.mxu0 %v2573
        %3752 = vmatpush.bf16.msra.mxu0 %v2565
        %3753 = vmatmul.bf16.gmra.mxu0 %v821
        %v3754 = vpop.f32.mrf.mxu0
        %v3755 = vadd.f32 %v3742, %v3754
        %v3756 = vpop.f32.mrf.mxu0
        %3757 = vdwg.mxu0
        %3758 = vmatpush.bf16.msra.mxu0 %v2685
        %3759 = vmatpush.bf16.msra.mxu0 %v2677
        %3760 = vmatpush.bf16.msra.mxu0 %v2669
        %3761 = vmatpush.bf16.msra.mxu0 %v2661
        %3762 = vmatpush.bf16.msra.mxu0 %v2653
        %3763 = vmatpush.bf16.msra.mxu0 %v2645
        %3764 = vmatpush.bf16.msra.mxu0 %v2637
        %3765 = vmatpush.bf16.msra.mxu0 %v2629
        %3766 = vmatmul.bf16.gmra.mxu0 %v822
        %v3767 = vpop.f32.mrf.mxu0
        %v3768 = vadd.f32 %v3755, %v3767
        %v3769 = vpop.f32.mrf.mxu0
        %3770 = vdwg.mxu0
        %3771 = vmatpush.bf16.msra.mxu0 %v2749
        %3772 = vmatpush.bf16.msra.mxu0 %v2741
        %3773 = vmatpush.bf16.msra.mxu0 %v2733
        %3774 = vmatpush.bf16.msra.mxu0 %v2725
        %3775 = vmatpush.bf16.msra.mxu0 %v2717
        %3776 = vmatpush.bf16.msra.mxu0 %v2709
        %3777 = vmatpush.bf16.msra.mxu0 %v2701
        %3778 = vmatpush.bf16.msra.mxu0 %v2693
        %3779 = vmatmul.bf16.gmra.mxu0 %v823
        %v3780 = vpop.f32.mrf.mxu0
        %v3781 = vadd.f32 %v3768, %v3780
        %v3782 = vpop.f32.mrf.mxu0
        %3783 = vdwg.mxu0
        %3784 = vmatpush.bf16.msra.mxu0 %v2813
        %3785 = vmatpush.bf16.msra.mxu0 %v2805
        %3786 = vmatpush.bf16.msra.mxu0 %v2797
        %3787 = vmatpush.bf16.msra.mxu0 %v2789
        %3788 = vmatpush.bf16.msra.mxu0 %v2781
        %3789 = vmatpush.bf16.msra.mxu0 %v2773
        %3790 = vmatpush.bf16.msra.mxu0 %v2765
        %3791 = vmatpush.bf16.msra.mxu0 %v2757
        %3792 = vmatmul.bf16.gmra.mxu0 %v824
        %v3793 = vpop.f32.mrf.mxu0
        %v3794 = vadd.f32 %v3781, %v3793
        %v3795 = vpop.f32.mrf.mxu0
        %3796 = vdwg.mxu0
        %3797 = vmatpush.bf16.msra.mxu0 %v2877
        %3798 = vmatpush.bf16.msra.mxu0 %v2869
        %3799 = vmatpush.bf16.msra.mxu0 %v2861
        %3800 = vmatpush.bf16.msra.mxu0 %v2853
        %3801 = vmatpush.bf16.msra.mxu0 %v2845
        %3802 = vmatpush.bf16.msra.mxu0 %v2837
        %3803 = vmatpush.bf16.msra.mxu0 %v2829
        %3804 = vmatpush.bf16.msra.mxu0 %v2821
        %3805 = vmatmul.bf16.gmra.mxu0 %v825
        %v3806 = vpop.f32.mrf.mxu0
        %v3807 = vadd.f32 %v3794, %v3806
        %v3808 = vpop.f32.mrf.mxu0
        %3809 = vdwg.mxu0
        %3810 = vmatpush.bf16.msra.mxu0 %v2430
        %3811 = vmatpush.bf16.msra.mxu0 %v2422
        %3812 = vmatpush.bf16.msra.mxu0 %v2414
        %3813 = vmatpush.bf16.msra.mxu0 %v2406
        %3814 = vmatpush.bf16.msra.mxu0 %v2398
        %3815 = vmatpush.bf16.msra.mxu0 %v2390
        %3816 = vmatpush.bf16.msra.mxu0 %v2382
        %3817 = vmatpush.bf16.msra.mxu0 %v2374
        %3818 = vmatmul.bf16.gmra.mxu0 %v818
        %v3819 = vpop.f32.mrf.mxu0
        %v3820 = vadd.f32 %v794, %v3819
        %v3821 = vpop.f32.mrf.mxu0
        %3822 = vdwg.mxu0
        %3823 = vmatpush.bf16.msra.mxu0 %v2494
        %3824 = vmatpush.bf16.msra.mxu0 %v2486
        %3825 = vmatpush.bf16.msra.mxu0 %v2478
        %3826 = vmatpush.bf16.msra.mxu0 %v2470
        %3827 = vmatpush.bf16.msra.mxu0 %v2462
        %3828 = vmatpush.bf16.msra.mxu0 %v2454
        %3829 = vmatpush.bf16.msra.mxu0 %v2446
        %3830 = vmatpush.bf16.msra.mxu0 %v2438
        %3831 = vmatmul.bf16.gmra.mxu0 %v819
        %v3832 = vpop.f32.mrf.mxu0
        %v3833 = vadd.f32 %v3820, %v3832
        %v3834 = vpop.f32.mrf.mxu0
        %3835 = vdwg.mxu0
        %3836 = vmatpush.bf16.msra.mxu0 %v2558
        %3837 = vmatpush.bf16.msra.mxu0 %v2550
        %3838 = vmatpush.bf16.msra.mxu0 %v2542
        %3839 = vmatpush.bf16.msra.mxu0 %v2534
        %3840 = vmatpush.bf16.msra.mxu0 %v2526
        %3841 = vmatpush.bf16.msra.mxu0 %v2518
        %3842 = vmatpush.bf16.msra.mxu0 %v2510
        %3843 = vmatpush.bf16.msra.mxu0 %v2502
        %3844 = vmatmul.bf16.gmra.mxu0 %v820
        %v3845 = vpop.f32.mrf.mxu0
        %v3846 = vadd.f32 %v3833, %v3845
        %v3847 = vpop.f32.mrf.mxu0
        %3848 = vdwg.mxu0
        %3849 = vmatpush.bf16.msra.mxu0 %v2622
        %3850 = vmatpush.bf16.msra.mxu0 %v2614
        %3851 = vmatpush.bf16.msra.mxu0 %v2606
        %3852 = vmatpush.bf16.msra.mxu0 %v2598
        %3853 = vmatpush.bf16.msra.mxu0 %v2590
        %3854 = vmatpush.bf16.msra.mxu0 %v2582
        %3855 = vmatpush.bf16.msra.mxu0 %v2574
        %3856 = vmatpush.bf16.msra.mxu0 %v2566
        %3857 = vmatmul.bf16.gmra.mxu0 %v821
        %v3858 = vpop.f32.mrf.mxu0
        %v3859 = vadd.f32 %v3846, %v3858
        %v3860 = vpop.f32.mrf.mxu0
        %3861 = vdwg.mxu0
        %3862 = vmatpush.bf16.msra.mxu0 %v2686
        %3863 = vmatpush.bf16.msra.mxu0 %v2678
        %3864 = vmatpush.bf16.msra.mxu0 %v2670
        %3865 = vmatpush.bf16.msra.mxu0 %v2662
        %3866 = vmatpush.bf16.msra.mxu0 %v2654
        %3867 = vmatpush.bf16.msra.mxu0 %v2646
        %3868 = vmatpush.bf16.msra.mxu0 %v2638
        %3869 = vmatpush.bf16.msra.mxu0 %v2630
        %3870 = vmatmul.bf16.gmra.mxu0 %v822
        %v3871 = vpop.f32.mrf.mxu0
        %v3872 = vadd.f32 %v3859, %v3871
        %v3873 = vpop.f32.mrf.mxu0
        %3874 = vdwg.mxu0
        %3875 = vmatpush.bf16.msra.mxu0 %v2750
        %3876 = vmatpush.bf16.msra.mxu0 %v2742
        %3877 = vmatpush.bf16.msra.mxu0 %v2734
        %3878 = vmatpush.bf16.msra.mxu0 %v2726
        %3879 = vmatpush.bf16.msra.mxu0 %v2718
        %3880 = vmatpush.bf16.msra.mxu0 %v2710
        %3881 = vmatpush.bf16.msra.mxu0 %v2702
        %3882 = vmatpush.bf16.msra.mxu0 %v2694
        %3883 = vmatmul.bf16.gmra.mxu0 %v823
        %v3884 = vpop.f32.mrf.mxu0
        %v3885 = vadd.f32 %v3872, %v3884
        %v3886 = vpop.f32.mrf.mxu0
        %3887 = vdwg.mxu0
        %3888 = vmatpush.bf16.msra.mxu0 %v2814
        %3889 = vmatpush.bf16.msra.mxu0 %v2806
        %3890 = vmatpush.bf16.msra.mxu0 %v2798
        %3891 = vmatpush.bf16.msra.mxu0 %v2790
        %3892 = vmatpush.bf16.msra.mxu0 %v2782
        %3893 = vmatpush.bf16.msra.mxu0 %v2774
        %3894 = vmatpush.bf16.msra.mxu0 %v2766
        %3895 = vmatpush.bf16.msra.mxu0 %v2758
        %3896 = vmatmul.bf16.gmra.mxu0 %v824
        %v3897 = vpop.f32.mrf.mxu0
        %v3898 = vadd.f32 %v3885, %v3897
        %v3899 = vpop.f32.mrf.mxu0
        %3900 = vdwg.mxu0
        %3901 = vmatpush.bf16.msra.mxu0 %v2878
        %3902 = vmatpush.bf16.msra.mxu0 %v2870
        %3903 = vmatpush.bf16.msra.mxu0 %v2862
        %3904 = vmatpush.bf16.msra.mxu0 %v2854
        %3905 = vmatpush.bf16.msra.mxu0 %v2846
        %3906 = vmatpush.bf16.msra.mxu0 %v2838
        %3907 = vmatpush.bf16.msra.mxu0 %v2830
        %3908 = vmatpush.bf16.msra.mxu0 %v2822
        %3909 = vmatmul.bf16.gmra.mxu0 %v825
        %v3910 = vpop.f32.mrf.mxu0
        %v3911 = vadd.f32 %v3898, %v3910
        %v3912 = vpop.f32.mrf.mxu0
        %3913 = vdwg.mxu0
        %3914 = vmatpush.bf16.msra.mxu0 %v2431
        %3915 = vmatpush.bf16.msra.mxu0 %v2423
        %3916 = vmatpush.bf16.msra.mxu0 %v2415
        %3917 = vmatpush.bf16.msra.mxu0 %v2407
        %3918 = vmatpush.bf16.msra.mxu0 %v2399
        %3919 = vmatpush.bf16.msra.mxu0 %v2391
        %3920 = vmatpush.bf16.msra.mxu0 %v2383
        %3921 = vmatpush.bf16.msra.mxu0 %v2375
        %3922 = vmatmul.bf16.gmra.mxu0 %v818
        %v3923 = vpop.f32.mrf.mxu0
        %v3924 = vadd.f32 %v795, %v3923
        %v3925 = vpop.f32.mrf.mxu0
        %3926 = vdwg.mxu0
        %3927 = vmatpush.bf16.msra.mxu0 %v2495
        %3928 = vmatpush.bf16.msra.mxu0 %v2487
        %3929 = vmatpush.bf16.msra.mxu0 %v2479
        %3930 = vmatpush.bf16.msra.mxu0 %v2471
        %3931 = vmatpush.bf16.msra.mxu0 %v2463
        %3932 = vmatpush.bf16.msra.mxu0 %v2455
        %3933 = vmatpush.bf16.msra.mxu0 %v2447
        %3934 = vmatpush.bf16.msra.mxu0 %v2439
        %3935 = vmatmul.bf16.gmra.mxu0 %v819
        %v3936 = vpop.f32.mrf.mxu0
        %v3937 = vadd.f32 %v3924, %v3936
        %v3938 = vpop.f32.mrf.mxu0
        %3939 = vdwg.mxu0
        %3940 = vmatpush.bf16.msra.mxu0 %v2559
        %3941 = vmatpush.bf16.msra.mxu0 %v2551
        %3942 = vmatpush.bf16.msra.mxu0 %v2543
        %3943 = vmatpush.bf16.msra.mxu0 %v2535
        %3944 = vmatpush.bf16.msra.mxu0 %v2527
        %3945 = vmatpush.bf16.msra.mxu0 %v2519
        %3946 = vmatpush.bf16.msra.mxu0 %v2511
        %3947 = vmatpush.bf16.msra.mxu0 %v2503
        %3948 = vmatmul.bf16.gmra.mxu0 %v820
        %v3949 = vpop.f32.mrf.mxu0
        %v3950 = vadd.f32 %v3937, %v3949
        %v3951 = vpop.f32.mrf.mxu0
        %3952 = vdwg.mxu0
        %3953 = vmatpush.bf16.msra.mxu0 %v2623
        %3954 = vmatpush.bf16.msra.mxu0 %v2615
        %3955 = vmatpush.bf16.msra.mxu0 %v2607
        %3956 = vmatpush.bf16.msra.mxu0 %v2599
        %3957 = vmatpush.bf16.msra.mxu0 %v2591
        %3958 = vmatpush.bf16.msra.mxu0 %v2583
        %3959 = vmatpush.bf16.msra.mxu0 %v2575
        %3960 = vmatpush.bf16.msra.mxu0 %v2567
        %3961 = vmatmul.bf16.gmra.mxu0 %v821
        %v3962 = vpop.f32.mrf.mxu0
        %v3963 = vadd.f32 %v3950, %v3962
        %v3964 = vpop.f32.mrf.mxu0
        %3965 = vdwg.mxu0
        %3966 = vmatpush.bf16.msra.mxu0 %v2687
        %3967 = vmatpush.bf16.msra.mxu0 %v2679
        %3968 = vmatpush.bf16.msra.mxu0 %v2671
        %3969 = vmatpush.bf16.msra.mxu0 %v2663
        %3970 = vmatpush.bf16.msra.mxu0 %v2655
        %3971 = vmatpush.bf16.msra.mxu0 %v2647
        %3972 = vmatpush.bf16.msra.mxu0 %v2639
        %3973 = vmatpush.bf16.msra.mxu0 %v2631
        %3974 = vmatmul.bf16.gmra.mxu0 %v822
        %v3975 = vpop.f32.mrf.mxu0
        %v3976 = vadd.f32 %v3963, %v3975
        %v3977 = vpop.f32.mrf.mxu0
        %3978 = vdwg.mxu0
        %3979 = vmatpush.bf16.msra.mxu0 %v2751
        %3980 = vmatpush.bf16.msra.mxu0 %v2743
        %3981 = vmatpush.bf16.msra.mxu0 %v2735
        %3982 = vmatpush.bf16.msra.mxu0 %v2727
        %3983 = vmatpush.bf16.msra.mxu0 %v2719
        %3984 = vmatpush.bf16.msra.mxu0 %v2711
        %3985 = vmatpush.bf16.msra.mxu0 %v2703
        %3986 = vmatpush.bf16.msra.mxu0 %v2695
        %3987 = vmatmul.bf16.gmra.mxu0 %v823
        %v3988 = vpop.f32.mrf.mxu0
        %v3989 = vadd.f32 %v3976, %v3988
        %v3990 = vpop.f32.mrf.mxu0
        %3991 = vdwg.mxu0
        %3992 = vmatpush.bf16.msra.mxu0 %v2815
        %3993 = vmatpush.bf16.msra.mxu0 %v2807
        %3994 = vmatpush.bf16.msra.mxu0 %v2799
        %3995 = vmatpush.bf16.msra.mxu0 %v2791
        %3996 = vmatpush.bf16.msra.mxu0 %v2783
        %3997 = vmatpush.bf16.msra.mxu0 %v2775
        %3998 = vmatpush.bf16.msra.mxu0 %v2767
        %3999 = vmatpush.bf16.msra.mxu0 %v2759
        %4000 = vmatmul.bf16.gmra.mxu0 %v824
        %v4001 = vpop.f32.mrf.mxu0
        %v4002 = vadd.f32 %v3989, %v4001
        %v4003 = vpop.f32.mrf.mxu0
        %4004 = vdwg.mxu0
        %4005 = vmatpush.bf16.msra.mxu0 %v2879
        %4006 = vmatpush.bf16.msra.mxu0 %v2871
        %4007 = vmatpush.bf16.msra.mxu0 %v2863
        %4008 = vmatpush.bf16.msra.mxu0 %v2855
        %4009 = vmatpush.bf16.msra.mxu0 %v2847
        %4010 = vmatpush.bf16.msra.mxu0 %v2839
        %4011 = vmatpush.bf16.msra.mxu0 %v2831
        %4012 = vmatpush.bf16.msra.mxu0 %v2823
        %4013 = vmatmul.bf16.gmra.mxu0 %v825
        %v4014 = vpop.f32.mrf.mxu0
        %v4015 = vadd.f32 %v4002, %v4014
        %v4016 = vpop.f32.mrf.mxu0
        %4017 = vdwg.mxu0
        %4018 = vmatpush.bf16.msra.mxu0 %v2432
        %4019 = vmatpush.bf16.msra.mxu0 %v2424
        %4020 = vmatpush.bf16.msra.mxu0 %v2416
        %4021 = vmatpush.bf16.msra.mxu0 %v2408
        %4022 = vmatpush.bf16.msra.mxu0 %v2400
        %4023 = vmatpush.bf16.msra.mxu0 %v2392
        %4024 = vmatpush.bf16.msra.mxu0 %v2384
        %4025 = vmatpush.bf16.msra.mxu0 %v2376
        %4026 = vmatmul.bf16.gmra.mxu0 %v818
        %v4027 = vpop.f32.mrf.mxu0
        %v4028 = vadd.f32 %v796, %v4027
        %v4029 = vpop.f32.mrf.mxu0
        %4030 = vdwg.mxu0
        %4031 = vmatpush.bf16.msra.mxu0 %v2496
        %4032 = vmatpush.bf16.msra.mxu0 %v2488
        %4033 = vmatpush.bf16.msra.mxu0 %v2480
        %4034 = vmatpush.bf16.msra.mxu0 %v2472
        %4035 = vmatpush.bf16.msra.mxu0 %v2464
        %4036 = vmatpush.bf16.msra.mxu0 %v2456
        %4037 = vmatpush.bf16.msra.mxu0 %v2448
        %4038 = vmatpush.bf16.msra.mxu0 %v2440
        %4039 = vmatmul.bf16.gmra.mxu0 %v819
        %v4040 = vpop.f32.mrf.mxu0
        %v4041 = vadd.f32 %v4028, %v4040
        %v4042 = vpop.f32.mrf.mxu0
        %4043 = vdwg.mxu0
        %4044 = vmatpush.bf16.msra.mxu0 %v2560
        %4045 = vmatpush.bf16.msra.mxu0 %v2552
        %4046 = vmatpush.bf16.msra.mxu0 %v2544
        %4047 = vmatpush.bf16.msra.mxu0 %v2536
        %4048 = vmatpush.bf16.msra.mxu0 %v2528
        %4049 = vmatpush.bf16.msra.mxu0 %v2520
        %4050 = vmatpush.bf16.msra.mxu0 %v2512
        %4051 = vmatpush.bf16.msra.mxu0 %v2504
        %4052 = vmatmul.bf16.gmra.mxu0 %v820
        %v4053 = vpop.f32.mrf.mxu0
        %v4054 = vadd.f32 %v4041, %v4053
        %v4055 = vpop.f32.mrf.mxu0
        %4056 = vdwg.mxu0
        %4057 = vmatpush.bf16.msra.mxu0 %v2624
        %4058 = vmatpush.bf16.msra.mxu0 %v2616
        %4059 = vmatpush.bf16.msra.mxu0 %v2608
        %4060 = vmatpush.bf16.msra.mxu0 %v2600
        %4061 = vmatpush.bf16.msra.mxu0 %v2592
        %4062 = vmatpush.bf16.msra.mxu0 %v2584
        %4063 = vmatpush.bf16.msra.mxu0 %v2576
        %4064 = vmatpush.bf16.msra.mxu0 %v2568
        %4065 = vmatmul.bf16.gmra.mxu0 %v821
        %v4066 = vpop.f32.mrf.mxu0
        %v4067 = vadd.f32 %v4054, %v4066
        %v4068 = vpop.f32.mrf.mxu0
        %4069 = vdwg.mxu0
        %4070 = vmatpush.bf16.msra.mxu0 %v2688
        %4071 = vmatpush.bf16.msra.mxu0 %v2680
        %4072 = vmatpush.bf16.msra.mxu0 %v2672
        %4073 = vmatpush.bf16.msra.mxu0 %v2664
        %4074 = vmatpush.bf16.msra.mxu0 %v2656
        %4075 = vmatpush.bf16.msra.mxu0 %v2648
        %4076 = vmatpush.bf16.msra.mxu0 %v2640
        %4077 = vmatpush.bf16.msra.mxu0 %v2632
        %4078 = vmatmul.bf16.gmra.mxu0 %v822
        %v4079 = vpop.f32.mrf.mxu0
        %v4080 = vadd.f32 %v4067, %v4079
        %v4081 = vpop.f32.mrf.mxu0
        %4082 = vdwg.mxu0
        %4083 = vmatpush.bf16.msra.mxu0 %v2752
        %4084 = vmatpush.bf16.msra.mxu0 %v2744
        %4085 = vmatpush.bf16.msra.mxu0 %v2736
        %4086 = vmatpush.bf16.msra.mxu0 %v2728
        %4087 = vmatpush.bf16.msra.mxu0 %v2720
        %4088 = vmatpush.bf16.msra.mxu0 %v2712
        %4089 = vmatpush.bf16.msra.mxu0 %v2704
        %4090 = vmatpush.bf16.msra.mxu0 %v2696
        %4091 = vmatmul.bf16.gmra.mxu0 %v823
        %v4092 = vpop.f32.mrf.mxu0
        %v4093 = vadd.f32 %v4080, %v4092
        %v4094 = vpop.f32.mrf.mxu0
        %4095 = vdwg.mxu0
        %4096 = vmatpush.bf16.msra.mxu0 %v2816
        %4097 = vmatpush.bf16.msra.mxu0 %v2808
        %4098 = vmatpush.bf16.msra.mxu0 %v2800
        %4099 = vmatpush.bf16.msra.mxu0 %v2792
        %4100 = vmatpush.bf16.msra.mxu0 %v2784
        %4101 = vmatpush.bf16.msra.mxu0 %v2776
        %4102 = vmatpush.bf16.msra.mxu0 %v2768
        %4103 = vmatpush.bf16.msra.mxu0 %v2760
        %4104 = vmatmul.bf16.gmra.mxu0 %v824
        %v4105 = vpop.f32.mrf.mxu0
        %v4106 = vadd.f32 %v4093, %v4105
        %v4107 = vpop.f32.mrf.mxu0
        %4108 = vdwg.mxu0
        %4109 = vmatpush.bf16.msra.mxu0 %v2880
        %4110 = vmatpush.bf16.msra.mxu0 %v2872
        %4111 = vmatpush.bf16.msra.mxu0 %v2864
        %4112 = vmatpush.bf16.msra.mxu0 %v2856
        %4113 = vmatpush.bf16.msra.mxu0 %v2848
        %4114 = vmatpush.bf16.msra.mxu0 %v2840
        %4115 = vmatpush.bf16.msra.mxu0 %v2832
        %4116 = vmatpush.bf16.msra.mxu0 %v2824
        %4117 = vmatmul.bf16.gmra.mxu0 %v825
        %v4118 = vpop.f32.mrf.mxu0
        %v4119 = vadd.f32 %v4106, %v4118
        %v4120 = vpop.f32.mrf.mxu0
        %4121 = vdwg.mxu0
        %4122 = vmatpush.bf16.msra.mxu0 %v2433
        %4123 = vmatpush.bf16.msra.mxu0 %v2425
        %4124 = vmatpush.bf16.msra.mxu0 %v2417
        %4125 = vmatpush.bf16.msra.mxu0 %v2409
        %4126 = vmatpush.bf16.msra.mxu0 %v2401
        %4127 = vmatpush.bf16.msra.mxu0 %v2393
        %4128 = vmatpush.bf16.msra.mxu0 %v2385
        %4129 = vmatpush.bf16.msra.mxu0 %v2377
        %4130 = vmatmul.bf16.gmra.mxu0 %v818
        %v4131 = vpop.f32.mrf.mxu0
        %v4132 = vadd.f32 %v797, %v4131
        %v4133 = vpop.f32.mrf.mxu0
        %4134 = vdwg.mxu0
        %4135 = vmatpush.bf16.msra.mxu0 %v2497
        %4136 = vmatpush.bf16.msra.mxu0 %v2489
        %4137 = vmatpush.bf16.msra.mxu0 %v2481
        %4138 = vmatpush.bf16.msra.mxu0 %v2473
        %4139 = vmatpush.bf16.msra.mxu0 %v2465
        %4140 = vmatpush.bf16.msra.mxu0 %v2457
        %4141 = vmatpush.bf16.msra.mxu0 %v2449
        %4142 = vmatpush.bf16.msra.mxu0 %v2441
        %4143 = vmatmul.bf16.gmra.mxu0 %v819
        %v4144 = vpop.f32.mrf.mxu0
        %v4145 = vadd.f32 %v4132, %v4144
        %v4146 = vpop.f32.mrf.mxu0
        %4147 = vdwg.mxu0
        %4148 = vmatpush.bf16.msra.mxu0 %v2561
        %4149 = vmatpush.bf16.msra.mxu0 %v2553
        %4150 = vmatpush.bf16.msra.mxu0 %v2545
        %4151 = vmatpush.bf16.msra.mxu0 %v2537
        %4152 = vmatpush.bf16.msra.mxu0 %v2529
        %4153 = vmatpush.bf16.msra.mxu0 %v2521
        %4154 = vmatpush.bf16.msra.mxu0 %v2513
        %4155 = vmatpush.bf16.msra.mxu0 %v2505
        %4156 = vmatmul.bf16.gmra.mxu0 %v820
        %v4157 = vpop.f32.mrf.mxu0
        %v4158 = vadd.f32 %v4145, %v4157
        %v4159 = vpop.f32.mrf.mxu0
        %4160 = vdwg.mxu0
        %4161 = vmatpush.bf16.msra.mxu0 %v2625
        %4162 = vmatpush.bf16.msra.mxu0 %v2617
        %4163 = vmatpush.bf16.msra.mxu0 %v2609
        %4164 = vmatpush.bf16.msra.mxu0 %v2601
        %4165 = vmatpush.bf16.msra.mxu0 %v2593
        %4166 = vmatpush.bf16.msra.mxu0 %v2585
        %4167 = vmatpush.bf16.msra.mxu0 %v2577
        %4168 = vmatpush.bf16.msra.mxu0 %v2569
        %4169 = vmatmul.bf16.gmra.mxu0 %v821
        %v4170 = vpop.f32.mrf.mxu0
        %v4171 = vadd.f32 %v4158, %v4170
        %v4172 = vpop.f32.mrf.mxu0
        %4173 = vdwg.mxu0
        %4174 = vmatpush.bf16.msra.mxu0 %v2689
        %4175 = vmatpush.bf16.msra.mxu0 %v2681
        %4176 = vmatpush.bf16.msra.mxu0 %v2673
        %4177 = vmatpush.bf16.msra.mxu0 %v2665
        %4178 = vmatpush.bf16.msra.mxu0 %v2657
        %4179 = vmatpush.bf16.msra.mxu0 %v2649
        %4180 = vmatpush.bf16.msra.mxu0 %v2641
        %4181 = vmatpush.bf16.msra.mxu0 %v2633
        %4182 = vmatmul.bf16.gmra.mxu0 %v822
        %v4183 = vpop.f32.mrf.mxu0
        %v4184 = vadd.f32 %v4171, %v4183
        %v4185 = vpop.f32.mrf.mxu0
        %4186 = vdwg.mxu0
        %4187 = vmatpush.bf16.msra.mxu0 %v2753
        %4188 = vmatpush.bf16.msra.mxu0 %v2745
        %4189 = vmatpush.bf16.msra.mxu0 %v2737
        %4190 = vmatpush.bf16.msra.mxu0 %v2729
        %4191 = vmatpush.bf16.msra.mxu0 %v2721
        %4192 = vmatpush.bf16.msra.mxu0 %v2713
        %4193 = vmatpush.bf16.msra.mxu0 %v2705
        %4194 = vmatpush.bf16.msra.mxu0 %v2697
        %4195 = vmatmul.bf16.gmra.mxu0 %v823
        %v4196 = vpop.f32.mrf.mxu0
        %v4197 = vadd.f32 %v4184, %v4196
        %v4198 = vpop.f32.mrf.mxu0
        %4199 = vdwg.mxu0
        %4200 = vmatpush.bf16.msra.mxu0 %v2817
        %4201 = vmatpush.bf16.msra.mxu0 %v2809
        %4202 = vmatpush.bf16.msra.mxu0 %v2801
        %4203 = vmatpush.bf16.msra.mxu0 %v2793
        %4204 = vmatpush.bf16.msra.mxu0 %v2785
        %4205 = vmatpush.bf16.msra.mxu0 %v2777
        %4206 = vmatpush.bf16.msra.mxu0 %v2769
        %4207 = vmatpush.bf16.msra.mxu0 %v2761
        %4208 = vmatmul.bf16.gmra.mxu0 %v824
        %v4209 = vpop.f32.mrf.mxu0
        %v4210 = vadd.f32 %v4197, %v4209
        %v4211 = vpop.f32.mrf.mxu0
        %4212 = vdwg.mxu0
        %4213 = vmatpush.bf16.msra.mxu0 %v2881
        %4214 = vmatpush.bf16.msra.mxu0 %v2873
        %4215 = vmatpush.bf16.msra.mxu0 %v2865
        %4216 = vmatpush.bf16.msra.mxu0 %v2857
        %4217 = vmatpush.bf16.msra.mxu0 %v2849
        %4218 = vmatpush.bf16.msra.mxu0 %v2841
        %4219 = vmatpush.bf16.msra.mxu0 %v2833
        %4220 = vmatpush.bf16.msra.mxu0 %v2825
        %4221 = vmatmul.bf16.gmra.mxu0 %v825
        %v4222 = vpop.f32.mrf.mxu0
        %v4223 = vadd.f32 %v4210, %v4222
        %v4224 = vpop.f32.mrf.mxu0
        %4225 = vdwg.mxu0
        %s4226 = sld [smem:[#allocation3]]
        %vm4227 = vcmp.ge.f32.partialorder %v3495, 0.0
        %vm4228 = vcmp.ge.f32.partialorder %v3599, 0.0
        %vm4229 = vcmp.ge.f32.partialorder %v3703, 0.0
        %vm4230 = vcmp.ge.f32.partialorder %v3807, 0.0
        %vm4231 = vcmp.ge.f32.partialorder %v3911, 0.0
        %vm4232 = vcmp.ge.f32.partialorder %v4015, 0.0
        %vm4233 = vcmp.ge.f32.partialorder %v4119, 0.0
        %vm4234 = vcmp.ge.f32.partialorder %v4223, 0.0
        %v4235 = vstv %s4226
        %v4236 = vmul.f32 %v4235, %v3495
        %v4237 = vmul.f32 %v4235, %v3599
        %v4238 = vmul.f32 %v4235, %v3703
        %v4239 = vmul.f32 %v4235, %v3807
        %v4240 = vmul.f32 %v4235, %v3911
        %v4241 = vmul.f32 %v4235, %v4015
        %v4242 = vmul.f32 %v4235, %v4119
        %v4243 = vmul.f32 %v4235, %v4223
        %v4244 = vsel %vm4227, %v3495, %v4236
        %v4245 = vsel %vm4228, %v3599, %v4237
        %v4246 = vsel %vm4229, %v3703, %v4238
        %v4247 = vsel %vm4230, %v3807, %v4239
        %v4248 = vsel %vm4231, %v3911, %v4240
        %v4249 = vsel %vm4232, %v4015, %v4241
        %v4250 = vsel %vm4233, %v4119, %v4242
        %v4251 = vsel %vm4234, %v4223, %v4243
        %p4252 = scmp.lt.s32.totalorder %s22, 5
        // Predicated region
        $region49: #{mlp_forward.1} parent=35 // pred_check
          %p4253 = pneg %p4252
        $region50: #{mlp_forward.1} parent=35 // pred_check_branch
          %4255 = sbr.rel (%p4253) target = $region52
        $region51: #{mlp_forward.1} parent=35 // pred_region
          %v4256 = vpack.c.bf16 %v4245, %v4244
          %v4257 = vpack.c.bf16 %v4247, %v4246
          %v4258 = vpack.c.bf16 %v4249, %v4248
          %v4259 = vpack.c.bf16 %v4251, %v4250
          %s4260 = sadd.s32 %s22, 1
          %p4261 = scmp.lt.s32.totalorder %s4260, 0
          %s4262 = ssub.s32 0, %s4260
          %s4263 = scalar_select %p4261, %s4262, %s4260
          %s4264 = sand.u32 %s4263, 1
          %s4265 = ssub.s32 0, %s4264
          %s4266 = scalar_select %p4261, %s4265, %s4264
          %p4267 = scmp.ne.s32.totalorder %s4266, 0
          %p4268 = scmp.lt.s32.totalorder %s4266, 0
          %p4269 = pnand %p4268, %p4267
          %p4270 = pneg %p4269
          %s4271 = sadd.s32 %s4266, 2
          %s4272 = scalar_select %p4270, %s4271, %s4266
          %s4273 = smul.u32 %s4272, 8
          %s4274 = smul.addr %s4273, 4
          %s4275 = scalar_lea.vmem [#allocation2], %s4274
          %4276 = vst [vmem:[%s4275] sm:$0xff] %v4256
          %4277 = vst [vmem:[%s4275 + $0x8] sm:$0xff] %v4257
          %4278 = vst [vmem:[%s4275 + $0x10] sm:$0xff] %v4258
          %4279 = vst [vmem:[%s4275 + $0x18] sm:$0xff] %v4259
        $region52: #{mlp_forward.1} parent=35 // pred_fallthru
          _
        %p4280 = scmp.eq.s32.totalorder %s22, 5
        // Predicated region
        $region53: #{mlp_forward.1} parent=35 // pred_check
          %p4281 = pneg %p4280
        $region54: #{mlp_forward.1} parent=35 // pred_check_branch
          %4283 = sbr.rel (%p4281) target = $region56
        $region55: #{mlp_forward.1} parent=35 // pred_region
          %4284 = vst [vmem:[%s4] sm:$0xff] %v4244
          %4285 = vst [vmem:[%s4 + $0x8] sm:$0xff] %v4245
          %4286 = vst [vmem:[%s4 + $0x10] sm:$0xff] %v4246
          %4287 = vst [vmem:[%s4 + $0x18] sm:$0xff] %v4247
          %4288 = vst [vmem:[%s4 + $0x20] sm:$0xff] %v4248
          %4289 = vst [vmem:[%s4 + $0x28] sm:$0xff] %v4249
          %4290 = vst [vmem:[%s4 + $0x30] sm:$0xff] %v4250
          %4291 = vst [vmem:[%s4 + $0x38] sm:$0xff] %v4251
        $region56: #{mlp_forward.1} parent=35 // pred_fallthru
          _
        // Predicated region
        $region57: #{mlp_forward.1} parent=35 // pred_check
          %p4292 = pneg %p129
        $region58: #{mlp_forward.1} parent=35 // pred_check_branch
          %4294 = sbr.rel (%p4292) target = $region60
        $region59: #{mlp_forward.1} parent=35 // pred_region
          _
        $region60: #{mlp_forward.1} parent=35 // pred_fallthru
          _
        // Predicated region
        $region61: #{mlp_forward.1} parent=35 // pred_check
          %p4295 = pneg %p129
        $region62: #{mlp_forward.1} parent=35 // pred_check_branch
          %4297 = sbr.rel (%p4295) target = $region64
        $region63: #{mlp_forward.1} parent=35 // pred_region
          _
        $region64: #{mlp_forward.1} parent=35 // pred_fallthru
          _
      $region36: #{mlp_forward.1} parent=5 // pred_fallthru
        _
      %p4298 = scmp.le.s32.totalorder 2, %s17
      // Predicated region
      $region65: #{mlp_forward.1} parent=5 // pred_check
        %p4299 = pneg %p4298
      $region66: #{mlp_forward.1} parent=5 // pred_check_branch
        %4301 = sbr.rel (%p4299) target = $region68
      $region67: #{mlp_forward.1} parent=5 // pred_region
        %s4302 = ssub.s32 %s17, 2
      $region68: #{mlp_forward.1} parent=5 // pred_fallthru
        _
    $region6: #{mlp_forward.1} parent=1 // loop_footer
      %s21 = sadd.s32 1, %s17
    $region7: #{mlp_forward.1} parent=1 // loop_footer_branch
      %16 = sbr.rel target = $region3
    $region8: #{mlp_forward.1} parent=1 // loop_exit
      _
    %4303 = vsyncpa [#allocation5], 1
    %s4304 = scalar_lea.sflag [#allocation5], 1
    %4305 = vsyncpa %s4304, 1
    %4306 = vsyncpa [#allocation7], 1
    %s4307 = scalar_lea.sflag [#allocation7], 1
    %4308 = vsyncpa %s4307, 1

</llo_original>
